<compile_context>
chip_gen: v5e
topology: v5e:2x2
jax: 0.10.0
libtpu: 0.0.40
codegen_flags: <defaults>
</compile_context>

<pallas_src>
import functools
import math

import jax
import jax.numpy as jnp
from jax.experimental import pallas as pl
from jax.experimental.pallas import tpu as pltpu


# ---------------------------------------------------------------------------
# Pallas kernel: full stack of TransformerEncoderLayers (post-norm, relu) for
# one batch element. grid = (batch, layer); layer axis is sequential and the
# activation lives in the resident output VMEM block across layer steps.
# ---------------------------------------------------------------------------
def _fused_encoder_kernel(nhead, ffn_chunk,
                          src_ref, pos_ref,
                          qk_w_ref, qk_b_ref, v_w_ref, v_b_ref,
                          out_w_ref, out_b_ref,
                          ln1_g_ref, ln1_b_ref,
                          w1_ref, b1_ref, w2_ref, b2_ref,
                          ln2_g_ref, ln2_b_ref,
                          o_ref,
                          q3_ref, k3_ref, v3_ref, o3_ref, slab_ref):
    layer = pl.program_id(1)

    # First layer for this batch element: seed the resident activation with src.
    @pl.when(layer == 0)
    def _():
        o_ref[0] = src_ref[0]

    x = o_ref[0].astype(jnp.float32)          # (L, D) resident activation
    pos = pos_ref[0].astype(jnp.float32)      # (L, D)
    L, D = x.shape
    hd = D // nhead

    # ---- self-attention: q = k = x + pos, value = x (DETR style) ----
    # Fused Q/K projection; 1/sqrt(hd) is pre-folded into the Q weights/bias.
    qkin_bf = (x + pos).astype(jnp.bfloat16)
    x_bf = x.astype(jnp.bfloat16)
    qk = jnp.dot(qkin_bf, qk_w_ref[0], preferred_element_type=jnp.float32) + qk_b_ref[0]
    v = jnp.dot(x_bf, v_w_ref[0], preferred_element_type=jnp.float32) + v_b_ref[0]

    q_bf = qk[:, :D].astype(jnp.bfloat16)                 # (L, D)
    kT_bf = qk[:, D:].T.astype(jnp.bfloat16)              # (D, L): ONE transpose/layer
    v_bf = v.astype(jnp.bfloat16)                         # (L, D)

    # Scatter per-head operands into head-major scratch (static lane slices).
    for h in range(nhead):
        sl = slice(h * hd, (h + 1) * hd)
        q3_ref[h] = q_bf[:, sl]        # (L, hd)
        k3_ref[h] = kT_bf[sl, :]       # (hd, L)  -- already transposed
        v3_ref[h] = v_bf[:, sl]        # (L, hd)

    # Per-head attention: rolled loop so only ONE (L, L) score/prob buffer is
    # live at a time. exp kept in f32 (safe on v5e; bf16-exp tweak for v6e/v7x
    # would need a generation gate and is skipped).
    @pl.loop(0, nhead)
    def _head(h):
        s = jnp.dot(q3_ref[h], k3_ref[h], preferred_element_type=jnp.float32)  # (L, L)
        s = s - jnp.max(s, axis=-1, keepdims=True)
        p = jnp.exp(s)
        p = p * pl.reciprocal(jnp.sum(p, axis=-1, keepdims=True), approx=True)
        o3_ref[h] = jnp.dot(p.astype(jnp.bfloat16), v3_ref[h],
                            preferred_element_type=jnp.float32).astype(jnp.bfloat16)

    # Gather heads into a lane-contiguous (L, D) slab; ONE full-contraction
    # output projection (instead of nhead hd-contraction matmuls).
    for h in range(nhead):
        slab_ref[:, h * hd:(h + 1) * hd] = o3_ref[h]
    attn = jnp.dot(slab_ref[...], out_w_ref[0],
                   preferred_element_type=jnp.float32) + out_b_ref[0]

    # residual + LayerNorm1 (dropout1 = identity in eval mode)
    x = x + attn
    mu = jnp.mean(x, axis=-1, keepdims=True)
    var = jnp.mean((x - mu) ** 2, axis=-1, keepdims=True)
    x = (x - mu) * jax.lax.rsqrt(var + 1e-5) * ln1_g_ref[0] + ln1_b_ref[0]

    # FFN: linear2(relu(linear1(x))), chunked over Dff so only an (L, chunk)
    # intermediate is ever live. bf16 matmul operands, f32 accumulation.
    Dff = w1_ref.shape[-1]
    n_chunks = Dff // ffn_chunk
    x_ln_bf = x.astype(jnp.bfloat16)
    ffn = jnp.zeros((L, D), jnp.float32)
    for c in range(n_chunks):
        c0 = c * ffn_chunk
        h1 = jnp.dot(x_ln_bf, w1_ref[0, :, c0:c0 + ffn_chunk],
                     preferred_element_type=jnp.float32) + b1_ref[0, :, c0:c0 + ffn_chunk]
        h1 = jnp.maximum(h1, 0.0)
        ffn = ffn + jnp.dot(h1.astype(jnp.bfloat16), w2_ref[0, c0:c0 + ffn_chunk, :],
                            preferred_element_type=jnp.float32)
    ffn = ffn + b2_ref[0]

    # residual + LayerNorm2 (dropout2 = identity)
    x = x + ffn
    mu = jnp.mean(x, axis=-1, keepdims=True)
    var = jnp.mean((x - mu) ** 2, axis=-1, keepdims=True)
    x = (x - mu) * jax.lax.rsqrt(var + 1e-5) * ln2_g_ref[0] + ln2_b_ref[0]

    o_ref[0] = x.astype(o_ref.dtype)


# ---------------------------------------------------------------------------
# One-time host-side weight prep (hoisted out of the forward path).
# ---------------------------------------------------------------------------
def _pick_ffn_chunk(dff, target=512):
    """Largest chunk <= target that divides Dff, preferring multiples of 256."""
    if dff <= target:
        return dff
    for c in range(target, 255, -1):
        if dff % c == 0 and c % 256 == 0:
            return c
    for c in range(target, 0, -1):
        if dff % c == 0:
            return c
    return dff


def prepare_encoder_weights(layer_params, nhead):
    """Stack per-layer weights with a leading layer axis, pre-transpose for
    x @ W (lane dim = output features), fold 1/sqrt(head_dim) into the Q
    projection, and cast matmul weights to bf16. Call ONCE, reuse per forward."""
    D = layer_params[0]['in_w'].shape[1]
    hd = D // nhead
    scale = 1.0 / math.sqrt(hd)

    def stack(f, dtype=None):
        t = jnp.stack([f(p) for p in layer_params])
        return t.astype(dtype) if dtype is not None else t

    qk_w = stack(lambda p: jnp.concatenate(
        [p['in_w'][:D].T * scale, p['in_w'][D:2 * D].T], axis=-1), jnp.bfloat16)   # (nl, D, 2D)
    qk_b = stack(lambda p: jnp.concatenate(
        [p['in_b'][:, :D] * scale, p['in_b'][:, D:2 * D]], axis=-1))               # (nl, 1, 2D)
    v_w = stack(lambda p: p['in_w'][2 * D:].T, jnp.bfloat16)                       # (nl, D, D)
    v_b = stack(lambda p: p['in_b'][:, 2 * D:])                                    # (nl, 1, D)
    out_w = stack(lambda p: p['out_w'].T, jnp.bfloat16)                            # (nl, D, D)
    out_b = stack(lambda p: p['out_b'])                                            # (nl, 1, D)
    ln1_g = stack(lambda p: p['ln1_g'])
    ln1_b = stack(lambda p: p['ln1_b'])
    w1 = stack(lambda p: p['w1'].T, jnp.bfloat16)                                  # (nl, D, Dff)
    b1 = stack(lambda p: p['b1'])                                                  # (nl, 1, Dff)
    w2 = stack(lambda p: p['w2'].T, jnp.bfloat16)                                  # (nl, Dff, D)
    b2 = stack(lambda p: p['b2'])                                                  # (nl, 1, D)
    ln2_g = stack(lambda p: p['ln2_g'])
    ln2_b = stack(lambda p: p['ln2_b'])
    return dict(nhead=nhead, num_layers=len(layer_params),
                tensors=(qk_w, qk_b, v_w, v_b, out_w, out_b,
                         ln1_g, ln1_b, w1, b1, w2, b2, ln2_g, ln2_b))


def _vmem_limit_bytes():
    """Generation-aware VMEM scoped limit: ~85% of capacity, capped at 100 MiB.
    Conservative fallback = 64 MiB (v7x per-core VMEM) if the query fails."""
    cap = 64 * 1024 * 1024
    try:
        info = pltpu.get_tpu_info()
        cap = int(getattr(info, "vmem_capacity_bytes", cap))
    except Exception:
        pass
    return int(min(cap * 0.85, 100 * 1024 * 1024))


# ---------------------------------------------------------------------------
# Pallas wrapper
# ---------------------------------------------------------------------------
def transformer_encoder_pallas(x, pos, prepared):
    """x, pos: (bs, L, D) float32. One pallas_call over all layers."""
    bs, L, D = x.shape
    nhead = prepared['nhead']
    nl = prepared['num_layers']
    tensors = prepared['tensors']
    Dff = tensors[8].shape[-1]          # w1: (nl, D, Dff)
    hd = D // nhead
    ffn_chunk = _pick_ffn_chunk(Dff)

    act_spec = pl.BlockSpec((1, L, D), lambda b, l: (b, 0, 0))

    def w_spec(*dims):
        return pl.BlockSpec((1,) + dims, lambda b, l, _d=len(dims): (l,) + (0,) * _d)

    in_specs = [
        act_spec,                        # src
        act_spec,                        # pos
        w_spec(D, 2 * D),                # fused q/k proj weight (scale folded)
        w_spec(1, 2 * D),                # fused q/k proj bias
        w_spec(D, D),                    # v proj weight
        w_spec(1, D),                    # v proj bias
        w_spec(D, D),                    # out proj weight
        w_spec(1, D),                    # out proj bias
        w_spec(1, D), w_spec(1, D),      # ln1 gamma / beta
        w_spec(D, Dff), w_spec(1, Dff),  # linear1 w / b
        w_spec(Dff, D), w_spec(1, D),    # linear2 w / b
        w_spec(1, D), w_spec(1, D),      # ln2 gamma / beta
    ]
    out_spec = act_spec  # same block across the layer axis -> resident accumulator

    kernel = functools.partial(_fused_encoder_kernel, nhead, ffn_chunk)
    return pl.pallas_call(
        kernel,
        out_shape=jax.ShapeDtypeStruct((bs, L, D), jnp.float32),
        grid_spec=pltpu.PrefetchScalarGridSpec(
            num_scalar_prefetch=0,
            grid=(bs, nl),
            in_specs=in_specs,
            out_specs=out_spec,
            scratch_shapes=[
                pltpu.VMEM((nhead, L, hd), jnp.bfloat16),   # q, head-major
                pltpu.VMEM((nhead, hd, L), jnp.bfloat16),   # k^T, head-major
                pltpu.VMEM((nhead, L, hd), jnp.bfloat16),   # v, head-major
                pltpu.VMEM((nhead, L, hd), jnp.bfloat16),   # per-head attn out
                pltpu.VMEM((L, D), jnp.bfloat16),           # lane-contig head slab
            ]),
        compiler_params=pltpu.CompilerParams(
            dimension_semantics=("parallel", "arbitrary"),
            vmem_limit_bytes=_vmem_limit_bytes(),
        ),
    )(x, pos, *tensors)


def transformer_forward(src, pos_embed, prepared):
    """Equivalent of TransformerEncoder.forward: src, pos_embed are NCHW (bs, c, h, w)."""
    bs, c, h, w = src.shape
    x = src.reshape(bs, c, h * w).transpose(0, 2, 1)          # (bs, L, c)
    pos = pos_embed.reshape(bs, c, h * w).transpose(0, 2, 1)  # (bs, L, c)
    x = transformer_encoder_pallas(x, pos, prepared)
    # normalize_before=False -> encoder norm is None (no final norm)
    return x.transpose(0, 2, 1).reshape(bs, c, h, w)


# ---------------------------------------------------------------------------
# Deterministic parameter init (xavier_uniform for matrices, zeros for biases,
# ones/zeros for LayerNorm), mirroring Transformer._reset_parameters.
# ---------------------------------------------------------------------------
def xavier_uniform(key, shape):
    fan_out, fan_in = shape
    bound = math.sqrt(6.0 / (fan_in + fan_out))
    return jax.random.uniform(key, shape, jnp.float32, -bound, bound)


def init_layer_params(key, d_model, dim_ff):
    k0, k1, k2, k3 = jax.random.split(key, 4)
    return dict(
        in_w=xavier_uniform(k0, (3 * d_model, d_model)),
        in_b=jnp.zeros((1, 3 * d_model), jnp.float32),
        out_w=xavier_uniform(k1, (d_model, d_model)),
        out_b=jnp.zeros((1, d_model), jnp.float32),
        ln1_g=jnp.ones((1, d_model), jnp.float32),
        ln1_b=jnp.zeros((1, d_model), jnp.float32),
        w1=xavier_uniform(k2, (dim_ff, d_model)),
        b1=jnp.zeros((1, dim_ff), jnp.float32),
        w2=xavier_uniform(k3, (d_model, dim_ff)),
        b2=jnp.zeros((1, d_model), jnp.float32),
        ln2_g=jnp.ones((1, d_model), jnp.float32),
        ln2_b=jnp.zeros((1, d_model), jnp.float32),
    )


# ---------------------------------------------------------------------------
# Pure-JAX f32 reference for correctness checking
# ---------------------------------------------------------------------------
def _ref_layer(x, pos, p, nhead):
    bs, L, D = x.shape
    hd = D // nhead
    qk = x + pos
    q = qk @ p['in_w'][:D].T + p['in_b'][0, :D]
    k = qk @ p['in_w'][D:2 * D].T + p['in_b'][0, D:2 * D]
    v = x @ p['in_w'][2 * D:].T + p['in_b'][0, 2 * D:]

    def split(t):
        return t.reshape(bs, L, nhead, hd).transpose(0, 2, 1, 3)

    qh, kh, vh = split(q), split(k), split(v)
    s = jnp.einsum('bhqd,bhkd->bhqk', qh, kh) / math.sqrt(hd)
    attn = jnp.einsum('bhqk,bhkd->bhqd', jax.nn.softmax(s, axis=-1), vh)
    attn = attn.transpose(0, 2, 1, 3).reshape(bs, L, D)
    attn = attn @ p['out_w'].T + p['out_b'][0]

    def ln(t, g, b):
        mu = jnp.mean(t, -1, keepdims=True)
        var = jnp.mean((t - mu) ** 2, -1, keepdims=True)
        return (t - mu) * jax.lax.rsqrt(var + 1e-5) * g + b

    x = ln(x + attn, p['ln1_g'][0], p['ln1_b'][0])
    h1 = jnp.maximum(x @ p['w1'].T + p['b1'][0], 0.0)
    x = ln(x + h1 @ p['w2'].T + p['b2'][0], p['ln2_g'][0], p['ln2_b'][0])
    return x


def _ref_forward(src, pos_embed, layer_params, nhead):
    bs, c, h, w = src.shape
    x = src.reshape(bs, c, h * w).transpose(0, 2, 1)
    pos = pos_embed.reshape(bs, c, h * w).transpose(0, 2, 1)
    for p in layer_params:
        x = _ref_layer(x, pos, p, nhead)
    return x.transpose(0, 2, 1).reshape(bs, c, h, w)


if __name__ == "__main__":
    # Small config consistent with Transformer(d_model, nhead, num_encoder_layers,
    # dim_feedforward, activation='relu', normalize_before=False).
    # head_dim = 16 (multiple of the bf16 sublane pack) for clean scratch layout.
    bs, d_model, h, w = 2, 64, 8, 8
    nhead = 4
    dim_feedforward = 128
    num_encoder_layers = 2

    key = jax.random.PRNGKey(0)
    k_src, k_pos, k_params = jax.random.split(key, 3)
    src = jax.random.normal(k_src, (bs, d_model, h, w), jnp.float32)
    pos_embed = jax.random.normal(k_pos, (bs, d_model, h, w), jnp.float32)

    layer_keys = jax.random.split(k_params, num_encoder_layers)
    layer_params = [init_layer_params(k, d_model, dim_feedforward) for k in layer_keys]

    # One-time host-side weight prep (hoisted out of the forward path).
    prepared = prepare_encoder_weights(layer_params, nhead)

    out = transformer_forward(src, pos_embed, prepared)
    out = jax.block_until_ready(out)

    ref = _ref_forward(src, pos_embed, layer_params, nhead)
    assert out.shape == (bs, d_model, h, w)
    # bf16 matmuls + approx softmax reciprocal vs f32 reference -> relaxed tolerance
    assert jnp.allclose(out, ref, atol=5e-2, rtol=5e-2), "Pallas output mismatch vs reference"

    print("KERNEL_OK")
</pallas_src>

<mosaic_0001>
module attributes {stable_mosaic.version = 11 : i64} {
  func.func @_fused_encoder_kernel(%arg0: i32, %arg1: i32, %arg2: memref<1x64x64xf32, #tpu.memory_space<vmem>>, %arg3: memref<1x64x64xf32, #tpu.memory_space<vmem>>, %arg4: memref<1x64x128xbf16, #tpu.memory_space<vmem>>, %arg5: memref<1x1x128xf32, #tpu.memory_space<vmem>>, %arg6: memref<1x64x64xbf16, #tpu.memory_space<vmem>>, %arg7: memref<1x1x64xf32, #tpu.memory_space<vmem>>, %arg8: memref<1x64x64xbf16, #tpu.memory_space<vmem>>, %arg9: memref<1x1x64xf32, #tpu.memory_space<vmem>>, %arg10: memref<1x1x64xf32, #tpu.memory_space<vmem>>, %arg11: memref<1x1x64xf32, #tpu.memory_space<vmem>>, %arg12: memref<1x64x128xbf16, #tpu.memory_space<vmem>>, %arg13: memref<1x1x128xf32, #tpu.memory_space<vmem>>, %arg14: memref<1x128x64xbf16, #tpu.memory_space<vmem>>, %arg15: memref<1x1x64xf32, #tpu.memory_space<vmem>>, %arg16: memref<1x1x64xf32, #tpu.memory_space<vmem>>, %arg17: memref<1x1x64xf32, #tpu.memory_space<vmem>>, %arg18: memref<1x64x64xf32, #tpu.memory_space<vmem>>, %arg19: memref<4x64x16xbf16, #tpu.memory_space<vmem>>, %arg20: memref<4x16x64xbf16, #tpu.memory_space<vmem>>, %arg21: memref<4x64x16xbf16, #tpu.memory_space<vmem>>, %arg22: memref<4x64x16xbf16, #tpu.memory_space<vmem>>, %arg23: memref<64x64xbf16, #tpu.memory_space<vmem>>) attributes {dimension_semantics = [#tpu.dimension_semantics<parallel>, #tpu.dimension_semantics<arbitrary>], iteration_bounds = array<i64: 2, 2>, scalar_prefetch = 0 : i64, scratch_operands = 5 : i64, tpu.core_type = #tpu.core_type<tc>, window_params = [{transform_indices = @transform_0, window_bounds = array<i64: 1, 64, 64>}, {transform_indices = @transform_1, window_bounds = array<i64: 1, 64, 64>}, {transform_indices = @transform_2, window_bounds = array<i64: 1, 64, 128>}, {transform_indices = @transform_3, window_bounds = array<i64: 1, 1, 128>}, {transform_indices = @transform_4, window_bounds = array<i64: 1, 64, 64>}, {transform_indices = @transform_5, window_bounds = array<i64: 1, 1, 64>}, {transform_indices = @transform_6, window_bounds = array<i64: 1, 64, 64>}, {transform_indices = @transform_7, window_bounds = array<i64: 1, 1, 64>}, {transform_indices = @transform_8, window_bounds = array<i64: 1, 1, 64>}, {transform_indices = @transform_9, window_bounds = array<i64: 1, 1, 64>}, {transform_indices = @transform_10, window_bounds = array<i64: 1, 64, 128>}, {transform_indices = @transform_11, window_bounds = array<i64: 1, 1, 128>}, {transform_indices = @transform_12, window_bounds = array<i64: 1, 128, 64>}, {transform_indices = @transform_13, window_bounds = array<i64: 1, 1, 64>}, {transform_indices = @transform_14, window_bounds = array<i64: 1, 1, 64>}, {transform_indices = @transform_15, window_bounds = array<i64: 1, 1, 64>}, {transform_indices = @transform_16, window_bounds = array<i64: 1, 64, 64>}]} {
    %c0_i32 = arith.constant 0 : i32
    %0 = arith.cmpi eq, %arg1, %c0_i32 : i32
    %1 = arith.extui %0 : i1 to i32
    %c0_i32_0 = arith.constant 0 : i32
    %2 = arith.cmpi ne, %1, %c0_i32_0 : i32
    scf.if %2 {
      %c0_121 = arith.constant 0 : index
      %c0_122 = arith.constant 0 : index
      %c0_123 = arith.constant 0 : index
      %176 = vector.load %arg2[%c0_121, %c0_122, %c0_123] : memref<1x64x64xf32, #tpu.memory_space<vmem>>, vector<1x64x64xf32>
      %177 = vector.shape_cast %176 : vector<1x64x64xf32> to vector<64x64xf32>
      %c0_124 = arith.constant 0 : index
      %c0_125 = arith.constant 0 : index
      %c0_126 = arith.constant 0 : index
      %178 = vector.load %arg18[%c0_124, %c0_125, %c0_126] : memref<1x64x64xf32, #tpu.memory_space<vmem>>, vector<1x64x64xf32>
      %179 = vector.shape_cast %178 : vector<1x64x64xf32> to vector<64x64xf32>
      %180 = vector.shape_cast %177 : vector<64x64xf32> to vector<1x64x64xf32>
      tpu.vector_store %arg18[%c0_124, %c0_125, %c0_126], %180 {strides = array<i32>} : memref<1x64x64xf32, #tpu.memory_space<vmem>>, vector<1x64x64xf32>,
    } else {
    }
    %c0 = arith.constant 0 : index
    %c0_1 = arith.constant 0 : index
    %c0_2 = arith.constant 0 : index
    %3 = vector.load %arg18[%c0, %c0_1, %c0_2] : memref<1x64x64xf32, #tpu.memory_space<vmem>>, vector<1x64x64xf32>
    %4 = vector.shape_cast %3 : vector<1x64x64xf32> to vector<64x64xf32>
    %c0_3 = arith.constant 0 : index
    %c0_4 = arith.constant 0 : index
    %c0_5 = arith.constant 0 : index
    %5 = vector.load %arg3[%c0_3, %c0_4, %c0_5] : memref<1x64x64xf32, #tpu.memory_space<vmem>>, vector<1x64x64xf32>
    %6 = vector.shape_cast %5 : vector<1x64x64xf32> to vector<64x64xf32>
    %7 = arith.addf %4, %6 : vector<64x64xf32>
    %8 = arith.truncf %7 : vector<64x64xf32> to vector<64x64xbf16>
    %9 = arith.truncf %4 : vector<64x64xf32> to vector<64x64xbf16>
    %c0_6 = arith.constant 0 : index
    %c0_7 = arith.constant 0 : index
    %c0_8 = arith.constant 0 : index
    %10 = vector.load %arg4[%c0_6, %c0_7, %c0_8] : memref<1x64x128xbf16, #tpu.memory_space<vmem>>, vector<1x64x128xbf16>
    %11 = vector.shape_cast %10 : vector<1x64x128xbf16> to vector<64x128xbf16>
    %cst = arith.constant dense<0.000000e+00> : vector<64x128xf32>
    %12 = tpu.matmul %8, %11, %cst {dimension_numbers = #tpu.dot_dimension_numbers<[1], [0], [0], [1], [0, 0, 1, 1], [], []>} : vector<64x64xbf16>, vector<64x128xbf16>, vector<64x128xf32> -> vector<64x128xf32>
    %c0_9 = arith.constant 0 : index
    %c0_10 = arith.constant 0 : index
    %c0_11 = arith.constant 0 : index
    %13 = vector.load %arg5[%c0_9, %c0_10, %c0_11] : memref<1x1x128xf32, #tpu.memory_space<vmem>>, vector<1x1x128xf32>
    %14 = vector.shape_cast %13 : vector<1x1x128xf32> to vector<1x128xf32>
    %15 = vector.broadcast %14 : vector<1x128xf32> to vector<64x128xf32>
    %16 = arith.addf %12, %15 : vector<64x128xf32>
    %c0_12 = arith.constant 0 : index
    %c0_13 = arith.constant 0 : index
    %c0_14 = arith.constant 0 : index
    %17 = vector.load %arg6[%c0_12, %c0_13, %c0_14] : memref<1x64x64xbf16, #tpu.memory_space<vmem>>, vector<1x64x64xbf16>
    %18 = vector.shape_cast %17 : vector<1x64x64xbf16> to vector<64x64xbf16>
    %cst_15 = arith.constant dense<0.000000e+00> : vector<64x64xf32>
    %19 = tpu.matmul %9, %18, %cst_15 {dimension_numbers = #tpu.dot_dimension_numbers<[1], [0], [0], [1], [0, 0, 1, 1], [], []>} : vector<64x64xbf16>, vector<64x64xbf16>, vector<64x64xf32> -> vector<64x64xf32>
    %c0_16 = arith.constant 0 : index
    %c0_17 = arith.constant 0 : index
    %c0_18 = arith.constant 0 : index
    %20 = vector.load %arg7[%c0_16, %c0_17, %c0_18] : memref<1x1x64xf32, #tpu.memory_space<vmem>>, vector<1x1x64xf32>
    %21 = vector.shape_cast %20 : vector<1x1x64xf32> to vector<1x64xf32>
    %22 = vector.broadcast %21 : vector<1x64xf32> to vector<64x64xf32>
    %23 = arith.addf %19, %22 : vector<64x64xf32>
    %24 = vector.extract_strided_slice %16 {offsets = [0, 0], sizes = [64, 64], strides = [1, 1]} : vector<64x128xf32> to vector<64x64xf32>
    %25 = arith.truncf %24 : vector<64x64xf32> to vector<64x64xbf16>
    %26 = vector.extract_strided_slice %16 {offsets = [0, 64], sizes = [64, 64], strides = [1, 1]} : vector<64x128xf32> to vector<64x64xf32>
    %27 = tpu.transpose %26, [1, 0] : vector<64x64xf32> -> vector<64x64xf32>
    %28 = arith.truncf %27 : vector<64x64xf32> to vector<64x64xbf16>
    %29 = arith.truncf %23 : vector<64x64xf32> to vector<64x64xbf16>
    %30 = vector.extract_strided_slice %25 {offsets = [0, 0], sizes = [64, 16], strides = [1, 1]} : vector<64x64xbf16> to vector<64x16xbf16>
    %c0_19 = arith.constant 0 : index
    %c0_20 = arith.constant 0 : index
    %c0_21 = arith.constant 0 : index
    %31 = vector.load %arg19[%c0_19, %c0_20, %c0_21] : memref<4x64x16xbf16, #tpu.memory_space<vmem>>, vector<1x64x16xbf16>
    %32 = vector.shape_cast %31 : vector<1x64x16xbf16> to vector<64x16xbf16>
    %33 = vector.shape_cast %30 : vector<64x16xbf16> to vector<1x64x16xbf16>
    tpu.vector_store %arg19[%c0_19, %c0_20, %c0_21], %33 {strides = array<i32>} : memref<4x64x16xbf16, #tpu.memory_space<vmem>>, vector<1x64x16xbf16>,
    %34 = vector.extract_strided_slice %28 {offsets = [0, 0], sizes = [16, 64], strides = [1, 1]} : vector<64x64xbf16> to vector<16x64xbf16>
    %c0_22 = arith.constant 0 : index
    %c0_23 = arith.constant 0 : index
    %c0_24 = arith.constant 0 : index
    %35 = vector.load %arg20[%c0_22, %c0_23, %c0_24] : memref<4x16x64xbf16, #tpu.memory_space<vmem>>, vector<1x16x64xbf16>
    %36 = vector.shape_cast %35 : vector<1x16x64xbf16> to vector<16x64xbf16>
    %37 = vector.shape_cast %34 : vector<16x64xbf16> to vector<1x16x64xbf16>
    tpu.vector_store %arg20[%c0_22, %c0_23, %c0_24], %37 {strides = array<i32>} : memref<4x16x64xbf16, #tpu.memory_space<vmem>>, vector<1x16x64xbf16>,
    %38 = vector.extract_strided_slice %29 {offsets = [0, 0], sizes = [64, 16], strides = [1, 1]} : vector<64x64xbf16> to vector<64x16xbf16>
    %c0_25 = arith.constant 0 : index
    %c0_26 = arith.constant 0 : index
    %c0_27 = arith.constant 0 : index
    %39 = vector.load %arg21[%c0_25, %c0_26, %c0_27] : memref<4x64x16xbf16, #tpu.memory_space<vmem>>, vector<1x64x16xbf16>
    %40 = vector.shape_cast %39 : vector<1x64x16xbf16> to vector<64x16xbf16>
    %41 = vector.shape_cast %38 : vector<64x16xbf16> to vector<1x64x16xbf16>
    tpu.vector_store %arg21[%c0_25, %c0_26, %c0_27], %41 {strides = array<i32>} : memref<4x64x16xbf16, #tpu.memory_space<vmem>>, vector<1x64x16xbf16>,
    %42 = vector.extract_strided_slice %25 {offsets = [0, 16], sizes = [64, 16], strides = [1, 1]} : vector<64x64xbf16> to vector<64x16xbf16>
    %c1 = arith.constant 1 : index
    %c0_28 = arith.constant 0 : index
    %c0_29 = arith.constant 0 : index
    %43 = vector.load %arg19[%c1, %c0_28, %c0_29] : memref<4x64x16xbf16, #tpu.memory_space<vmem>>, vector<1x64x16xbf16>
    %44 = vector.shape_cast %43 : vector<1x64x16xbf16> to vector<64x16xbf16>
    %45 = vector.shape_cast %42 : vector<64x16xbf16> to vector<1x64x16xbf16>
    tpu.vector_store %arg19[%c1, %c0_28, %c0_29], %45 {strides = array<i32>} : memref<4x64x16xbf16, #tpu.memory_space<vmem>>, vector<1x64x16xbf16>,
    %46 = vector.extract_strided_slice %28 {offsets = [16, 0], sizes = [16, 64], strides = [1, 1]} : vector<64x64xbf16> to vector<16x64xbf16>
    %c1_30 = arith.constant 1 : index
    %c0_31 = arith.constant 0 : index
    %c0_32 = arith.constant 0 : index
    %47 = vector.load %arg20[%c1_30, %c0_31, %c0_32] : memref<4x16x64xbf16, #tpu.memory_space<vmem>>, vector<1x16x64xbf16>
    %48 = vector.shape_cast %47 : vector<1x16x64xbf16> to vector<16x64xbf16>
    %49 = vector.shape_cast %46 : vector<16x64xbf16> to vector<1x16x64xbf16>
    tpu.vector_store %arg20[%c1_30, %c0_31, %c0_32], %49 {strides = array<i32>} : memref<4x16x64xbf16, #tpu.memory_space<vmem>>, vector<1x16x64xbf16>,
    %50 = vector.extract_strided_slice %29 {offsets = [0, 16], sizes = [64, 16], strides = [1, 1]} : vector<64x64xbf16> to vector<64x16xbf16>
    %c1_33 = arith.constant 1 : index
    %c0_34 = arith.constant 0 : index
    %c0_35 = arith.constant 0 : index
    %51 = vector.load %arg21[%c1_33, %c0_34, %c0_35] : memref<4x64x16xbf16, #tpu.memory_space<vmem>>, vector<1x64x16xbf16>
    %52 = vector.shape_cast %51 : vector<1x64x16xbf16> to vector<64x16xbf16>
    %53 = vector.shape_cast %50 : vector<64x16xbf16> to vector<1x64x16xbf16>
    tpu.vector_store %arg21[%c1_33, %c0_34, %c0_35], %53 {strides = array<i32>} : memref<4x64x16xbf16, #tpu.memory_space<vmem>>, vector<1x64x16xbf16>,
    %54 = vector.extract_strided_slice %25 {offsets = [0, 32], sizes = [64, 16], strides = [1, 1]} : vector<64x64xbf16> to vector<64x16xbf16>
    %c2 = arith.constant 2 : index
    %c0_36 = arith.constant 0 : index
    %c0_37 = arith.constant 0 : index
    %55 = vector.load %arg19[%c2, %c0_36, %c0_37] : memref<4x64x16xbf16, #tpu.memory_space<vmem>>, vector<1x64x16xbf16>
    %56 = vector.shape_cast %55 : vector<1x64x16xbf16> to vector<64x16xbf16>
    %57 = vector.shape_cast %54 : vector<64x16xbf16> to vector<1x64x16xbf16>
    tpu.vector_store %arg19[%c2, %c0_36, %c0_37], %57 {strides = array<i32>} : memref<4x64x16xbf16, #tpu.memory_space<vmem>>, vector<1x64x16xbf16>,
    %58 = vector.extract_strided_slice %28 {offsets = [32, 0], sizes = [16, 64], strides = [1, 1]} : vector<64x64xbf16> to vector<16x64xbf16>
    %c2_38 = arith.constant 2 : index
    %c0_39 = arith.constant 0 : index
    %c0_40 = arith.constant 0 : index
    %59 = vector.load %arg20[%c2_38, %c0_39, %c0_40] : memref<4x16x64xbf16, #tpu.memory_space<vmem>>, vector<1x16x64xbf16>
    %60 = vector.shape_cast %59 : vector<1x16x64xbf16> to vector<16x64xbf16>
    %61 = vector.shape_cast %58 : vector<16x64xbf16> to vector<1x16x64xbf16>
    tpu.vector_store %arg20[%c2_38, %c0_39, %c0_40], %61 {strides = array<i32>} : memref<4x16x64xbf16, #tpu.memory_space<vmem>>, vector<1x16x64xbf16>,
    %62 = vector.extract_strided_slice %29 {offsets = [0, 32], sizes = [64, 16], strides = [1, 1]} : vector<64x64xbf16> to vector<64x16xbf16>
    %c2_41 = arith.constant 2 : index
    %c0_42 = arith.constant 0 : index
    %c0_43 = arith.constant 0 : index
    %63 = vector.load %arg21[%c2_41, %c0_42, %c0_43] : memref<4x64x16xbf16, #tpu.memory_space<vmem>>, vector<1x64x16xbf16>
    %64 = vector.shape_cast %63 : vector<1x64x16xbf16> to vector<64x16xbf16>
    %65 = vector.shape_cast %62 : vector<64x16xbf16> to vector<1x64x16xbf16>
    tpu.vector_store %arg21[%c2_41, %c0_42, %c0_43], %65 {strides = array<i32>} : memref<4x64x16xbf16, #tpu.memory_space<vmem>>, vector<1x64x16xbf16>,
    %66 = vector.extract_strided_slice %25 {offsets = [0, 48], sizes = [64, 16], strides = [1, 1]} : vector<64x64xbf16> to vector<64x16xbf16>
    %c3 = arith.constant 3 : index
    %c0_44 = arith.constant 0 : index
    %c0_45 = arith.constant 0 : index
    %67 = vector.load %arg19[%c3, %c0_44, %c0_45] : memref<4x64x16xbf16, #tpu.memory_space<vmem>>, vector<1x64x16xbf16>
    %68 = vector.shape_cast %67 : vector<1x64x16xbf16> to vector<64x16xbf16>
    %69 = vector.shape_cast %66 : vector<64x16xbf16> to vector<1x64x16xbf16>
    tpu.vector_store %arg19[%c3, %c0_44, %c0_45], %69 {strides = array<i32>} : memref<4x64x16xbf16, #tpu.memory_space<vmem>>, vector<1x64x16xbf16>,
    %70 = vector.extract_strided_slice %28 {offsets = [48, 0], sizes = [16, 64], strides = [1, 1]} : vector<64x64xbf16> to vector<16x64xbf16>
    %c3_46 = arith.constant 3 : index
    %c0_47 = arith.constant 0 : index
    %c0_48 = arith.constant 0 : index
    %71 = vector.load %arg20[%c3_46, %c0_47, %c0_48] : memref<4x16x64xbf16, #tpu.memory_space<vmem>>, vector<1x16x64xbf16>
    %72 = vector.shape_cast %71 : vector<1x16x64xbf16> to vector<16x64xbf16>
    %73 = vector.shape_cast %70 : vector<16x64xbf16> to vector<1x16x64xbf16>
    tpu.vector_store %arg20[%c3_46, %c0_47, %c0_48], %73 {strides = array<i32>} : memref<4x16x64xbf16, #tpu.memory_space<vmem>>, vector<1x16x64xbf16>,
    %74 = vector.extract_strided_slice %29 {offsets = [0, 48], sizes = [64, 16], strides = [1, 1]} : vector<64x64xbf16> to vector<64x16xbf16>
    %c3_49 = arith.constant 3 : index
    %c0_50 = arith.constant 0 : index
    %c0_51 = arith.constant 0 : index
    %75 = vector.load %arg21[%c3_49, %c0_50, %c0_51] : memref<4x64x16xbf16, #tpu.memory_space<vmem>>, vector<1x64x16xbf16>
    %76 = vector.shape_cast %75 : vector<1x64x16xbf16> to vector<64x16xbf16>
    %77 = vector.shape_cast %74 : vector<64x16xbf16> to vector<1x64x16xbf16>
    tpu.vector_store %arg21[%c3_49, %c0_50, %c0_51], %77 {strides = array<i32>} : memref<4x64x16xbf16, #tpu.memory_space<vmem>>, vector<1x64x16xbf16>,
    %c0_i32_52 = arith.constant 0 : i32
    %c4_i32 = arith.constant 4 : i32
    %78 = arith.addi %c0_i32_52, %c4_i32 : i32
    %c1_i32 = arith.constant 1 : i32
    scf.for %arg24 = %c0_i32_52 to %78 step %c1_i32  : i32 {
      %c1_i32_121 = arith.constant 1 : i32
      %176 = arith.muli %arg24, %c1_i32_121 : i32
      %c0_i32_122 = arith.constant 0 : i32
      %177 = arith.addi %c0_i32_122, %176 : i32
      %178 = arith.index_cast %177 : i32 to index
      %c0_123 = arith.constant 0 : index
      %c0_124 = arith.constant 0 : index
      %179 = vector.load %arg19[%178, %c0_123, %c0_124] : memref<4x64x16xbf16, #tpu.memory_space<vmem>>, vector<1x64x16xbf16>
      %180 = vector.shape_cast %179 : vector<1x64x16xbf16> to vector<64x16xbf16>
      %181 = arith.index_cast %177 : i32 to index
      %c0_125 = arith.constant 0 : index
      %c0_126 = arith.constant 0 : index
      %182 = vector.load %arg20[%181, %c0_125, %c0_126] : memref<4x16x64xbf16, #tpu.memory_space<vmem>>, vector<1x16x64xbf16>
      %183 = vector.shape_cast %182 : vector<1x16x64xbf16> to vector<16x64xbf16>
      %cst_127 = arith.constant dense<0.000000e+00> : vector<64x64xf32>
      %184 = tpu.matmul %180, %183, %cst_127 {dimension_numbers = #tpu.dot_dimension_numbers<[1], [0], [0], [1], [0, 0, 1, 1], [], []>} : vector<64x16xbf16>, vector<16x64xbf16>, vector<64x64xf32> -> vector<64x64xf32>
      %cst_128 = arith.constant dense<0xFF800000> : vector<64xf32>
      %185 = vector.multi_reduction <maximumf>, %184, %cst_128 [1] : vector<64x64xf32> to vector<64xf32>
      %186 = vector.shape_cast %185 : vector<64xf32> to vector<64x1xf32>
      %187 = vector.broadcast %186 : vector<64x1xf32> to vector<64x64xf32>
      %188 = arith.subf %184, %187 : vector<64x64xf32>
      %189 = math.exp %188 : vector<64x64xf32>
      %cst_129 = arith.constant dense<0.000000e+00> : vector<64xf32>
      %190 = vector.multi_reduction <add>, %189, %cst_129 [1] : vector<64x64xf32> to vector<64xf32>
      %191 = vector.shape_cast %190 : vector<64xf32> to vector<64x1xf32>
      %192 = tpu.reciprocal %191 {approx = true} : vector<64x1xf32> -> vector<64x1xf32>
      %193 = vector.broadcast %192 : vector<64x1xf32> to vector<64x64xf32>
      %194 = arith.mulf %189, %193 : vector<64x64xf32>
      %195 = arith.truncf %194 : vector<64x64xf32> to vector<64x64xbf16>
      %196 = arith.index_cast %177 : i32 to index
      %c0_130 = arith.constant 0 : index
      %c0_131 = arith.constant 0 : index
      %197 = vector.load %arg21[%196, %c0_130, %c0_131] : memref<4x64x16xbf16, #tpu.memory_space<vmem>>, vector<1x64x16xbf16>
      %198 = vector.shape_cast %197 : vector<1x64x16xbf16> to vector<64x16xbf16>
      %cst_132 = arith.constant dense<0.000000e+00> : vector<64x16xf32>
      %199 = tpu.matmul %195, %198, %cst_132 {dimension_numbers = #tpu.dot_dimension_numbers<[1], [0], [0], [1], [0, 0, 1, 1], [], []>} : vector<64x64xbf16>, vector<64x16xbf16>, vector<64x16xf32> -> vector<64x16xf32>
      %200 = arith.truncf %199 : vector<64x16xf32> to vector<64x16xbf16>
      %201 = arith.index_cast %177 : i32 to index
      %c0_133 = arith.constant 0 : index
      %c0_134 = arith.constant 0 : index
      %202 = vector.load %arg22[%201, %c0_133, %c0_134] : memref<4x64x16xbf16, #tpu.memory_space<vmem>>, vector<1x64x16xbf16>
      %203 = vector.shape_cast %202 : vector<1x64x16xbf16> to vector<64x16xbf16>
      %204 = vector.shape_cast %200 : vector<64x16xbf16> to vector<1x64x16xbf16>
      tpu.vector_store %arg22[%201, %c0_133, %c0_134], %204 {strides = array<i32>} : memref<4x64x16xbf16, #tpu.memory_space<vmem>>, vector<1x64x16xbf16>,
    }
    %c4_i32_53 = arith.constant 4 : i32
    %c0_54 = arith.constant 0 : index
    %c0_55 = arith.constant 0 : index
    %c0_56 = arith.constant 0 : index
    %79 = vector.load %arg22[%c0_54, %c0_55, %c0_56] : memref<4x64x16xbf16, #tpu.memory_space<vmem>>, vector<1x64x16xbf16>
    %80 = vector.shape_cast %79 : vector<1x64x16xbf16> to vector<64x16xbf16>
    %c0_57 = arith.constant 0 : index
    %c0_58 = arith.constant 0 : index
    %81 = vector.load %arg23[%c0_57, %c0_58] : memref<64x64xbf16, #tpu.memory_space<vmem>>, vector<64x16xbf16>
    tpu.vector_store %arg23[%c0_57, %c0_58], %80 {strides = array<i32>} : memref<64x64xbf16, #tpu.memory_space<vmem>>, vector<64x16xbf16>,
    %c1_59 = arith.constant 1 : index
    %c0_60 = arith.constant 0 : index
    %c0_61 = arith.constant 0 : index
    %82 = vector.load %arg22[%c1_59, %c0_60, %c0_61] : memref<4x64x16xbf16, #tpu.memory_space<vmem>>, vector<1x64x16xbf16>
    %83 = vector.shape_cast %82 : vector<1x64x16xbf16> to vector<64x16xbf16>
    %c0_62 = arith.constant 0 : index
    %c16 = arith.constant 16 : index
    %84 = vector.load %arg23[%c0_62, %c16] : memref<64x64xbf16, #tpu.memory_space<vmem>>, vector<64x16xbf16>
    tpu.vector_store %arg23[%c0_62, %c16], %83 {strides = array<i32>} : memref<64x64xbf16, #tpu.memory_space<vmem>>, vector<64x16xbf16>,
    %c2_63 = arith.constant 2 : index
    %c0_64 = arith.constant 0 : index
    %c0_65 = arith.constant 0 : index
    %85 = vector.load %arg22[%c2_63, %c0_64, %c0_65] : memref<4x64x16xbf16, #tpu.memory_space<vmem>>, vector<1x64x16xbf16>
    %86 = vector.shape_cast %85 : vector<1x64x16xbf16> to vector<64x16xbf16>
    %c0_66 = arith.constant 0 : index
    %c32 = arith.constant 32 : index
    %87 = vector.load %arg23[%c0_66, %c32] : memref<64x64xbf16, #tpu.memory_space<vmem>>, vector<64x16xbf16>
    tpu.vector_store %arg23[%c0_66, %c32], %86 {strides = array<i32>} : memref<64x64xbf16, #tpu.memory_space<vmem>>, vector<64x16xbf16>,
    %c3_67 = arith.constant 3 : index
    %c0_68 = arith.constant 0 : index
    %c0_69 = arith.constant 0 : index
    %88 = vector.load %arg22[%c3_67, %c0_68, %c0_69] : memref<4x64x16xbf16, #tpu.memory_space<vmem>>, vector<1x64x16xbf16>
    %89 = vector.shape_cast %88 : vector<1x64x16xbf16> to vector<64x16xbf16>
    %c0_70 = arith.constant 0 : index
    %c48 = arith.constant 48 : index
    %90 = vector.load %arg23[%c0_70, %c48] : memref<64x64xbf16, #tpu.memory_space<vmem>>, vector<64x16xbf16>
    tpu.vector_store %arg23[%c0_70, %c48], %89 {strides = array<i32>} : memref<64x64xbf16, #tpu.memory_space<vmem>>, vector<64x16xbf16>,
    %c0_71 = arith.constant 0 : index
    %c0_72 = arith.constant 0 : index
    %91 = vector.load %arg23[%c0_71, %c0_72] : memref<64x64xbf16, #tpu.memory_space<vmem>>, vector<64x64xbf16>
    %c0_73 = arith.constant 0 : index
    %c0_74 = arith.constant 0 : index
    %c0_75 = arith.constant 0 : index
    %92 = vector.load %arg8[%c0_73, %c0_74, %c0_75] : memref<1x64x64xbf16, #tpu.memory_space<vmem>>, vector<1x64x64xbf16>
    %93 = vector.shape_cast %92 : vector<1x64x64xbf16> to vector<64x64xbf16>
    %cst_76 = arith.constant dense<0.000000e+00> : vector<64x64xf32>
    %94 = tpu.matmul %91, %93, %cst_76 {dimension_numbers = #tpu.dot_dimension_numbers<[1], [0], [0], [1], [0, 0, 1, 1], [], []>} : vector<64x64xbf16>, vector<64x64xbf16>, vector<64x64xf32> -> vector<64x64xf32>
    %c0_77 = arith.constant 0 : index
    %c0_78 = arith.constant 0 : index
    %c0_79 = arith.constant 0 : index
    %95 = vector.load %arg9[%c0_77, %c0_78, %c0_79] : memref<1x1x64xf32, #tpu.memory_space<vmem>>, vector<1x1x64xf32>
    %96 = vector.shape_cast %95 : vector<1x1x64xf32> to vector<1x64xf32>
    %97 = vector.broadcast %96 : vector<1x64xf32> to vector<64x64xf32>
    %98 = arith.addf %94, %97 : vector<64x64xf32>
    %99 = arith.addf %4, %98 : vector<64x64xf32>
    %cst_80 = arith.constant dense<0.000000e+00> : vector<64xf32>
    %100 = vector.multi_reduction <add>, %99, %cst_80 [1] : vector<64x64xf32> to vector<64xf32>
    %101 = vector.shape_cast %100 : vector<64xf32> to vector<64x1xf32>
    %cst_81 = arith.constant 6.400000e+01 : f32
    %102 = vector.broadcast %cst_81 : f32 to vector<64x1xf32>
    %103 = arith.divf %101, %102 : vector<64x1xf32>
    %104 = vector.broadcast %103 : vector<64x1xf32> to vector<64x64xf32>
    %105 = arith.subf %99, %104 : vector<64x64xf32>
    %106 = arith.mulf %105, %105 : vector<64x64xf32>
    %cst_82 = arith.constant dense<0.000000e+00> : vector<64xf32>
    %107 = vector.multi_reduction <add>, %106, %cst_82 [1] : vector<64x64xf32> to vector<64xf32>
    %108 = vector.shape_cast %107 : vector<64xf32> to vector<64x1xf32>
    %cst_83 = arith.constant 6.400000e+01 : f32
    %109 = vector.broadcast %cst_83 : f32 to vector<64x1xf32>
    %110 = arith.divf %108, %109 : vector<64x1xf32>
    %111 = vector.broadcast %103 : vector<64x1xf32> to vector<64x64xf32>
    %112 = arith.subf %99, %111 : vector<64x64xf32>
    %cst_84 = arith.constant 9.99999974E-6 : f32
    %113 = vector.broadcast %cst_84 : f32 to vector<64x1xf32>
    %114 = arith.addf %110, %113 : vector<64x1xf32>
    %115 = math.rsqrt %114 : vector<64x1xf32>
    %116 = vector.broadcast %115 : vector<64x1xf32> to vector<64x64xf32>
    %117 = arith.mulf %112, %116 : vector<64x64xf32>
    %c0_85 = arith.constant 0 : index
    %c0_86 = arith.constant 0 : index
    %c0_87 = arith.constant 0 : index
    %118 = vector.load %arg10[%c0_85, %c0_86, %c0_87] : memref<1x1x64xf32, #tpu.memory_space<vmem>>, vector<1x1x64xf32>
    %119 = vector.shape_cast %118 : vector<1x1x64xf32> to vector<1x64xf32>
    %120 = vector.broadcast %119 : vector<1x64xf32> to vector<64x64xf32>
    %121 = arith.mulf %117, %120 : vector<64x64xf32>
    %c0_88 = arith.constant 0 : index
    %c0_89 = arith.constant 0 : index
    %c0_90 = arith.constant 0 : index
    %122 = vector.load %arg11[%c0_88, %c0_89, %c0_90] : memref<1x1x64xf32, #tpu.memory_space<vmem>>, vector<1x1x64xf32>
    %123 = vector.shape_cast %122 : vector<1x1x64xf32> to vector<1x64xf32>
    %124 = vector.broadcast %123 : vector<1x64xf32> to vector<64x64xf32>
    %125 = arith.addf %121, %124 : vector<64x64xf32>
    %126 = arith.truncf %125 : vector<64x64xf32> to vector<64x64xbf16>
    %cst_91 = arith.constant 0.000000e+00 : f32
    %127 = vector.broadcast %cst_91 : f32 to vector<64x64xf32>
    %c0_92 = arith.constant 0 : index
    %c0_93 = arith.constant 0 : index
    %c0_94 = arith.constant 0 : index
    %128 = vector.load %arg12[%c0_92, %c0_93, %c0_94] : memref<1x64x128xbf16, #tpu.memory_space<vmem>>, vector<1x64x128xbf16>
    %129 = vector.shape_cast %128 : vector<1x64x128xbf16> to vector<64x128xbf16>
    %cst_95 = arith.constant dense<0.000000e+00> : vector<64x128xf32>
    %130 = tpu.matmul %126, %129, %cst_95 {dimension_numbers = #tpu.dot_dimension_numbers<[1], [0], [0], [1], [0, 0, 1, 1], [], []>} : vector<64x64xbf16>, vector<64x128xbf16>, vector<64x128xf32> -> vector<64x128xf32>
    %c0_96 = arith.constant 0 : index
    %c0_97 = arith.constant 0 : index
    %c0_98 = arith.constant 0 : index
    %131 = vector.load %arg13[%c0_96, %c0_97, %c0_98] : memref<1x1x128xf32, #tpu.memory_space<vmem>>, vector<1x1x128xf32>
    %132 = vector.shape_cast %131 : vector<1x1x128xf32> to vector<1x128xf32>
    %133 = vector.broadcast %132 : vector<1x128xf32> to vector<64x128xf32>
    %134 = arith.addf %130, %133 : vector<64x128xf32>
    %cst_99 = arith.constant 0.000000e+00 : f32
    %135 = vector.broadcast %cst_99 : f32 to vector<64x128xf32>
    %136 = arith.maximumf %134, %135 : vector<64x128xf32>
    %137 = arith.truncf %136 : vector<64x128xf32> to vector<64x128xbf16>
    %c0_100 = arith.constant 0 : index
    %c0_101 = arith.constant 0 : index
    %c0_102 = arith.constant 0 : index
    %138 = vector.load %arg14[%c0_100, %c0_101, %c0_102] : memref<1x128x64xbf16, #tpu.memory_space<vmem>>, vector<1x128x64xbf16>
    %139 = vector.shape_cast %138 : vector<1x128x64xbf16> to vector<128x64xbf16>
    %cst_103 = arith.constant dense<0.000000e+00> : vector<64x64xf32>
    %140 = tpu.matmul %137, %139, %cst_103 {dimension_numbers = #tpu.dot_dimension_numbers<[1], [0], [0], [1], [0, 0, 1, 1], [], []>} : vector<64x128xbf16>, vector<128x64xbf16>, vector<64x64xf32> -> vector<64x64xf32>
    %141 = arith.addf %127, %140 : vector<64x64xf32>
    %c0_104 = arith.constant 0 : index
    %c0_105 = arith.constant 0 : index
    %c0_106 = arith.constant 0 : index
    %142 = vector.load %arg15[%c0_104, %c0_105, %c0_106] : memref<1x1x64xf32, #tpu.memory_space<vmem>>, vector<1x1x64xf32>
    %143 = vector.shape_cast %142 : vector<1x1x64xf32> to vector<1x64xf32>
    %144 = vector.broadcast %143 : vector<1x64xf32> to vector<64x64xf32>
    %145 = arith.addf %141, %144 : vector<64x64xf32>
    %146 = arith.addf %125, %145 : vector<64x64xf32>
    %cst_107 = arith.constant dense<0.000000e+00> : vector<64xf32>
    %147 = vector.multi_reduction <add>, %146, %cst_107 [1] : vector<64x64xf32> to vector<64xf32>
    %148 = vector.shape_cast %147 : vector<64xf32> to vector<64x1xf32>
    %cst_108 = arith.constant 6.400000e+01 : f32
    %149 = vector.broadcast %cst_108 : f32 to vector<64x1xf32>
    %150 = arith.divf %148, %149 : vector<64x1xf32>
    %151 = vector.broadcast %150 : vector<64x1xf32> to vector<64x64xf32>
    %152 = arith.subf %146, %151 : vector<64x64xf32>
    %153 = arith.mulf %152, %152 : vector<64x64xf32>
    %cst_109 = arith.constant dense<0.000000e+00> : vector<64xf32>
    %154 = vector.multi_reduction <add>, %153, %cst_109 [1] : vector<64x64xf32> to vector<64xf32>
    %155 = vector.shape_cast %154 : vector<64xf32> to vector<64x1xf32>
    %cst_110 = arith.constant 6.400000e+01 : f32
    %156 = vector.broadcast %cst_110 : f32 to vector<64x1xf32>
    %157 = arith.divf %155, %156 : vector<64x1xf32>
    %158 = vector.broadcast %150 : vector<64x1xf32> to vector<64x64xf32>
    %159 = arith.subf %146, %158 : vector<64x64xf32>
    %cst_111 = arith.constant 9.99999974E-6 : f32
    %160 = vector.broadcast %cst_111 : f32 to vector<64x1xf32>
    %161 = arith.addf %157, %160 : vector<64x1xf32>
    %162 = math.rsqrt %161 : vector<64x1xf32>
    %163 = vector.broadcast %162 : vector<64x1xf32> to vector<64x64xf32>
    %164 = arith.mulf %159, %163 : vector<64x64xf32>
    %c0_112 = arith.constant 0 : index
    %c0_113 = arith.constant 0 : index
    %c0_114 = arith.constant 0 : index
    %165 = vector.load %arg16[%c0_112, %c0_113, %c0_114] : memref<1x1x64xf32, #tpu.memory_space<vmem>>, vector<1x1x64xf32>
    %166 = vector.shape_cast %165 : vector<1x1x64xf32> to vector<1x64xf32>
    %167 = vector.broadcast %166 : vector<1x64xf32> to vector<64x64xf32>
    %168 = arith.mulf %164, %167 : vector<64x64xf32>
    %c0_115 = arith.constant 0 : index
    %c0_116 = arith.constant 0 : index
    %c0_117 = arith.constant 0 : index
    %169 = vector.load %arg17[%c0_115, %c0_116, %c0_117] : memref<1x1x64xf32, #tpu.memory_space<vmem>>, vector<1x1x64xf32>
    %170 = vector.shape_cast %169 : vector<1x1x64xf32> to vector<1x64xf32>
    %171 = vector.broadcast %170 : vector<1x64xf32> to vector<64x64xf32>
    %172 = arith.addf %168, %171 : vector<64x64xf32>
    %c0_118 = arith.constant 0 : index
    %c0_119 = arith.constant 0 : index
    %c0_120 = arith.constant 0 : index
    %173 = vector.load %arg18[%c0_118, %c0_119, %c0_120] : memref<1x64x64xf32, #tpu.memory_space<vmem>>, vector<1x64x64xf32>
    %174 = vector.shape_cast %173 : vector<1x64x64xf32> to vector<64x64xf32>
    %175 = vector.shape_cast %172 : vector<64x64xf32> to vector<1x64x64xf32>
    tpu.vector_store %arg18[%c0_118, %c0_119, %c0_120], %175 {strides = array<i32>} : memref<1x64x64xf32, #tpu.memory_space<vmem>>, vector<1x64x64xf32>,
    return
  }
  func.func @transform_0(%arg0: i32, %arg1: i32) -> (i32, i32, i32) {
    %c0_i32 = arith.constant 0 : i32
    %c0_i32_0 = arith.constant 0 : i32
    %c0_i32_1 = arith.constant 0 : i32
    return %arg0, %c0_i32, %c0_i32_0 : i32, i32, i32
  }
  func.func @transform_1(%arg0: i32, %arg1: i32) -> (i32, i32, i32) {
    %c0_i32 = arith.constant 0 : i32
    %c0_i32_0 = arith.constant 0 : i32
    %c0_i32_1 = arith.constant 0 : i32
    return %arg0, %c0_i32, %c0_i32_0 : i32, i32, i32
  }
  func.func @transform_2(%arg0: i32, %arg1: i32) -> (i32, i32, i32) {
    %c0_i32 = arith.constant 0 : i32
    %c0_i32_0 = arith.constant 0 : i32
    %c0_i32_1 = arith.constant 0 : i32
    return %arg1, %c0_i32, %c0_i32_0 : i32, i32, i32
  }
  func.func @transform_3(%arg0: i32, %arg1: i32) -> (i32, i32, i32) {
    %c0_i32 = arith.constant 0 : i32
    %c0_i32_0 = arith.constant 0 : i32
    %c0_i32_1 = arith.constant 0 : i32
    return %arg1, %c0_i32, %c0_i32_0 : i32, i32, i32
  }
  func.func @transform_4(%arg0: i32, %arg1: i32) -> (i32, i32, i32) {
    %c0_i32 = arith.constant 0 : i32
    %c0_i32_0 = arith.constant 0 : i32
    %c0_i32_1 = arith.constant 0 : i32
    return %arg1, %c0_i32, %c0_i32_0 : i32, i32, i32
  }
  func.func @transform_5(%arg0: i32, %arg1: i32) -> (i32, i32, i32) {
    %c0_i32 = arith.constant 0 : i32
    %c0_i32_0 = arith.constant 0 : i32
    %c0_i32_1 = arith.constant 0 : i32
    return %arg1, %c0_i32, %c0_i32_0 : i32, i32, i32
  }
  func.func @transform_6(%arg0: i32, %arg1: i32) -> (i32, i32, i32) {
    %c0_i32 = arith.constant 0 : i32
    %c0_i32_0 = arith.constant 0 : i32
    %c0_i32_1 = arith.constant 0 : i32
    return %arg1, %c0_i32, %c0_i32_0 : i32, i32, i32
  }
  func.func @transform_7(%arg0: i32, %arg1: i32) -> (i32, i32, i32) {
    %c0_i32 = arith.constant 0 : i32
    %c0_i32_0 = arith.constant 0 : i32
    %c0_i32_1 = arith.constant 0 : i32
    return %arg1, %c0_i32, %c0_i32_0 : i32, i32, i32
  }
  func.func @transform_8(%arg0: i32, %arg1: i32) -> (i32, i32, i32) {
    %c0_i32 = arith.constant 0 : i32
    %c0_i32_0 = arith.constant 0 : i32
    %c0_i32_1 = arith.constant 0 : i32
    return %arg1, %c0_i32, %c0_i32_0 : i32, i32, i32
  }
  func.func @transform_9(%arg0: i32, %arg1: i32) -> (i32, i32, i32) {
    %c0_i32 = arith.constant 0 : i32
    %c0_i32_0 = arith.constant 0 : i32
    %c0_i32_1 = arith.constant 0 : i32
    return %arg1, %c0_i32, %c0_i32_0 : i32, i32, i32
  }
  func.func @transform_10(%arg0: i32, %arg1: i32) -> (i32, i32, i32) {
    %c0_i32 = arith.constant 0 : i32
    %c0_i32_0 = arith.constant 0 : i32
    %c0_i32_1 = arith.constant 0 : i32
    return %arg1, %c0_i32, %c0_i32_0 : i32, i32, i32
  }
  func.func @transform_11(%arg0: i32, %arg1: i32) -> (i32, i32, i32) {
    %c0_i32 = arith.constant 0 : i32
    %c0_i32_0 = arith.constant 0 : i32
    %c0_i32_1 = arith.constant 0 : i32
    return %arg1, %c0_i32, %c0_i32_0 : i32, i32, i32
  }
  func.func @transform_12(%arg0: i32, %arg1: i32) -> (i32, i32, i32) {
    %c0_i32 = arith.constant 0 : i32
    %c0_i32_0 = arith.constant 0 : i32
    %c0_i32_1 = arith.constant 0 : i32
    return %arg1, %c0_i32, %c0_i32_0 : i32, i32, i32
  }
  func.func @transform_13(%arg0: i32, %arg1: i32) -> (i32, i32, i32) {
    %c0_i32 = arith.constant 0 : i32
    %c0_i32_0 = arith.constant 0 : i32
    %c0_i32_1 = arith.constant 0 : i32
    return %arg1, %c0_i32, %c0_i32_0 : i32, i32, i32
  }
  func.func @transform_14(%arg0: i32, %arg1: i32) -> (i32, i32, i32) {
    %c0_i32 = arith.constant 0 : i32
    %c0_i32_0 = arith.constant 0 : i32
    %c0_i32_1 = arith.constant 0 : i32
    return %arg1, %c0_i32, %c0_i32_0 : i32, i32, i32
  }
  func.func @transform_15(%arg0: i32, %arg1: i32) -> (i32, i32, i32) {
    %c0_i32 = arith.constant 0 : i32
    %c0_i32_0 = arith.constant 0 : i32
    %c0_i32_1 = arith.constant 0 : i32
    return %arg1, %c0_i32, %c0_i32_0 : i32, i32, i32
  }
  func.func @transform_16(%arg0: i32, %arg1: i32) -> (i32, i32, i32) {
    %c0_i32 = arith.constant 0 : i32
    %c0_i32_0 = arith.constant 0 : i32
    %c0_i32_1 = arith.constant 0 : i32
    return %arg0, %c0_i32, %c0_i32_0 : i32, i32, i32
  }
}

</mosaic_0001>

<llo_original>
// kernel: tpu_custom_call.1
$region0: #{tpu_custom_call.1}
  #allocation0 [shape = 'u32[]', space=smem, size = 0x4, offset = 0x4, fixed_abs, tag = 'smem constant byte address 0x4 - core index']
  #allocation1 [shape = 'u32[72,128]{1,0:T(1,128)}', space=vmem, size = 0x9000, scoped, tag = 'internal scratch']
  #allocation2 [shape = 'bf16[4,64,16]{2,1,0:T(8,128)(2,1)}', space=vmem, size = 0x10000, scoped, tag = 'scratch operand']
  #allocation3 [shape = 'bf16[4,16,64]{2,1,0:T(8,128)(2,1)}', space=vmem, size = 0x4000, scoped, tag = 'scratch operand']
  #allocation4 [shape = 'bf16[4,64,16]{2,1,0:T(8,128)(2,1)}', space=vmem, size = 0x10000, scoped, tag = 'scratch operand']
  #allocation5 [shape = 'bf16[4,64,16]{2,1,0:T(8,128)(2,1)}', space=vmem, size = 0x10000, scoped, tag = 'scratch operand']
  #allocation6 [shape = 'bf16[64,64]{1,0:T(8,128)(2,1)}', space=vmem, size = 0x4000, scoped, tag = 'scratch operand']
  %s0 = inlined_call_operand.vmem [shape: f32[2,64,64], index: 0, kind: input, shape index: {}]
  %s1 = inlined_call_operand.hbm [shape: f32[2,64,64], index: 1, kind: input, shape index: {}]
  %s2 = inlined_call_operand.vmem [shape: bf16[2,64,128], index: 2, kind: input, shape index: {}]
  %s3 = inlined_call_operand.vmem [shape: f32[2,1,128], index: 3, kind: input, shape index: {}]
  %s4 = inlined_call_operand.hbm [shape: bf16[2,64,64], index: 4, kind: input, shape index: {}]
  %s5 = inlined_call_operand.hbm [shape: f32[2,1,64], index: 5, kind: input, shape index: {}]
  %s6 = inlined_call_operand.hbm [shape: bf16[2,64,64], index: 6, kind: input, shape index: {}]
  %s7 = inlined_call_operand.vmem [shape: f32[2,1,64], index: 7, kind: input, shape index: {}]
  %s8 = inlined_call_operand.hbm [shape: f32[2,1,64], index: 8, kind: input, shape index: {}]
  %s9 = inlined_call_operand.vmem [shape: f32[2,1,64], index: 9, kind: input, shape index: {}]
  %s10 = inlined_call_operand.hbm [shape: bf16[2,64,128], index: 10, kind: input, shape index: {}]
  %s11 = inlined_call_operand.vmem [shape: f32[2,1,128], index: 11, kind: input, shape index: {}]
  %s12 = inlined_call_operand.vmem [shape: bf16[2,128,64], index: 12, kind: input, shape index: {}]
  %s13 = inlined_call_operand.vmem [shape: f32[2,1,64], index: 13, kind: input, shape index: {}]
  %s14 = inlined_call_operand.hbm [shape: f32[2,1,64], index: 14, kind: input, shape index: {}]
  %s15 = inlined_call_operand.vmem [shape: f32[2,1,64], index: 15, kind: input, shape index: {}]
  %s16 = inlined_call_operand.hbm [shape: f32[2,64,64], index: 16, kind: output, shape index: {}]
  %s17 = sld [smem:[#allocation0]]
  $region136: #{tpu_custom_call.1} parent=0
    _
  %s19 = ssub.s32 1, %s17
  %s20 = scalar_select 0, %s19, %s17
  $region1: #{tpu_custom_call.1} parent=0
    #allocation7 [shape = 'u8[65536]{0}', space=vmem, size = 0x10000, scoped, tag = 'input window, operand 1']
    #allocation8 [shape = 's32[2]{0}', space=sflag, size = 0x8, scoped, tag = 'scoped memory for tpu_custom_call.1']
    #allocation9 [shape = 's32[2]{0}', space=sflag, size = 0x8, scoped, tag = 'scoped memory for tpu_custom_call.1']
    #allocation10 [shape = 'u8[32768]{0}', space=vmem, size = 0x8000, scoped, tag = 'input window, operand 4']
    #allocation11 [shape = 's32[2]{0}', space=sflag, size = 0x8, scoped, tag = 'scoped memory for tpu_custom_call.1']
    #allocation12 [shape = 'u8[1024]{0}', space=vmem, size = 0x400, scoped, tag = 'input window, operand 5']
    #allocation13 [shape = 'u8[32768]{0}', space=vmem, size = 0x8000, scoped, tag = 'input window, operand 6']
    #allocation14 [shape = 's32[2]{0}', space=sflag, size = 0x8, scoped, tag = 'scoped memory for tpu_custom_call.1']
    #allocation15 [shape = 'u8[1024]{0}', space=vmem, size = 0x400, scoped, tag = 'input window, operand 8']
    #allocation16 [shape = 'u8[32768]{0}', space=vmem, size = 0x8000, scoped, tag = 'input window, operand 10']
    #allocation17 [shape = 's32[2]{0}', space=sflag, size = 0x8, scoped, tag = 'scoped memory for tpu_custom_call.1']
    #allocation18 [shape = 'u8[1024]{0}', space=vmem, size = 0x400, scoped, tag = 'input window, operand 14']
    #allocation19 [shape = 'u8[65536]{0}', space=vmem, size = 0x10000, scoped, tag = 'output window, operand 0']
    %21 = vsyncpa [#allocation8], 0
    %s22 = scalar_lea.sflag [#allocation8], 1
    %23 = vsyncpa %s22, 0
    %24 = vsyncpa [#allocation11], 0
    %s25 = scalar_lea.sflag [#allocation11], 1
    %26 = vsyncpa %s25, 0
    %27 = vsyncpa [#allocation14], 0
    %s28 = scalar_lea.sflag [#allocation14], 1
    %29 = vsyncpa %s28, 0
    %30 = vsyncpa [#allocation17], 0
    %s31 = scalar_lea.sflag [#allocation17], 1
    %32 = vsyncpa %s31, 0
    %33 = vsyncpa [#allocation9], 0
    %s34 = scalar_lea.sflag [#allocation9], 1
    %35 = vsyncpa %s34, 0
    loop: start=0, step=1, limit=6
    $region2: #{tpu_custom_call.1} parent=1 // loop_pre_header
      _
    $region3: #{tpu_custom_call.1} parent=1 // loop_header
      %s37 = sphi 0, %s41
      %p38 = scmp.ge.s32.totalorder %s37, 6
      %s44 = sphi 0, %s56
      %s45 = sphi 0, %s52
      %s46 = sphi 0, %s44
      %s47 = sphi 0, %s45
      %s48 = sphi 0, %s46
      %s49 = sphi 0, %s47
      %s59 = sphi 0, %s61
      %s62 = sphi 0, %s59
      %s63 = sphi 0, %s62
      %s79 = sphi 0, %s63
      %s85 = sphi 0, %s87
      %s88 = sphi 0, %s85
      %s89 = sphi 0, %s88
      %s105 = sphi 0, %s89
      %s111 = sphi 0, %s113
      %s114 = sphi 0, %s111
      %s115 = sphi 0, %s114
      %s131 = sphi 0, %s115
      %s137 = sphi 0, %s139
      %s140 = sphi 0, %s137
      %s141 = sphi 0, %s140
      %s157 = sphi 0, %s141
      %s163 = sphi 0, %s165
      %s166 = sphi 0, %s163
      %s167 = sphi 0, %s166
      %s183 = sphi 0, %s167
      %s189 = sphi 0, %s191
      %s192 = sphi 0, %s189
      %s193 = sphi 0, %s192
      %s209 = sphi 0, %s193
      %s215 = sphi 0, %s217
      %s218 = sphi 0, %s215
      %s219 = sphi 0, %s218
      %s235 = sphi 0, %s219
      %s241 = sphi 0, %s243
      %s244 = sphi 0, %s241
      %s245 = sphi 0, %s244
      %s261 = sphi 0, %s245
      %s267 = sphi 0, %s269
      %s270 = sphi 0, %s267
      %s271 = sphi 0, %s270
      %s287 = sphi 0, %s271
      %s293 = sphi 0, %s295
      %s296 = sphi 0, %s293
      %s297 = sphi 0, %s296
      %s313 = sphi 0, %s297
      %s319 = sphi 0, %s321
      %s322 = sphi 0, %s319
      %s323 = sphi 0, %s322
      %s339 = sphi 0, %s323
      %s345 = sphi 0, %s347
      %s348 = sphi 0, %s345
      %s349 = sphi 0, %s348
      %s365 = sphi 0, %s349
      %s371 = sphi 0, %s373
      %s374 = sphi 0, %s371
      %s375 = sphi 0, %s374
      %s391 = sphi 0, %s375
      %s397 = sphi 0, %s399
      %s400 = sphi 0, %s397
      %s401 = sphi 0, %s400
      %s417 = sphi 0, %s401
      %s423 = sphi 0, %s425
      %s426 = sphi 0, %s423
      %s427 = sphi 0, %s426
      %s443 = sphi 0, %s427
      %s449 = sphi 0, %s451
      %s452 = sphi 0, %s449
      %s453 = sphi 0, %s452
      %s469 = sphi 0, %s453
      %s475 = sphi 0, %s477
      %s478 = sphi 0, %s475
      %s479 = sphi 0, %s478
      %s495 = sphi 0, %s479
    $region4: #{tpu_custom_call.1} parent=1 // loop_header_branch
      %40 = sbr.rel (%p38) target = $region8
    $region5: #{tpu_custom_call.1} parent=1 // loop_body
      %s42 = ssub.s32 %s37, 1
      %s43 = ssub.s32 %s37, 2
      %s50 = sadd.s32 1, %s45
      %p51 = scmp.ge.s32.totalorder %s50, 2
      %s52 = scalar_select %p51, 0, %s50
      %s53 = sadd.s32 1, %s44
      %s54 = scalar_select %p51, %s53, %s44
      %p55 = scmp.ge.s32.totalorder %s54, 2
      %s56 = scalar_select %p55, 0, %s54
      %s57 = ssub.s32 %s44, %s56
      %p58 = scmp.eq.s32.totalorder %s57, 0
      %s60 = sadd.s32 %s59, 1
      %s61 = scalar_select %p58, %s59, %s60
      %p64 = pneg %p58
      %p65 = scmp.eq.s32.totalorder %s37, 3
      %p66 = por %p64, %p65
      %p67 = scmp.ne.s32.totalorder %s59, %s62
      %p68 = scmp.eq.s32.totalorder %s37, 0
      %p69 = por %p67, %p68
      %p70 = scmp.ne.s32.totalorder %s59, %s62
      %p71 = scmp.eq.s32.totalorder %s42, 3
      %p72 = por %p70, %p71
      %p73 = scmp.ne.s32.totalorder %s62, %s63
      %p74 = scmp.eq.s32.totalorder %s42, 0
      %p75 = por %p73, %p74
      %p76 = scmp.ne.s32.totalorder %s62, %s63
      %p77 = scmp.eq.s32.totalorder %s43, 3
      %p78 = por %p76, %p77
      %p80 = scmp.ne.s32.totalorder %s63, %s79
      %p81 = scmp.eq.s32.totalorder %s43, 0
      %p82 = por %p80, %p81
      %s83 = ssub.s32 %s44, %s56
      %p84 = scmp.eq.s32.totalorder %s83, 0
      %s86 = sadd.s32 %s85, 1
      %s87 = scalar_select %p84, %s85, %s86
      %p90 = pneg %p84
      %p91 = scmp.eq.s32.totalorder %s37, 3
      %p92 = por %p90, %p91
      %p93 = scmp.ne.s32.totalorder %s85, %s88
      %p94 = scmp.eq.s32.totalorder %s37, 0
      %p95 = por %p93, %p94
      %p96 = scmp.ne.s32.totalorder %s85, %s88
      %p97 = scmp.eq.s32.totalorder %s42, 3
      %p98 = por %p96, %p97
      %p99 = scmp.ne.s32.totalorder %s88, %s89
      %p100 = scmp.eq.s32.totalorder %s42, 0
      %p101 = por %p99, %p100
      %p102 = scmp.ne.s32.totalorder %s88, %s89
      %p103 = scmp.eq.s32.totalorder %s43, 3
      %p104 = por %p102, %p103
      %p106 = scmp.ne.s32.totalorder %s89, %s105
      %p107 = scmp.eq.s32.totalorder %s43, 0
      %p108 = por %p106, %p107
      %s109 = ssub.s32 %s45, %s52
      %p110 = scmp.eq.s32.totalorder %s109, 0
      %s112 = sadd.s32 %s111, 1
      %s113 = scalar_select %p110, %s111, %s112
      %p116 = pneg %p110
      %p117 = scmp.eq.s32.totalorder %s37, 3
      %p118 = por %p116, %p117
      %p119 = scmp.ne.s32.totalorder %s111, %s114
      %p120 = scmp.eq.s32.totalorder %s37, 0
      %p121 = por %p119, %p120
      %p122 = scmp.ne.s32.totalorder %s111, %s114
      %p123 = scmp.eq.s32.totalorder %s42, 3
      %p124 = por %p122, %p123
      %p125 = scmp.ne.s32.totalorder %s114, %s115
      %p126 = scmp.eq.s32.totalorder %s42, 0
      %p127 = por %p125, %p126
      %p128 = scmp.ne.s32.totalorder %s114, %s115
      %p129 = scmp.eq.s32.totalorder %s43, 3
      %p130 = por %p128, %p129
      %p132 = scmp.ne.s32.totalorder %s115, %s131
      %p133 = scmp.eq.s32.totalorder %s43, 0
      %p134 = por %p132, %p133
      %s135 = ssub.s32 %s45, %s52
      %p136 = scmp.eq.s32.totalorder %s135, 0
      %s138 = sadd.s32 %s137, 1
      %s139 = scalar_select %p136, %s137, %s138
      %p142 = pneg %p136
      %p143 = scmp.eq.s32.totalorder %s37, 3
      %p144 = por %p142, %p143
      %p145 = scmp.ne.s32.totalorder %s137, %s140
      %p146 = scmp.eq.s32.totalorder %s37, 0
      %p147 = por %p145, %p146
      %p148 = scmp.ne.s32.totalorder %s137, %s140
      %p149 = scmp.eq.s32.totalorder %s42, 3
      %p150 = por %p148, %p149
      %p151 = scmp.ne.s32.totalorder %s140, %s141
      %p152 = scmp.eq.s32.totalorder %s42, 0
      %p153 = por %p151, %p152
      %p154 = scmp.ne.s32.totalorder %s140, %s141
      %p155 = scmp.eq.s32.totalorder %s43, 3
      %p156 = por %p154, %p155
      %p158 = scmp.ne.s32.totalorder %s141, %s157
      %p159 = scmp.eq.s32.totalorder %s43, 0
      %p160 = por %p158, %p159
      %s161 = ssub.s32 %s45, %s52
      %p162 = scmp.eq.s32.totalorder %s161, 0
      %s164 = sadd.s32 %s163, 1
      %s165 = scalar_select %p162, %s163, %s164
      %p168 = pneg %p162
      %p169 = scmp.eq.s32.totalorder %s37, 3
      %p170 = por %p168, %p169
      %p171 = scmp.ne.s32.totalorder %s163, %s166
      %p172 = scmp.eq.s32.totalorder %s37, 0
      %p173 = por %p171, %p172
      %p174 = scmp.ne.s32.totalorder %s163, %s166
      %p175 = scmp.eq.s32.totalorder %s42, 3
      %p176 = por %p174, %p175
      %p177 = scmp.ne.s32.totalorder %s166, %s167
      %p178 = scmp.eq.s32.totalorder %s42, 0
      %p179 = por %p177, %p178
      %p180 = scmp.ne.s32.totalorder %s166, %s167
      %p181 = scmp.eq.s32.totalorder %s43, 3
      %p182 = por %p180, %p181
      %p184 = scmp.ne.s32.totalorder %s167, %s183
      %p185 = scmp.eq.s32.totalorder %s43, 0
      %p186 = por %p184, %p185
      %s187 = ssub.s32 %s45, %s52
      %p188 = scmp.eq.s32.totalorder %s187, 0
      %s190 = sadd.s32 %s189, 1
      %s191 = scalar_select %p188, %s189, %s190
      %p194 = pneg %p188
      %p195 = scmp.eq.s32.totalorder %s37, 3
      %p196 = por %p194, %p195
      %p197 = scmp.ne.s32.totalorder %s189, %s192
      %p198 = scmp.eq.s32.totalorder %s37, 0
      %p199 = por %p197, %p198
      %p200 = scmp.ne.s32.totalorder %s189, %s192
      %p201 = scmp.eq.s32.totalorder %s42, 3
      %p202 = por %p200, %p201
      %p203 = scmp.ne.s32.totalorder %s192, %s193
      %p204 = scmp.eq.s32.totalorder %s42, 0
      %p205 = por %p203, %p204
      %p206 = scmp.ne.s32.totalorder %s192, %s193
      %p207 = scmp.eq.s32.totalorder %s43, 3
      %p208 = por %p206, %p207
      %p210 = scmp.ne.s32.totalorder %s193, %s209
      %p211 = scmp.eq.s32.totalorder %s43, 0
      %p212 = por %p210, %p211
      %s213 = ssub.s32 %s45, %s52
      %p214 = scmp.eq.s32.totalorder %s213, 0
      %s216 = sadd.s32 %s215, 1
      %s217 = scalar_select %p214, %s215, %s216
      %p220 = pneg %p214
      %p221 = scmp.eq.s32.totalorder %s37, 3
      %p222 = por %p220, %p221
      %p223 = scmp.ne.s32.totalorder %s215, %s218
      %p224 = scmp.eq.s32.totalorder %s37, 0
      %p225 = por %p223, %p224
      %p226 = scmp.ne.s32.totalorder %s215, %s218
      %p227 = scmp.eq.s32.totalorder %s42, 3
      %p228 = por %p226, %p227
      %p229 = scmp.ne.s32.totalorder %s218, %s219
      %p230 = scmp.eq.s32.totalorder %s42, 0
      %p231 = por %p229, %p230
      %p232 = scmp.ne.s32.totalorder %s218, %s219
      %p233 = scmp.eq.s32.totalorder %s43, 3
      %p234 = por %p232, %p233
      %p236 = scmp.ne.s32.totalorder %s219, %s235
      %p237 = scmp.eq.s32.totalorder %s43, 0
      %p238 = por %p236, %p237
      %s239 = ssub.s32 %s45, %s52
      %p240 = scmp.eq.s32.totalorder %s239, 0
      %s242 = sadd.s32 %s241, 1
      %s243 = scalar_select %p240, %s241, %s242
      %p246 = pneg %p240
      %p247 = scmp.eq.s32.totalorder %s37, 3
      %p248 = por %p246, %p247
      %p249 = scmp.ne.s32.totalorder %s241, %s244
      %p250 = scmp.eq.s32.totalorder %s37, 0
      %p251 = por %p249, %p250
      %p252 = scmp.ne.s32.totalorder %s241, %s244
      %p253 = scmp.eq.s32.totalorder %s42, 3
      %p254 = por %p252, %p253
      %p255 = scmp.ne.s32.totalorder %s244, %s245
      %p256 = scmp.eq.s32.totalorder %s42, 0
      %p257 = por %p255, %p256
      %p258 = scmp.ne.s32.totalorder %s244, %s245
      %p259 = scmp.eq.s32.totalorder %s43, 3
      %p260 = por %p258, %p259
      %p262 = scmp.ne.s32.totalorder %s245, %s261
      %p263 = scmp.eq.s32.totalorder %s43, 0
      %p264 = por %p262, %p263
      %s265 = ssub.s32 %s45, %s52
      %p266 = scmp.eq.s32.totalorder %s265, 0
      %s268 = sadd.s32 %s267, 1
      %s269 = scalar_select %p266, %s267, %s268
      %p272 = pneg %p266
      %p273 = scmp.eq.s32.totalorder %s37, 3
      %p274 = por %p272, %p273
      %p275 = scmp.ne.s32.totalorder %s267, %s270
      %p276 = scmp.eq.s32.totalorder %s37, 0
      %p277 = por %p275, %p276
      %p278 = scmp.ne.s32.totalorder %s267, %s270
      %p279 = scmp.eq.s32.totalorder %s42, 3
      %p280 = por %p278, %p279
      %p281 = scmp.ne.s32.totalorder %s270, %s271
      %p282 = scmp.eq.s32.totalorder %s42, 0
      %p283 = por %p281, %p282
      %p284 = scmp.ne.s32.totalorder %s270, %s271
      %p285 = scmp.eq.s32.totalorder %s43, 3
      %p286 = por %p284, %p285
      %p288 = scmp.ne.s32.totalorder %s271, %s287
      %p289 = scmp.eq.s32.totalorder %s43, 0
      %p290 = por %p288, %p289
      %s291 = ssub.s32 %s45, %s52
      %p292 = scmp.eq.s32.totalorder %s291, 0
      %s294 = sadd.s32 %s293, 1
      %s295 = scalar_select %p292, %s293, %s294
      %p298 = pneg %p292
      %p299 = scmp.eq.s32.totalorder %s37, 3
      %p300 = por %p298, %p299
      %p301 = scmp.ne.s32.totalorder %s293, %s296
      %p302 = scmp.eq.s32.totalorder %s37, 0
      %p303 = por %p301, %p302
      %p304 = scmp.ne.s32.totalorder %s293, %s296
      %p305 = scmp.eq.s32.totalorder %s42, 3
      %p306 = por %p304, %p305
      %p307 = scmp.ne.s32.totalorder %s296, %s297
      %p308 = scmp.eq.s32.totalorder %s42, 0
      %p309 = por %p307, %p308
      %p310 = scmp.ne.s32.totalorder %s296, %s297
      %p311 = scmp.eq.s32.totalorder %s43, 3
      %p312 = por %p310, %p311
      %p314 = scmp.ne.s32.totalorder %s297, %s313
      %p315 = scmp.eq.s32.totalorder %s43, 0
      %p316 = por %p314, %p315
      %s317 = ssub.s32 %s45, %s52
      %p318 = scmp.eq.s32.totalorder %s317, 0
      %s320 = sadd.s32 %s319, 1
      %s321 = scalar_select %p318, %s319, %s320
      %p324 = pneg %p318
      %p325 = scmp.eq.s32.totalorder %s37, 3
      %p326 = por %p324, %p325
      %p327 = scmp.ne.s32.totalorder %s319, %s322
      %p328 = scmp.eq.s32.totalorder %s37, 0
      %p329 = por %p327, %p328
      %p330 = scmp.ne.s32.totalorder %s319, %s322
      %p331 = scmp.eq.s32.totalorder %s42, 3
      %p332 = por %p330, %p331
      %p333 = scmp.ne.s32.totalorder %s322, %s323
      %p334 = scmp.eq.s32.totalorder %s42, 0
      %p335 = por %p333, %p334
      %p336 = scmp.ne.s32.totalorder %s322, %s323
      %p337 = scmp.eq.s32.totalorder %s43, 3
      %p338 = por %p336, %p337
      %p340 = scmp.ne.s32.totalorder %s323, %s339
      %p341 = scmp.eq.s32.totalorder %s43, 0
      %p342 = por %p340, %p341
      %s343 = ssub.s32 %s45, %s52
      %p344 = scmp.eq.s32.totalorder %s343, 0
      %s346 = sadd.s32 %s345, 1
      %s347 = scalar_select %p344, %s345, %s346
      %p350 = pneg %p344
      %p351 = scmp.eq.s32.totalorder %s37, 3
      %p352 = por %p350, %p351
      %p353 = scmp.ne.s32.totalorder %s345, %s348
      %p354 = scmp.eq.s32.totalorder %s37, 0
      %p355 = por %p353, %p354
      %p356 = scmp.ne.s32.totalorder %s345, %s348
      %p357 = scmp.eq.s32.totalorder %s42, 3
      %p358 = por %p356, %p357
      %p359 = scmp.ne.s32.totalorder %s348, %s349
      %p360 = scmp.eq.s32.totalorder %s42, 0
      %p361 = por %p359, %p360
      %p362 = scmp.ne.s32.totalorder %s348, %s349
      %p363 = scmp.eq.s32.totalorder %s43, 3
      %p364 = por %p362, %p363
      %p366 = scmp.ne.s32.totalorder %s349, %s365
      %p367 = scmp.eq.s32.totalorder %s43, 0
      %p368 = por %p366, %p367
      %s369 = ssub.s32 %s45, %s52
      %p370 = scmp.eq.s32.totalorder %s369, 0
      %s372 = sadd.s32 %s371, 1
      %s373 = scalar_select %p370, %s371, %s372
      %p376 = pneg %p370
      %p377 = scmp.eq.s32.totalorder %s37, 3
      %p378 = por %p376, %p377
      %p379 = scmp.ne.s32.totalorder %s371, %s374
      %p380 = scmp.eq.s32.totalorder %s37, 0
      %p381 = por %p379, %p380
      %p382 = scmp.ne.s32.totalorder %s371, %s374
      %p383 = scmp.eq.s32.totalorder %s42, 3
      %p384 = por %p382, %p383
      %p385 = scmp.ne.s32.totalorder %s374, %s375
      %p386 = scmp.eq.s32.totalorder %s42, 0
      %p387 = por %p385, %p386
      %p388 = scmp.ne.s32.totalorder %s374, %s375
      %p389 = scmp.eq.s32.totalorder %s43, 3
      %p390 = por %p388, %p389
      %p392 = scmp.ne.s32.totalorder %s375, %s391
      %p393 = scmp.eq.s32.totalorder %s43, 0
      %p394 = por %p392, %p393
      %s395 = ssub.s32 %s45, %s52
      %p396 = scmp.eq.s32.totalorder %s395, 0
      %s398 = sadd.s32 %s397, 1
      %s399 = scalar_select %p396, %s397, %s398
      %p402 = pneg %p396
      %p403 = scmp.eq.s32.totalorder %s37, 3
      %p404 = por %p402, %p403
      %p405 = scmp.ne.s32.totalorder %s397, %s400
      %p406 = scmp.eq.s32.totalorder %s37, 0
      %p407 = por %p405, %p406
      %p408 = scmp.ne.s32.totalorder %s397, %s400
      %p409 = scmp.eq.s32.totalorder %s42, 3
      %p410 = por %p408, %p409
      %p411 = scmp.ne.s32.totalorder %s400, %s401
      %p412 = scmp.eq.s32.totalorder %s42, 0
      %p413 = por %p411, %p412
      %p414 = scmp.ne.s32.totalorder %s400, %s401
      %p415 = scmp.eq.s32.totalorder %s43, 3
      %p416 = por %p414, %p415
      %p418 = scmp.ne.s32.totalorder %s401, %s417
      %p419 = scmp.eq.s32.totalorder %s43, 0
      %p420 = por %p418, %p419
      %s421 = ssub.s32 %s45, %s52
      %p422 = scmp.eq.s32.totalorder %s421, 0
      %s424 = sadd.s32 %s423, 1
      %s425 = scalar_select %p422, %s423, %s424
      %p428 = pneg %p422
      %p429 = scmp.eq.s32.totalorder %s37, 3
      %p430 = por %p428, %p429
      %p431 = scmp.ne.s32.totalorder %s423, %s426
      %p432 = scmp.eq.s32.totalorder %s37, 0
      %p433 = por %p431, %p432
      %p434 = scmp.ne.s32.totalorder %s423, %s426
      %p435 = scmp.eq.s32.totalorder %s42, 3
      %p436 = por %p434, %p435
      %p437 = scmp.ne.s32.totalorder %s426, %s427
      %p438 = scmp.eq.s32.totalorder %s42, 0
      %p439 = por %p437, %p438
      %p440 = scmp.ne.s32.totalorder %s426, %s427
      %p441 = scmp.eq.s32.totalorder %s43, 3
      %p442 = por %p440, %p441
      %p444 = scmp.ne.s32.totalorder %s427, %s443
      %p445 = scmp.eq.s32.totalorder %s43, 0
      %p446 = por %p444, %p445
      %s447 = ssub.s32 %s45, %s52
      %p448 = scmp.eq.s32.totalorder %s447, 0
      %s450 = sadd.s32 %s449, 1
      %s451 = scalar_select %p448, %s449, %s450
      %p454 = pneg %p448
      %p455 = scmp.eq.s32.totalorder %s37, 3
      %p456 = por %p454, %p455
      %p457 = scmp.ne.s32.totalorder %s449, %s452
      %p458 = scmp.eq.s32.totalorder %s37, 0
      %p459 = por %p457, %p458
      %p460 = scmp.ne.s32.totalorder %s449, %s452
      %p461 = scmp.eq.s32.totalorder %s42, 3
      %p462 = por %p460, %p461
      %p463 = scmp.ne.s32.totalorder %s452, %s453
      %p464 = scmp.eq.s32.totalorder %s42, 0
      %p465 = por %p463, %p464
      %p466 = scmp.ne.s32.totalorder %s452, %s453
      %p467 = scmp.eq.s32.totalorder %s43, 3
      %p468 = por %p466, %p467
      %p470 = scmp.ne.s32.totalorder %s453, %s469
      %p471 = scmp.eq.s32.totalorder %s43, 0
      %p472 = por %p470, %p471
      %s473 = ssub.s32 %s44, %s56
      %p474 = scmp.eq.s32.totalorder %s473, 0
      %s476 = sadd.s32 %s475, 1
      %s477 = scalar_select %p474, %s475, %s476
      %p480 = pneg %p474
      %p481 = scmp.eq.s32.totalorder %s37, 3
      %p482 = por %p480, %p481
      %p483 = scmp.ne.s32.totalorder %s475, %s478
      %p484 = scmp.eq.s32.totalorder %s37, 0
      %p485 = por %p483, %p484
      %p486 = scmp.ne.s32.totalorder %s475, %s478
      %p487 = scmp.eq.s32.totalorder %s42, 3
      %p488 = por %p486, %p487
      %p489 = scmp.ne.s32.totalorder %s478, %s479
      %p490 = scmp.eq.s32.totalorder %s42, 0
      %p491 = por %p489, %p490
      %p492 = scmp.ne.s32.totalorder %s478, %s479
      %p493 = scmp.eq.s32.totalorder %s43, 3
      %p494 = por %p492, %p493
      %p496 = scmp.ne.s32.totalorder %s479, %s495
      %p497 = scmp.eq.s32.totalorder %s43, 0
      %p498 = por %p496, %p497
      %p499 = scmp.le.s32.totalorder 1, %s37
      %p500 = scmp.lt.s32.totalorder %s37, 5
      %p501 = pnand %p499, %p500
      %p502 = pneg %p501
      // Predicated region
      $region9: #{tpu_custom_call.1} parent=5 // pred_check
        _
      $region10: #{tpu_custom_call.1} parent=5 // pred_check_branch
        %504 = sbr.rel (%p501) target = $region12
      $region11: #{tpu_custom_call.1} parent=5 // pred_region
        %s505 = ssub.s32 %s37, 1
      $region12: #{tpu_custom_call.1} parent=5 // pred_fallthru
        _
      %p506 = scmp.lt.s32.totalorder %s37, 4
      // Predicated region
      $region13: #{tpu_custom_call.1} parent=5 // pred_check
        %p507 = pneg %p506
      $region14: #{tpu_custom_call.1} parent=5 // pred_check_branch
        %509 = sbr.rel (%p507) target = $region16
      $region15: #{tpu_custom_call.1} parent=5 // pred_region
        // Predicated region
        $region17: #{tpu_custom_call.1} parent=15 // pred_check
          %p510 = pneg %p69
        $region18: #{tpu_custom_call.1} parent=15 // pred_check_branch
          %512 = sbr.rel (%p510) target = $region20
        $region19: #{tpu_custom_call.1} parent=15 // pred_region
          %p513 = scmp.lt.s32.totalorder %s44, 1
          %s514 = scalar_select %p513, %s44, 1
          %s515 = smul.addr %s514, 8
          %s516 = smul.addr %s515, 8
          %s517 = scalar_lea.vmem %s0, %s516
        $region20: #{tpu_custom_call.1} parent=15 // pred_fallthru
          _
        // Predicated region
        $region21: #{tpu_custom_call.1} parent=15 // pred_check
          %p518 = pneg %p95
        $region22: #{tpu_custom_call.1} parent=15 // pred_check_branch
          %520 = sbr.rel (%p518) target = $region24
        $region23: #{tpu_custom_call.1} parent=15 // pred_region
          %s521 = sand.u32 %s85, 1
          %s522 = scalar_lea.sflag [#allocation8], %s521
          %s523 = sand.u32 %s85, 1
          %s524 = smul.addr %s523, 64
          %s525 = scalar_lea.vmem [#allocation7], %s524
          %527 = vsyncadd %s522, 0
          %s528 = smul.addr %s44, 8
          %s529 = smul.addr %s528, 8
          %s530 = scalar_lea.hbm %s1, %s529
          %s531 = sshll.u32 %s530, 4
          %s532 = int_to_ptr.hbm [resolvable:$true] %s531
          %s533 = sshll.u32 %s525, 4
          %s534 = int_to_ptr.vmem [resolvable:$true] %s533
          %539 = dma.hbm_to_vmem [thread:$0]  %s532, 1024, %s534, %s522, 128, 128, 8
        $region24: #{tpu_custom_call.1} parent=15 // pred_fallthru
          _
        // Predicated region
        $region25: #{tpu_custom_call.1} parent=15 // pred_check
          %p540 = pneg %p121
        $region26: #{tpu_custom_call.1} parent=15 // pred_check_branch
          %542 = sbr.rel (%p540) target = $region28
        $region27: #{tpu_custom_call.1} parent=15 // pred_region
          %p543 = scmp.lt.s32.totalorder %s45, 1
          %s544 = scalar_select %p543, %s45, 1
          %s545 = smul.addr %s544, 8
          %s546 = smul.addr %s545, 4
          %s547 = scalar_lea.vmem %s2, %s546
        $region28: #{tpu_custom_call.1} parent=15 // pred_fallthru
          _
        // Predicated region
        $region29: #{tpu_custom_call.1} parent=15 // pred_check
          %p548 = pneg %p147
        $region30: #{tpu_custom_call.1} parent=15 // pred_check_branch
          %550 = sbr.rel (%p548) target = $region32
        $region31: #{tpu_custom_call.1} parent=15 // pred_region
          %p551 = scmp.lt.s32.totalorder %s45, 1
          %s552 = scalar_select %p551, %s45, 1
          %s553 = scalar_lea.vmem %s3, %s552
        $region32: #{tpu_custom_call.1} parent=15 // pred_fallthru
          _
        // Predicated region
        $region33: #{tpu_custom_call.1} parent=15 // pred_check
          %p554 = pneg %p173
        $region34: #{tpu_custom_call.1} parent=15 // pred_check_branch
          %556 = sbr.rel (%p554) target = $region36
        $region35: #{tpu_custom_call.1} parent=15 // pred_region
          %s557 = sand.u32 %s37, 1
          %s558 = scalar_lea.sflag [#allocation11], %s557
          %s559 = sand.u32 %s163, 1
          %s560 = smul.addr %s559, 32
          %s561 = scalar_lea.vmem [#allocation10], %s560
          %563 = vsyncadd %s558, 0
          %s564 = smul.addr %s45, 8
          %s565 = smul.addr %s564, 4
          %s566 = scalar_lea.hbm %s4, %s565
          %s567 = sshll.u32 %s566, 4
          %s568 = int_to_ptr.hbm [resolvable:$true] %s567
          %s569 = sshll.u32 %s561, 4
          %s570 = int_to_ptr.vmem [resolvable:$true] %s569
          %575 = dma.hbm_to_vmem [thread:$0]  %s568, 512, %s570, %s558, 64, 64, 4
        $region36: #{tpu_custom_call.1} parent=15 // pred_fallthru
          _
        // Predicated region
        $region37: #{tpu_custom_call.1} parent=15 // pred_check
          %p576 = pneg %p199
        $region38: #{tpu_custom_call.1} parent=15 // pred_check_branch
          %578 = sbr.rel (%p576) target = $region40
        $region39: #{tpu_custom_call.1} parent=15 // pred_region
          %s579 = sand.u32 %s37, 1
          %s580 = scalar_lea.sflag [#allocation11], %s579
          %s581 = sand.u32 %s189, 1
          %s582 = scalar_lea.vmem [#allocation12], %s581
          %584 = vsyncadd %s580, 0
          %s585 = scalar_lea.hbm %s5, %s45
          %s587 = sshll.u32 %s585, 4
          %s588 = int_to_ptr.hbm [resolvable:$true] %s587
          %s589 = sshll.u32 %s582, 4
          %s590 = int_to_ptr.vmem [resolvable:$true] %s589
          %592 = dma.hbm_to_vmem [thread:$0]  %s588, 16, %s590, %s580
        $region40: #{tpu_custom_call.1} parent=15 // pred_fallthru
          _
        // Predicated region
        $region41: #{tpu_custom_call.1} parent=15 // pred_check
          %p593 = pneg %p225
        $region42: #{tpu_custom_call.1} parent=15 // pred_check_branch
          %595 = sbr.rel (%p593) target = $region44
        $region43: #{tpu_custom_call.1} parent=15 // pred_region
          %s596 = sand.u32 %s37, 1
          %s597 = scalar_lea.sflag [#allocation14], %s596
          %s598 = sand.u32 %s215, 1
          %s599 = smul.addr %s598, 32
          %s600 = scalar_lea.vmem [#allocation13], %s599
          %602 = vsyncadd %s597, 0
          %s603 = smul.addr %s45, 8
          %s604 = smul.addr %s603, 4
          %s605 = scalar_lea.hbm %s6, %s604
          %s606 = sshll.u32 %s605, 4
          %s607 = int_to_ptr.hbm [resolvable:$true] %s606
          %s608 = sshll.u32 %s600, 4
          %s609 = int_to_ptr.vmem [resolvable:$true] %s608
          %614 = dma.hbm_to_vmem [thread:$0]  %s607, 512, %s609, %s597, 64, 64, 4
        $region44: #{tpu_custom_call.1} parent=15 // pred_fallthru
          _
        // Predicated region
        $region45: #{tpu_custom_call.1} parent=15 // pred_check
          %p615 = pneg %p251
        $region46: #{tpu_custom_call.1} parent=15 // pred_check_branch
          %617 = sbr.rel (%p615) target = $region48
        $region47: #{tpu_custom_call.1} parent=15 // pred_region
          %p618 = scmp.lt.s32.totalorder %s45, 1
          %s619 = scalar_select %p618, %s45, 1
          %s620 = scalar_lea.vmem %s7, %s619
        $region48: #{tpu_custom_call.1} parent=15 // pred_fallthru
          _
        // Predicated region
        $region49: #{tpu_custom_call.1} parent=15 // pred_check
          %p621 = pneg %p277
        $region50: #{tpu_custom_call.1} parent=15 // pred_check_branch
          %623 = sbr.rel (%p621) target = $region52
        $region51: #{tpu_custom_call.1} parent=15 // pred_region
          %s624 = sand.u32 %s37, 1
          %s625 = scalar_lea.sflag [#allocation14], %s624
          %s626 = sand.u32 %s267, 1
          %s627 = scalar_lea.vmem [#allocation15], %s626
          %629 = vsyncadd %s625, 0
          %s630 = scalar_lea.hbm %s8, %s45
          %s632 = sshll.u32 %s630, 4
          %s633 = int_to_ptr.hbm [resolvable:$true] %s632
          %s634 = sshll.u32 %s627, 4
          %s635 = int_to_ptr.vmem [resolvable:$true] %s634
          %637 = dma.hbm_to_vmem [thread:$0]  %s633, 16, %s635, %s625
        $region52: #{tpu_custom_call.1} parent=15 // pred_fallthru
          _
        // Predicated region
        $region53: #{tpu_custom_call.1} parent=15 // pred_check
          %p638 = pneg %p303
        $region54: #{tpu_custom_call.1} parent=15 // pred_check_branch
          %640 = sbr.rel (%p638) target = $region56
        $region55: #{tpu_custom_call.1} parent=15 // pred_region
          %p641 = scmp.lt.s32.totalorder %s45, 1
          %s642 = scalar_select %p641, %s45, 1
          %s643 = scalar_lea.vmem %s9, %s642
        $region56: #{tpu_custom_call.1} parent=15 // pred_fallthru
          _
        // Predicated region
        $region57: #{tpu_custom_call.1} parent=15 // pred_check
          %p644 = pneg %p329
        $region58: #{tpu_custom_call.1} parent=15 // pred_check_branch
          %646 = sbr.rel (%p644) target = $region60
        $region59: #{tpu_custom_call.1} parent=15 // pred_region
          %s647 = sand.u32 %s37, 1
          %s648 = scalar_lea.sflag [#allocation17], %s647
          %s649 = sand.u32 %s319, 1
          %s650 = smul.addr %s649, 32
          %s651 = scalar_lea.vmem [#allocation16], %s650
          %653 = vsyncadd %s648, 0
          %s654 = smul.addr %s45, 8
          %s655 = smul.addr %s654, 4
          %s656 = scalar_lea.hbm %s10, %s655
          %s657 = sshll.u32 %s656, 4
          %s658 = int_to_ptr.hbm [resolvable:$true] %s657
          %s659 = sshll.u32 %s651, 4
          %s660 = int_to_ptr.vmem [resolvable:$true] %s659
          %665 = dma.hbm_to_vmem [thread:$0]  %s658, 512, %s660, %s648, 64, 64, 4
        $region60: #{tpu_custom_call.1} parent=15 // pred_fallthru
          _
        // Predicated region
        $region61: #{tpu_custom_call.1} parent=15 // pred_check
          %p666 = pneg %p355
        $region62: #{tpu_custom_call.1} parent=15 // pred_check_branch
          %668 = sbr.rel (%p666) target = $region64
        $region63: #{tpu_custom_call.1} parent=15 // pred_region
          %p669 = scmp.lt.s32.totalorder %s45, 1
          %s670 = scalar_select %p669, %s45, 1
          %s671 = scalar_lea.vmem %s11, %s670
        $region64: #{tpu_custom_call.1} parent=15 // pred_fallthru
          _
        // Predicated region
        $region65: #{tpu_custom_call.1} parent=15 // pred_check
          %p672 = pneg %p381
        $region66: #{tpu_custom_call.1} parent=15 // pred_check_branch
          %674 = sbr.rel (%p672) target = $region68
        $region67: #{tpu_custom_call.1} parent=15 // pred_region
          %p675 = scmp.lt.s32.totalorder %s45, 1
          %s676 = scalar_select %p675, %s45, 1
          %s677 = smul.addr %s676, 16
          %s678 = smul.addr %s677, 4
          %s679 = scalar_lea.vmem %s12, %s678
        $region68: #{tpu_custom_call.1} parent=15 // pred_fallthru
          _
        // Predicated region
        $region69: #{tpu_custom_call.1} parent=15 // pred_check
          %p680 = pneg %p407
        $region70: #{tpu_custom_call.1} parent=15 // pred_check_branch
          %682 = sbr.rel (%p680) target = $region72
        $region71: #{tpu_custom_call.1} parent=15 // pred_region
          %p683 = scmp.lt.s32.totalorder %s45, 1
          %s684 = scalar_select %p683, %s45, 1
          %s685 = scalar_lea.vmem %s13, %s684
        $region72: #{tpu_custom_call.1} parent=15 // pred_fallthru
          _
        // Predicated region
        $region73: #{tpu_custom_call.1} parent=15 // pred_check
          %p686 = pneg %p433
        $region74: #{tpu_custom_call.1} parent=15 // pred_check_branch
          %688 = sbr.rel (%p686) target = $region76
        $region75: #{tpu_custom_call.1} parent=15 // pred_region
          %s689 = sand.u32 %s37, 1
          %s690 = scalar_lea.sflag [#allocation17], %s689
          %s691 = sand.u32 %s423, 1
          %s692 = scalar_lea.vmem [#allocation18], %s691
          %694 = vsyncadd %s690, 0
          %s695 = scalar_lea.hbm %s14, %s45
          %s697 = sshll.u32 %s695, 4
          %s698 = int_to_ptr.hbm [resolvable:$true] %s697
          %s699 = sshll.u32 %s692, 4
          %s700 = int_to_ptr.vmem [resolvable:$true] %s699
          %702 = dma.hbm_to_vmem [thread:$0]  %s698, 16, %s700, %s690
        $region76: #{tpu_custom_call.1} parent=15 // pred_fallthru
          _
        // Predicated region
        $region77: #{tpu_custom_call.1} parent=15 // pred_check
          %p703 = pneg %p459
        $region78: #{tpu_custom_call.1} parent=15 // pred_check_branch
          %705 = sbr.rel (%p703) target = $region80
        $region79: #{tpu_custom_call.1} parent=15 // pred_region
          %p706 = scmp.lt.s32.totalorder %s45, 1
          %s707 = scalar_select %p706, %s45, 1
          %s708 = scalar_lea.vmem %s15, %s707
        $region80: #{tpu_custom_call.1} parent=15 // pred_fallthru
          _
      $region16: #{tpu_custom_call.1} parent=5 // pred_fallthru
        _
      %p709 = scmp.le.s32.totalorder 1, %s37
      %p710 = scmp.lt.s32.totalorder %s37, 5
      %p711 = pnand %p709, %p710
      %p712 = pneg %p711
      // Predicated region
      $region81: #{tpu_custom_call.1} parent=5 // pred_check
        _
      $region82: #{tpu_custom_call.1} parent=5 // pred_check_branch
        %714 = sbr.rel (%p711) target = $region84
      $region83: #{tpu_custom_call.1} parent=5 // pred_region
        %s715 = ssub.s32 %s37, 1
        %s716 = sand.u32 %s88, 1
        %s717 = scalar_lea.sflag [#allocation8], %s716
        %s718 = sand.u32 %s88, 1
        %s719 = smul.addr %s718, 64
        %s720 = scalar_lea.vmem [#allocation7], %s719
        // Predicated region
        $region85: #{tpu_custom_call.1} parent=83 // pred_check
          %p721 = pneg %p101
        $region86: #{tpu_custom_call.1} parent=83 // pred_check_branch
          %723 = sbr.rel (%p721) target = $region88
        $region87: #{tpu_custom_call.1} parent=83 // pred_region
          %725 = dma.done %s717, 1024
        $region88: #{tpu_custom_call.1} parent=83 // pred_fallthru
          _
        %s726 = sand.u32 %s42, 1
        %s727 = scalar_lea.sflag [#allocation11], %s726
        %s728 = sand.u32 %s166, 1
        %s729 = smul.addr %s728, 32
        %s730 = scalar_lea.vmem [#allocation10], %s729
        // Predicated region
        $region89: #{tpu_custom_call.1} parent=83 // pred_check
          %p731 = pneg %p179
        $region90: #{tpu_custom_call.1} parent=83 // pred_check_branch
          %733 = sbr.rel (%p731) target = $region92
        $region91: #{tpu_custom_call.1} parent=83 // pred_region
          %735 = dma.done %s727, 512
        $region92: #{tpu_custom_call.1} parent=83 // pred_fallthru
          _
        %s736 = sand.u32 %s42, 1
        %s737 = scalar_lea.sflag [#allocation11], %s736
        %s738 = sand.u32 %s192, 1
        %s739 = scalar_lea.vmem [#allocation12], %s738
        // Predicated region
        $region93: #{tpu_custom_call.1} parent=83 // pred_check
          %p740 = pneg %p205
        $region94: #{tpu_custom_call.1} parent=83 // pred_check_branch
          %742 = sbr.rel (%p740) target = $region96
        $region95: #{tpu_custom_call.1} parent=83 // pred_region
          %744 = dma.done %s737, 16
        $region96: #{tpu_custom_call.1} parent=83 // pred_fallthru
          _
        %s745 = sand.u32 %s42, 1
        %s746 = scalar_lea.sflag [#allocation14], %s745
        %s747 = sand.u32 %s218, 1
        %s748 = smul.addr %s747, 32
        %s749 = scalar_lea.vmem [#allocation13], %s748
        // Predicated region
        $region97: #{tpu_custom_call.1} parent=83 // pred_check
          %p750 = pneg %p231
        $region98: #{tpu_custom_call.1} parent=83 // pred_check_branch
          %752 = sbr.rel (%p750) target = $region100
        $region99: #{tpu_custom_call.1} parent=83 // pred_region
          %754 = dma.done %s746, 512
        $region100: #{tpu_custom_call.1} parent=83 // pred_fallthru
          _
        %s755 = sand.u32 %s42, 1
        %s756 = scalar_lea.sflag [#allocation14], %s755
        %s757 = sand.u32 %s270, 1
        %s758 = scalar_lea.vmem [#allocation15], %s757
        // Predicated region
        $region101: #{tpu_custom_call.1} parent=83 // pred_check
          %p759 = pneg %p283
        $region102: #{tpu_custom_call.1} parent=83 // pred_check_branch
          %761 = sbr.rel (%p759) target = $region104
        $region103: #{tpu_custom_call.1} parent=83 // pred_region
          %763 = dma.done %s756, 16
        $region104: #{tpu_custom_call.1} parent=83 // pred_fallthru
          _
        %s764 = sand.u32 %s42, 1
        %s765 = scalar_lea.sflag [#allocation17], %s764
        %s766 = sand.u32 %s322, 1
        %s767 = smul.addr %s766, 32
        %s768 = scalar_lea.vmem [#allocation16], %s767
        // Predicated region
        $region105: #{tpu_custom_call.1} parent=83 // pred_check
          %p769 = pneg %p335
        $region106: #{tpu_custom_call.1} parent=83 // pred_check_branch
          %771 = sbr.rel (%p769) target = $region108
        $region107: #{tpu_custom_call.1} parent=83 // pred_region
          %773 = dma.done %s765, 512
        $region108: #{tpu_custom_call.1} parent=83 // pred_fallthru
          _
        %s774 = sand.u32 %s42, 1
        %s775 = scalar_lea.sflag [#allocation17], %s774
        %s776 = sand.u32 %s426, 1
        %s777 = scalar_lea.vmem [#allocation18], %s776
        // Predicated region
        $region109: #{tpu_custom_call.1} parent=83 // pred_check
          %p778 = pneg %p439
        $region110: #{tpu_custom_call.1} parent=83 // pred_check_branch
          %780 = sbr.rel (%p778) target = $region112
        $region111: #{tpu_custom_call.1} parent=83 // pred_region
          %782 = dma.done %s775, 16
        $region112: #{tpu_custom_call.1} parent=83 // pred_fallthru
          _
        %p783 = scmp.lt.s32.totalorder %s46, 1
        %s784 = scalar_select %p783, %s46, 1
        %s785 = smul.addr %s784, 8
        %s786 = smul.addr %s785, 8
        %s787 = scalar_lea.vmem %s0, %s786
        %p788 = pneg %p75
        %p789 = pneg %p72
        %s790 = sand.u32 %s88, 1
        %s791 = scalar_lea.sflag [#allocation8], %s790
        %s792 = sand.u32 %s88, 1
        %s793 = smul.addr %s792, 64
        %s794 = scalar_lea.vmem [#allocation7], %s793
        %p795 = pneg %p101
        %p796 = pneg %p98
        %p797 = scmp.lt.s32.totalorder %s47, 1
        %s798 = scalar_select %p797, %s47, 1
        %s799 = smul.addr %s798, 8
        %s800 = smul.addr %s799, 4
        %s801 = scalar_lea.vmem %s2, %s800
        %p802 = pneg %p127
        %p803 = pneg %p124
        %p804 = scmp.lt.s32.totalorder %s47, 1
        %s805 = scalar_select %p804, %s47, 1
        %s806 = scalar_lea.vmem %s3, %s805
        %p807 = pneg %p153
        %p808 = pneg %p150
        %s809 = sand.u32 %s42, 1
        %s810 = scalar_lea.sflag [#allocation11], %s809
        %s811 = sand.u32 %s166, 1
        %s812 = smul.addr %s811, 32
        %s813 = scalar_lea.vmem [#allocation10], %s812
        %p814 = pneg %p179
        %p815 = pneg %p176
        %s816 = sand.u32 %s42, 1
        %s817 = scalar_lea.sflag [#allocation11], %s816
        %s818 = sand.u32 %s192, 1
        %s819 = scalar_lea.vmem [#allocation12], %s818
        %p820 = pneg %p205
        %p821 = pneg %p202
        %s822 = sand.u32 %s42, 1
        %s823 = scalar_lea.sflag [#allocation14], %s822
        %s824 = sand.u32 %s218, 1
        %s825 = smul.addr %s824, 32
        %s826 = scalar_lea.vmem [#allocation13], %s825
        %p827 = pneg %p231
        %p828 = pneg %p228
        %p829 = scmp.lt.s32.totalorder %s47, 1
        %s830 = scalar_select %p829, %s47, 1
        %s831 = scalar_lea.vmem %s7, %s830
        %p832 = pneg %p257
        %p833 = pneg %p254
        %s834 = sand.u32 %s42, 1
        %s835 = scalar_lea.sflag [#allocation14], %s834
        %s836 = sand.u32 %s270, 1
        %s837 = scalar_lea.vmem [#allocation15], %s836
        %p838 = pneg %p283
        %p839 = pneg %p280
        %p840 = scmp.lt.s32.totalorder %s47, 1
        %s841 = scalar_select %p840, %s47, 1
        %s842 = scalar_lea.vmem %s9, %s841
        %p843 = pneg %p309
        %p844 = pneg %p306
        %s845 = sand.u32 %s42, 1
        %s846 = scalar_lea.sflag [#allocation17], %s845
        %s847 = sand.u32 %s322, 1
        %s848 = smul.addr %s847, 32
        %s849 = scalar_lea.vmem [#allocation16], %s848
        %p850 = pneg %p335
        %p851 = pneg %p332
        %p852 = scmp.lt.s32.totalorder %s47, 1
        %s853 = scalar_select %p852, %s47, 1
        %s854 = scalar_lea.vmem %s11, %s853
        %p855 = pneg %p361
        %p856 = pneg %p358
        %p857 = scmp.lt.s32.totalorder %s47, 1
        %s858 = scalar_select %p857, %s47, 1
        %s859 = smul.addr %s858, 16
        %s860 = smul.addr %s859, 4
        %s861 = scalar_lea.vmem %s12, %s860
        %p862 = pneg %p387
        %p863 = pneg %p384
        %p864 = scmp.lt.s32.totalorder %s47, 1
        %s865 = scalar_select %p864, %s47, 1
        %s866 = scalar_lea.vmem %s13, %s865
        %p867 = pneg %p413
        %p868 = pneg %p410
        %s869 = sand.u32 %s42, 1
        %s870 = scalar_lea.sflag [#allocation17], %s869
        %s871 = sand.u32 %s426, 1
        %s872 = scalar_lea.vmem [#allocation18], %s871
        %p873 = pneg %p439
        %p874 = pneg %p436
        %p875 = scmp.lt.s32.totalorder %s47, 1
        %s876 = scalar_select %p875, %s47, 1
        %s877 = scalar_lea.vmem %s15, %s876
        %p878 = pneg %p465
        %p879 = pneg %p462
        %p880 = pneg %p491
        %p881 = pneg %p488
        %s882 = sand.u32 %s478, 1
        %s883 = scalar_lea.sflag [#allocation9], %s882
        %s884 = sand.u32 %s478, 1
        %s885 = smul.addr %s884, 64
        %s886 = scalar_lea.vmem [#allocation19], %s885
        %p887 = scmp.lt.s32.totalorder %s46, 1
        %s888 = scalar_select %p887, %s46, 1
        %s889 = smul.addr %s888, 8
        %s890 = smul.addr %s889, 8
        %s891 = scalar_lea.vmem %s0, %s890
        %p892 = scmp.lt.s32.totalorder %s47, 1
        %s893 = scalar_select %p892, %s47, 1
        %s894 = smul.addr %s893, 8
        %s895 = smul.addr %s894, 4
        %s896 = scalar_lea.vmem %s2, %s895
        %p897 = scmp.lt.s32.totalorder %s47, 1
        %s898 = scalar_select %p897, %s47, 1
        %s899 = scalar_lea.vmem %s3, %s898
        %p900 = scmp.lt.s32.totalorder %s47, 1
        %s901 = scalar_select %p900, %s47, 1
        %s902 = scalar_lea.vmem %s7, %s901
        %p903 = scmp.lt.s32.totalorder %s47, 1
        %s904 = scalar_select %p903, %s47, 1
        %s905 = scalar_lea.vmem %s9, %s904
        %p906 = scmp.lt.s32.totalorder %s47, 1
        %s907 = scalar_select %p906, %s47, 1
        %s908 = scalar_lea.vmem %s11, %s907
        %p909 = scmp.lt.s32.totalorder %s47, 1
        %s910 = scalar_select %p909, %s47, 1
        %s911 = smul.addr %s910, 16
        %s912 = smul.addr %s911, 4
        %s913 = scalar_lea.vmem %s12, %s912
        %p914 = scmp.lt.s32.totalorder %s47, 1
        %s915 = scalar_select %p914, %s47, 1
        %s916 = scalar_lea.vmem %s13, %s915
        %p917 = scmp.lt.s32.totalorder %s47, 1
        %s918 = scalar_select %p917, %s47, 1
        %s919 = scalar_lea.vmem %s15, %s918
        %p921 = scmp.eq.s32.totalorder %s47, 0
        // Predicated region
        $region113: #{tpu_custom_call.1} parent=83 // pred_check
          %p922 = pneg %p921
        $region114: #{tpu_custom_call.1} parent=83 // pred_check_branch
          %924 = sbr.rel (%p922) target = $region116
        $region115: #{tpu_custom_call.1} parent=83 // pred_region
          %v925 = vld [vmem:[%s891] sm:$0xff]
          %v926 = vld [vmem:[%s891 + $0x8] sm:$0xff]
          %v927 = vld [vmem:[%s891 + $0x10] sm:$0xff]
          %v928 = vld [vmem:[%s891 + $0x18] sm:$0xff]
          %v929 = vld [vmem:[%s891 + $0x20] sm:$0xff]
          %v930 = vld [vmem:[%s891 + $0x28] sm:$0xff]
          %v931 = vld [vmem:[%s891 + $0x30] sm:$0xff]
          %v932 = vld [vmem:[%s891 + $0x38] sm:$0xff]
          %vm933 = vcmask 523264
          %934 = vst.msk [vmem:[%s886] sm:$0xff] %vm933, %v925
          %935 = vst.msk [vmem:[%s886 + $0x8] sm:$0xff] %vm933, %v926
          %936 = vst.msk [vmem:[%s886 + $0x10] sm:$0xff] %vm933, %v927
          %937 = vst.msk [vmem:[%s886 + $0x18] sm:$0xff] %vm933, %v928
          %938 = vst.msk [vmem:[%s886 + $0x20] sm:$0xff] %vm933, %v929
          %939 = vst.msk [vmem:[%s886 + $0x28] sm:$0xff] %vm933, %v930
          %940 = vst.msk [vmem:[%s886 + $0x30] sm:$0xff] %vm933, %v931
          %941 = vst.msk [vmem:[%s886 + $0x38] sm:$0xff] %vm933, %v932
        $region116: #{tpu_custom_call.1} parent=83 // pred_fallthru
          _
        %v942 = vld [vmem:[%s886] sm:$0xff]
        %v943 = vld [vmem:[%s886 + $0x8] sm:$0xff]
        %v944 = vld [vmem:[%s886 + $0x10] sm:$0xff]
        %v945 = vld [vmem:[%s886 + $0x18] sm:$0xff]
        %v946 = vld [vmem:[%s886 + $0x20] sm:$0xff]
        %v947 = vld [vmem:[%s886 + $0x28] sm:$0xff]
        %v948 = vld [vmem:[%s886 + $0x30] sm:$0xff]
        %v949 = vld [vmem:[%s886 + $0x38] sm:$0xff]
        %v950 = vld [vmem:[%s720] sm:$0xff]
        %v951 = vld [vmem:[%s720 + $0x8] sm:$0xff]
        %v952 = vld [vmem:[%s720 + $0x10] sm:$0xff]
        %v953 = vld [vmem:[%s720 + $0x18] sm:$0xff]
        %v954 = vld [vmem:[%s720 + $0x20] sm:$0xff]
        %v955 = vld [vmem:[%s720 + $0x28] sm:$0xff]
        %v956 = vld [vmem:[%s720 + $0x30] sm:$0xff]
        %v957 = vld [vmem:[%s720 + $0x38] sm:$0xff]
        %v958 = vadd.f32 %v942, %v950
        %v959 = vadd.f32 %v943, %v951
        %v960 = vadd.f32 %v944, %v952
        %v961 = vadd.f32 %v945, %v953
        %v962 = vadd.f32 %v946, %v954
        %v963 = vadd.f32 %v947, %v955
        %v964 = vadd.f32 %v948, %v956
        %v965 = vadd.f32 %v949, %v957
        %v966 = vpack.c.bf16 %v959, %v958
        %v967 = vpack.c.bf16 %v961, %v960
        %v968 = vpack.c.bf16 %v963, %v962
        %v969 = vpack.c.bf16 %v965, %v964
        %v970 = vpack.c.bf16 %v943, %v942
        %v971 = vpack.c.bf16 %v945, %v944
        %v972 = vpack.c.bf16 %v947, %v946
        %v973 = vpack.c.bf16 %v949, %v948
        %v974 = vld [vmem:[%s896] sm:$0xf]
        %v975 = vld [vmem:[%s896 + $0x4] sm:$0xf]
        %v976 = vld [vmem:[%s896 + $0x8] sm:$0xf]
        %v977 = vld [vmem:[%s896 + $0xc] sm:$0xf]
        %v978 = vld [vmem:[%s896 + $0x10] sm:$0xf]
        %v979 = vld [vmem:[%s896 + $0x14] sm:$0xf]
        %v980 = vld [vmem:[%s896 + $0x18] sm:$0xf]
        %v981 = vld [vmem:[%s896 + $0x1c] sm:$0xf]
        %v982 = vld [vmem:[%s899] sm:$0x1]
        %v984 = vperm.slane %v982, 0
        %v994 = vunpack.c.l.b16 %v974
        %v995 = vunpack.c.l.b16 %v975
        %v996 = vunpack.c.l.b16 %v976
        %v997 = vunpack.c.l.b16 %v977
        %v998 = vunpack.c.l.b16 %v978
        %v999 = vunpack.c.l.b16 %v979
        %v1000 = vunpack.c.l.b16 %v980
        %v1001 = vunpack.c.l.b16 %v981
        %v1002 = vpack.c.b16 %v995, %v994
        %v1003 = vpack.c.b16 %v997, %v996
        %v1004 = vpack.c.b16 %v999, %v998
        %v1005 = vpack.c.b16 %v1001, %v1000
        %vm1010 = vcmask 523264
        %v1012 = vsel %vm1010, %v966, 0
        %v1015 = vsel %vm1010, %v967, 0
        %v1018 = vsel %vm1010, %v968, 0
        %v1021 = vsel %vm1010, %v969, 0
        %1023 = vmatpush.bf16.msra.mxu0 0
        %1024 = vmatpush.bf16.msra.mxu0 0
        %1025 = vmatpush.bf16.msra.mxu0 0
        %1026 = vmatpush.bf16.msra.mxu0 0
        %1027 = vmatpush.bf16.msra.mxu0 %v1005
        %1028 = vmatpush.bf16.msra.mxu0 %v1004
        %1029 = vmatpush.bf16.msra.mxu0 %v1003
        %1030 = vmatpush.bf16.msra.mxu0 %v1002
        %1031 = vmatmul.bf16.gmra.mxu0 %v1012
        %v1032 = vpop.f32.mrf.mxu0
        %v1033 = vadd.f32 %v984, %v1032
        %v1034 = vpop.f32.mrf.mxu0
        %v1035 = vadd.f32 %v984, %v1034
        %1036 = vmatmul.bf16.gmra.mxu0 %v1015
        %v1037 = vpop.f32.mrf.mxu0
        %v1038 = vadd.f32 %v984, %v1037
        %v1039 = vpop.f32.mrf.mxu0
        %v1040 = vadd.f32 %v984, %v1039
        %1041 = vmatmul.bf16.gmra.mxu0 %v1018
        %v1042 = vpop.f32.mrf.mxu0
        %v1043 = vadd.f32 %v984, %v1042
        %v1044 = vpop.f32.mrf.mxu0
        %v1045 = vadd.f32 %v984, %v1044
        %1046 = vmatmul.bf16.gmra.mxu0 %v1021
        %v1047 = vpop.f32.mrf.mxu0
        %v1048 = vadd.f32 %v984, %v1047
        %v1049 = vpop.f32.mrf.mxu0
        %v1050 = vadd.f32 %v984, %v1049
        %1051 = vdwg.mxu0
        %v1052 = vld [vmem:[%s730] sm:$0xf]
        %v1053 = vld [vmem:[%s730 + $0x4] sm:$0xf]
        %v1054 = vld [vmem:[%s730 + $0x8] sm:$0xf]
        %v1055 = vld [vmem:[%s730 + $0xc] sm:$0xf]
        %v1056 = vld [vmem:[%s730 + $0x10] sm:$0xf]
        %v1057 = vld [vmem:[%s730 + $0x14] sm:$0xf]
        %v1058 = vld [vmem:[%s730 + $0x18] sm:$0xf]
        %v1059 = vld [vmem:[%s730 + $0x1c] sm:$0xf]
        %v1060 = vld [vmem:[%s739] sm:$0x1]
        %v1062 = vperm.slane %v1060, 0
        %v1072 = vunpack.c.l.b16 %v1052
        %v1073 = vunpack.c.l.b16 %v1053
        %v1074 = vunpack.c.l.b16 %v1054
        %v1075 = vunpack.c.l.b16 %v1055
        %v1076 = vunpack.c.l.b16 %v1056
        %v1077 = vunpack.c.l.b16 %v1057
        %v1078 = vunpack.c.l.b16 %v1058
        %v1079 = vunpack.c.l.b16 %v1059
        %v1080 = vpack.c.b16 %v1073, %v1072
        %v1081 = vpack.c.b16 %v1075, %v1074
        %v1082 = vpack.c.b16 %v1077, %v1076
        %v1083 = vpack.c.b16 %v1079, %v1078
        %v1089 = vsel %vm1010, %v970, 0
        %v1092 = vsel %vm1010, %v971, 0
        %v1095 = vsel %vm1010, %v972, 0
        %v1098 = vsel %vm1010, %v973, 0
        %1100 = vmatpush.bf16.msra.mxu0 0
        %1101 = vmatpush.bf16.msra.mxu0 0
        %1102 = vmatpush.bf16.msra.mxu0 0
        %1103 = vmatpush.bf16.msra.mxu0 0
        %1104 = vmatpush.bf16.msra.mxu0 %v1083
        %1105 = vmatpush.bf16.msra.mxu0 %v1082
        %1106 = vmatpush.bf16.msra.mxu0 %v1081
        %1107 = vmatpush.bf16.msra.mxu0 %v1080
        %1108 = vmatmul.bf16.gmra.mxu0 %v1089
        %v1109 = vpop.f32.mrf.mxu0
        %v1110 = vadd.f32 %v1062, %v1109
        %v1111 = vpop.f32.mrf.mxu0
        %v1112 = vadd.f32 %v1062, %v1111
        %1113 = vmatmul.bf16.gmra.mxu0 %v1092
        %v1114 = vpop.f32.mrf.mxu0
        %v1115 = vadd.f32 %v1062, %v1114
        %v1116 = vpop.f32.mrf.mxu0
        %v1117 = vadd.f32 %v1062, %v1116
        %1118 = vmatmul.bf16.gmra.mxu0 %v1095
        %v1119 = vpop.f32.mrf.mxu0
        %v1120 = vadd.f32 %v1062, %v1119
        %v1121 = vpop.f32.mrf.mxu0
        %v1122 = vadd.f32 %v1062, %v1121
        %1123 = vmatmul.bf16.gmra.mxu0 %v1098
        %v1124 = vpop.f32.mrf.mxu0
        %v1125 = vadd.f32 %v1062, %v1124
        %v1126 = vpop.f32.mrf.mxu0
        %v1127 = vadd.f32 %v1062, %v1126
        %1128 = vdwg.mxu0
        %v1129 = vpack.c.bf16 %v1033, %v1033
        %v1130 = vpack.c.bf16 %v1035, %v1035
        %v1131 = vpack.c.bf16 %v1038, %v1038
        %v1132 = vpack.c.bf16 %v1040, %v1040
        %v1133 = vpack.c.bf16 %v1043, %v1043
        %v1134 = vpack.c.bf16 %v1045, %v1045
        %v1135 = vpack.c.bf16 %v1048, %v1048
        %v1136 = vpack.c.bf16 %v1050, %v1050
        %1145 = vrot.lane.b32.xlu0 %v1033, 64
        %v1146 = vpop.permute.xlu0 %1145
        %1147 = vrot.lane.b32.xlu0 %v1035, 64
        %v1148 = vpop.permute.xlu0 %1147
        %1149 = vrot.lane.b32.xlu0 %v1038, 64
        %v1150 = vpop.permute.xlu0 %1149
        %1151 = vrot.lane.b32.xlu0 %v1040, 64
        %v1152 = vpop.permute.xlu0 %1151
        %1153 = vrot.lane.b32.xlu0 %v1043, 64
        %v1154 = vpop.permute.xlu0 %1153
        %1155 = vrot.lane.b32.xlu0 %v1045, 64
        %v1156 = vpop.permute.xlu0 %1155
        %1157 = vrot.lane.b32.xlu0 %v1048, 64
        %v1158 = vpop.permute.xlu0 %1157
        %1159 = vrot.lane.b32.xlu0 %v1050, 64
        %v1160 = vpop.permute.xlu0 %1159
        %1169 = vxpose.xlu0.b32.start [1/16] %v1146, 128
        %1170 = vxpose.xlu0.b32.cont [2/16] %v1148, 128
        %1171 = vxpose.xlu0.b32.cont [3/16] %v1150, 128
        %1172 = vxpose.xlu0.b32.cont [4/16] %v1152, 128
        %1173 = vxpose.xlu0.b32.cont [5/16] %v1154, 128
        %1174 = vxpose.xlu0.b32.cont [6/16] %v1156, 128
        %1175 = vxpose.xlu0.b32.cont [7/16] %v1158, 128
        %1176 = vxpose.xlu0.b32.cont [8/16] %v1160, 128
        %1177 = vxpose.xlu0.b32.cont [9/16] 0.0, 128
        %1178 = vxpose.xlu0.b32.cont [10/16] 0.0, 128
        %1179 = vxpose.xlu0.b32.cont [11/16] 0.0, 128
        %1180 = vxpose.xlu0.b32.cont [12/16] 0.0, 128
        %1181 = vxpose.xlu0.b32.cont [13/16] 0.0, 128
        %1182 = vxpose.xlu0.b32.cont [14/16] 0.0, 128
        %1183 = vxpose.xlu0.b32.cont [15/16] 0.0, 128
        %1184 = vxpose.xlu0.b32.end [16/16] 0.0, 128
        %v1185 = vpop.trf.xlu0
        %v1186 = vpop.trf.xlu0
        %v1187 = vpop.trf.xlu0
        %v1188 = vpop.trf.xlu0
        %v1189 = vpop.trf.xlu0
        %v1190 = vpop.trf.xlu0
        %v1191 = vpop.trf.xlu0
        %v1192 = vpop.trf.xlu0
        %v1193 = vpop.trf.xlu0
        %v1194 = vpop.trf.xlu0
        %v1195 = vpop.trf.xlu0
        %v1196 = vpop.trf.xlu0
        %v1197 = vpop.trf.xlu0
        %v1198 = vpop.trf.xlu0
        %v1199 = vpop.trf.xlu0
        %v1200 = vpop.trf.xlu0
        %v1201 = vpack.c.bf16 %v1185, %v1185
        %v1202 = vpack.c.bf16 %v1186, %v1186
        %v1203 = vpack.c.bf16 %v1187, %v1187
        %v1204 = vpack.c.bf16 %v1188, %v1188
        %v1205 = vpack.c.bf16 %v1189, %v1189
        %v1206 = vpack.c.bf16 %v1190, %v1190
        %v1207 = vpack.c.bf16 %v1191, %v1191
        %v1208 = vpack.c.bf16 %v1192, %v1192
        %v1209 = vpack.c.bf16 %v1110, %v1110
        %v1210 = vpack.c.bf16 %v1112, %v1112
        %v1211 = vpack.c.bf16 %v1115, %v1115
        %v1212 = vpack.c.bf16 %v1117, %v1117
        %v1213 = vpack.c.bf16 %v1120, %v1120
        %v1214 = vpack.c.bf16 %v1122, %v1122
        %v1215 = vpack.c.bf16 %v1125, %v1125
        %v1216 = vpack.c.bf16 %v1127, %v1127
        %vm1217 = vcmask 125952
        %1218 = vst.msk [vmem:[#allocation2] sm:$0xf] %vm1217, %v1129
        %1219 = vst.msk [vmem:[#allocation2 + $0x4] sm:$0xf] %vm1217, %v1130
        %1220 = vst.msk [vmem:[#allocation2 + $0x8] sm:$0xf] %vm1217, %v1131
        %1221 = vst.msk [vmem:[#allocation2 + $0xc] sm:$0xf] %vm1217, %v1132
        %1222 = vst.msk [vmem:[#allocation2 + $0x10] sm:$0xf] %vm1217, %v1133
        %1223 = vst.msk [vmem:[#allocation2 + $0x14] sm:$0xf] %vm1217, %v1134
        %1224 = vst.msk [vmem:[#allocation2 + $0x18] sm:$0xf] %vm1217, %v1135
        %1225 = vst.msk [vmem:[#allocation2 + $0x1c] sm:$0xf] %vm1217, %v1136
        %vm1226 = vcmask 519168
        %1227 = vst.msk [vmem:[#allocation3] sm:$0xf] %vm1226, %v1201
        %1228 = vst.msk [vmem:[#allocation3 + $0x4] sm:$0xf] %vm1226, %v1202
        %1229 = vst.msk [vmem:[#allocation4] sm:$0xf] %vm1217, %v1209
        %1230 = vst.msk [vmem:[#allocation4 + $0x4] sm:$0xf] %vm1217, %v1210
        %1231 = vst.msk [vmem:[#allocation4 + $0x8] sm:$0xf] %vm1217, %v1211
        %1232 = vst.msk [vmem:[#allocation4 + $0xc] sm:$0xf] %vm1217, %v1212
        %1233 = vst.msk [vmem:[#allocation4 + $0x10] sm:$0xf] %vm1217, %v1213
        %1234 = vst.msk [vmem:[#allocation4 + $0x14] sm:$0xf] %vm1217, %v1214
        %1235 = vst.msk [vmem:[#allocation4 + $0x18] sm:$0xf] %vm1217, %v1215
        %1236 = vst.msk [vmem:[#allocation4 + $0x1c] sm:$0xf] %vm1217, %v1216
        %1245 = vrot.lane.b32.xlu0 %v1129, 112
        %v1246 = vpop.permute.xlu0 %1245
        %1247 = vrot.lane.b32.xlu0 %v1130, 112
        %v1248 = vpop.permute.xlu0 %1247
        %1249 = vrot.lane.b32.xlu0 %v1131, 112
        %v1250 = vpop.permute.xlu0 %1249
        %1251 = vrot.lane.b32.xlu0 %v1132, 112
        %v1252 = vpop.permute.xlu0 %1251
        %1253 = vrot.lane.b32.xlu0 %v1133, 112
        %v1254 = vpop.permute.xlu0 %1253
        %1255 = vrot.lane.b32.xlu0 %v1134, 112
        %v1256 = vpop.permute.xlu0 %1255
        %1257 = vrot.lane.b32.xlu0 %v1135, 112
        %v1258 = vpop.permute.xlu0 %1257
        %1259 = vrot.lane.b32.xlu0 %v1136, 112
        %v1260 = vpop.permute.xlu0 %1259
        %s1269 = scalar_lea.vmem [#allocation2], 32
        %1270 = vst.msk [vmem:[%s1269] sm:$0xf] %vm1217, %v1246
        %1271 = vst.msk [vmem:[%s1269 + $0x4] sm:$0xf] %vm1217, %v1248
        %1272 = vst.msk [vmem:[%s1269 + $0x8] sm:$0xf] %vm1217, %v1250
        %1273 = vst.msk [vmem:[%s1269 + $0xc] sm:$0xf] %vm1217, %v1252
        %1274 = vst.msk [vmem:[%s1269 + $0x10] sm:$0xf] %vm1217, %v1254
        %1275 = vst.msk [vmem:[%s1269 + $0x14] sm:$0xf] %vm1217, %v1256
        %1276 = vst.msk [vmem:[%s1269 + $0x18] sm:$0xf] %vm1217, %v1258
        %1277 = vst.msk [vmem:[%s1269 + $0x1c] sm:$0xf] %vm1217, %v1260
        %s1278 = scalar_lea.vmem [#allocation3], 8
        %1279 = vst.msk [vmem:[%s1278] sm:$0xf] %vm1226, %v1203
        %1280 = vst.msk [vmem:[%s1278 + $0x4] sm:$0xf] %vm1226, %v1204
        %1289 = vrot.lane.b32.xlu0 %v1209, 112
        %v1290 = vpop.permute.xlu0 %1289
        %1291 = vrot.lane.b32.xlu0 %v1210, 112
        %v1292 = vpop.permute.xlu0 %1291
        %1293 = vrot.lane.b32.xlu0 %v1211, 112
        %v1294 = vpop.permute.xlu0 %1293
        %1295 = vrot.lane.b32.xlu0 %v1212, 112
        %v1296 = vpop.permute.xlu0 %1295
        %1297 = vrot.lane.b32.xlu0 %v1213, 112
        %v1298 = vpop.permute.xlu0 %1297
        %1299 = vrot.lane.b32.xlu0 %v1214, 112
        %v1300 = vpop.permute.xlu0 %1299
        %1301 = vrot.lane.b32.xlu0 %v1215, 112
        %v1302 = vpop.permute.xlu0 %1301
        %1303 = vrot.lane.b32.xlu0 %v1216, 112
        %v1304 = vpop.permute.xlu0 %1303
        %s1313 = scalar_lea.vmem [#allocation4], 32
        %1314 = vst.msk [vmem:[%s1313] sm:$0xf] %vm1217, %v1290
        %1315 = vst.msk [vmem:[%s1313 + $0x4] sm:$0xf] %vm1217, %v1292
        %1316 = vst.msk [vmem:[%s1313 + $0x8] sm:$0xf] %vm1217, %v1294
        %1317 = vst.msk [vmem:[%s1313 + $0xc] sm:$0xf] %vm1217, %v1296
        %1318 = vst.msk [vmem:[%s1313 + $0x10] sm:$0xf] %vm1217, %v1298
        %1319 = vst.msk [vmem:[%s1313 + $0x14] sm:$0xf] %vm1217, %v1300
        %1320 = vst.msk [vmem:[%s1313 + $0x18] sm:$0xf] %vm1217, %v1302
        %1321 = vst.msk [vmem:[%s1313 + $0x1c] sm:$0xf] %vm1217, %v1304
        %1322 = vrot.lane.b32.xlu0 %v1129, 96
        %v1323 = vpop.permute.xlu0 %1322
        %1324 = vrot.lane.b32.xlu0 %v1130, 96
        %v1325 = vpop.permute.xlu0 %1324
        %1326 = vrot.lane.b32.xlu0 %v1131, 96
        %v1327 = vpop.permute.xlu0 %1326
        %1328 = vrot.lane.b32.xlu0 %v1132, 96
        %v1329 = vpop.permute.xlu0 %1328
        %1330 = vrot.lane.b32.xlu0 %v1133, 96
        %v1331 = vpop.permute.xlu0 %1330
        %1332 = vrot.lane.b32.xlu0 %v1134, 96
        %v1333 = vpop.permute.xlu0 %1332
        %1334 = vrot.lane.b32.xlu0 %v1135, 96
        %v1335 = vpop.permute.xlu0 %1334
        %1336 = vrot.lane.b32.xlu0 %v1136, 96
        %v1337 = vpop.permute.xlu0 %1336
        %s1346 = scalar_lea.vmem [#allocation2], 64
        %1347 = vst.msk [vmem:[%s1346] sm:$0xf] %vm1217, %v1323
        %1348 = vst.msk [vmem:[%s1346 + $0x4] sm:$0xf] %vm1217, %v1325
        %1349 = vst.msk [vmem:[%s1346 + $0x8] sm:$0xf] %vm1217, %v1327
        %1350 = vst.msk [vmem:[%s1346 + $0xc] sm:$0xf] %vm1217, %v1329
        %1351 = vst.msk [vmem:[%s1346 + $0x10] sm:$0xf] %vm1217, %v1331
        %1352 = vst.msk [vmem:[%s1346 + $0x14] sm:$0xf] %vm1217, %v1333
        %1353 = vst.msk [vmem:[%s1346 + $0x18] sm:$0xf] %vm1217, %v1335
        %1354 = vst.msk [vmem:[%s1346 + $0x1c] sm:$0xf] %vm1217, %v1337
        %s1355 = scalar_lea.vmem [#allocation3], 16
        %1356 = vst.msk [vmem:[%s1355] sm:$0xf] %vm1226, %v1205
        %1357 = vst.msk [vmem:[%s1355 + $0x4] sm:$0xf] %vm1226, %v1206
        %1358 = vrot.lane.b32.xlu0 %v1209, 96
        %v1359 = vpop.permute.xlu0 %1358
        %1360 = vrot.lane.b32.xlu0 %v1210, 96
        %v1361 = vpop.permute.xlu0 %1360
        %1362 = vrot.lane.b32.xlu0 %v1211, 96
        %v1363 = vpop.permute.xlu0 %1362
        %1364 = vrot.lane.b32.xlu0 %v1212, 96
        %v1365 = vpop.permute.xlu0 %1364
        %1366 = vrot.lane.b32.xlu0 %v1213, 96
        %v1367 = vpop.permute.xlu0 %1366
        %1368 = vrot.lane.b32.xlu0 %v1214, 96
        %v1369 = vpop.permute.xlu0 %1368
        %1370 = vrot.lane.b32.xlu0 %v1215, 96
        %v1371 = vpop.permute.xlu0 %1370
        %1372 = vrot.lane.b32.xlu0 %v1216, 96
        %v1373 = vpop.permute.xlu0 %1372
        %s1382 = scalar_lea.vmem [#allocation4], 64
        %1383 = vst.msk [vmem:[%s1382] sm:$0xf] %vm1217, %v1359
        %1384 = vst.msk [vmem:[%s1382 + $0x4] sm:$0xf] %vm1217, %v1361
        %1385 = vst.msk [vmem:[%s1382 + $0x8] sm:$0xf] %vm1217, %v1363
        %1386 = vst.msk [vmem:[%s1382 + $0xc] sm:$0xf] %vm1217, %v1365
        %1387 = vst.msk [vmem:[%s1382 + $0x10] sm:$0xf] %vm1217, %v1367
        %1388 = vst.msk [vmem:[%s1382 + $0x14] sm:$0xf] %vm1217, %v1369
        %1389 = vst.msk [vmem:[%s1382 + $0x18] sm:$0xf] %vm1217, %v1371
        %1390 = vst.msk [vmem:[%s1382 + $0x1c] sm:$0xf] %vm1217, %v1373
        %1391 = vrot.lane.b32.xlu0 %v1129, 80
        %v1392 = vpop.permute.xlu0 %1391
        %1393 = vrot.lane.b32.xlu0 %v1130, 80
        %v1394 = vpop.permute.xlu0 %1393
        %1395 = vrot.lane.b32.xlu0 %v1131, 80
        %v1396 = vpop.permute.xlu0 %1395
        %1397 = vrot.lane.b32.xlu0 %v1132, 80
        %v1398 = vpop.permute.xlu0 %1397
        %1399 = vrot.lane.b32.xlu0 %v1133, 80
        %v1400 = vpop.permute.xlu0 %1399
        %1401 = vrot.lane.b32.xlu0 %v1134, 80
        %v1402 = vpop.permute.xlu0 %1401
        %1403 = vrot.lane.b32.xlu0 %v1135, 80
        %v1404 = vpop.permute.xlu0 %1403
        %1405 = vrot.lane.b32.xlu0 %v1136, 80
        %v1406 = vpop.permute.xlu0 %1405
        %s1415 = scalar_lea.vmem [#allocation2], 96
        %1416 = vst.msk [vmem:[%s1415] sm:$0xf] %vm1217, %v1392
        %1417 = vst.msk [vmem:[%s1415 + $0x4] sm:$0xf] %vm1217, %v1394
        %1418 = vst.msk [vmem:[%s1415 + $0x8] sm:$0xf] %vm1217, %v1396
        %1419 = vst.msk [vmem:[%s1415 + $0xc] sm:$0xf] %vm1217, %v1398
        %1420 = vst.msk [vmem:[%s1415 + $0x10] sm:$0xf] %vm1217, %v1400
        %1421 = vst.msk [vmem:[%s1415 + $0x14] sm:$0xf] %vm1217, %v1402
        %1422 = vst.msk [vmem:[%s1415 + $0x18] sm:$0xf] %vm1217, %v1404
        %1423 = vst.msk [vmem:[%s1415 + $0x1c] sm:$0xf] %vm1217, %v1406
        %s1424 = scalar_lea.vmem [#allocation3], 24
        %1425 = vst.msk [vmem:[%s1424] sm:$0xf] %vm1226, %v1207
        %1426 = vst.msk [vmem:[%s1424 + $0x4] sm:$0xf] %vm1226, %v1208
        %1427 = vrot.lane.b32.xlu0 %v1209, 80
        %v1428 = vpop.permute.xlu0 %1427
        %1429 = vrot.lane.b32.xlu0 %v1210, 80
        %v1430 = vpop.permute.xlu0 %1429
        %1431 = vrot.lane.b32.xlu0 %v1211, 80
        %v1432 = vpop.permute.xlu0 %1431
        %1433 = vrot.lane.b32.xlu0 %v1212, 80
        %v1434 = vpop.permute.xlu0 %1433
        %1435 = vrot.lane.b32.xlu0 %v1213, 80
        %v1436 = vpop.permute.xlu0 %1435
        %1437 = vrot.lane.b32.xlu0 %v1214, 80
        %v1438 = vpop.permute.xlu0 %1437
        %1439 = vrot.lane.b32.xlu0 %v1215, 80
        %v1440 = vpop.permute.xlu0 %1439
        %1441 = vrot.lane.b32.xlu0 %v1216, 80
        %v1442 = vpop.permute.xlu0 %1441
        %s1451 = scalar_lea.vmem [#allocation4], 96
        %1452 = vst.msk [vmem:[%s1451] sm:$0xf] %vm1217, %v1428
        %1453 = vst.msk [vmem:[%s1451 + $0x4] sm:$0xf] %vm1217, %v1430
        %1454 = vst.msk [vmem:[%s1451 + $0x8] sm:$0xf] %vm1217, %v1432
        %1455 = vst.msk [vmem:[%s1451 + $0xc] sm:$0xf] %vm1217, %v1434
        %1456 = vst.msk [vmem:[%s1451 + $0x10] sm:$0xf] %vm1217, %v1436
        %1457 = vst.msk [vmem:[%s1451 + $0x14] sm:$0xf] %vm1217, %v1438
        %1458 = vst.msk [vmem:[%s1451 + $0x18] sm:$0xf] %vm1217, %v1440
        %1459 = vst.msk [vmem:[%s1451 + $0x1c] sm:$0xf] %vm1217, %v1442
        loop: start=0, step=1, limit=4
        $region117: #{tpu_custom_call.1} parent=83 // loop_pre_header
          _
        $region118: #{tpu_custom_call.1} parent=83 // loop_header
          %s1461 = sphi 0, %s1465
          %p1462 = scmp.ge.s32.totalorder %s1461, 4
        $region119: #{tpu_custom_call.1} parent=83 // loop_header_branch
          %1464 = sbr.rel (%p1462) target = $region123
        $region120: #{tpu_custom_call.1} parent=83 // loop_body
          %s1466 = smul.u32 %s1461, 8
          %s1467 = smul.addr %s1466, 4
          %s1468 = scalar_lea.vmem [#allocation2], %s1467
          %v1469 = vld [vmem:[%s1468] sm:$0xf]
          %v1470 = vld [vmem:[%s1468 + $0x4] sm:$0xf]
          %v1471 = vld [vmem:[%s1468 + $0x8] sm:$0xf]
          %v1472 = vld [vmem:[%s1468 + $0xc] sm:$0xf]
          %v1473 = vld [vmem:[%s1468 + $0x10] sm:$0xf]
          %v1474 = vld [vmem:[%s1468 + $0x14] sm:$0xf]
          %v1475 = vld [vmem:[%s1468 + $0x18] sm:$0xf]
          %v1476 = vld [vmem:[%s1468 + $0x1c] sm:$0xf]
          %s1477 = smul.u32 %s1461, 2
          %s1478 = smul.addr %s1477, 4
          %s1479 = scalar_lea.vmem [#allocation3], %s1478
          %v1480 = vld [vmem:[%s1479] sm:$0xf]
          %v1481 = vld [vmem:[%s1479 + $0x4] sm:$0xf]
          %v1490 = vunpack.c.l.b16 %v1469
          %v1491 = vunpack.c.l.b16 %v1470
          %v1492 = vunpack.c.l.b16 %v1471
          %v1493 = vunpack.c.l.b16 %v1472
          %v1494 = vunpack.c.l.b16 %v1473
          %v1495 = vunpack.c.l.b16 %v1474
          %v1496 = vunpack.c.l.b16 %v1475
          %v1497 = vunpack.c.l.b16 %v1476
          %v1498 = vpack.c.b16 %v1491, %v1490
          %v1499 = vpack.c.b16 %v1493, %v1492
          %v1500 = vpack.c.b16 %v1495, %v1494
          %v1501 = vpack.c.b16 %v1497, %v1496
          %v1504 = vunpack.c.l.b16 %v1480
          %v1505 = vunpack.c.l.b16 %v1481
          %v1506 = vpack.c.b16 %v1505, %v1504
          %vm1508 = vcmask 130048
          %v1510 = vsel %vm1508, %v1498, 0
          %v1513 = vsel %vm1508, %v1499, 0
          %v1516 = vsel %vm1508, %v1500, 0
          %v1519 = vsel %vm1508, %v1501, 0
          %1521 = vmatpush.bf16.msra.mxu0 0
          %1522 = vmatpush.bf16.msra.mxu0 0
          %1523 = vmatpush.bf16.msra.mxu0 0
          %1524 = vmatpush.bf16.msra.mxu0 0
          %1525 = vmatpush.bf16.msra.mxu0 0
          %1526 = vmatpush.bf16.msra.mxu0 0
          %1527 = vmatpush.bf16.msra.mxu0 0
          %1528 = vmatpush.bf16.msra.mxu0 %v1506
          %1529 = vmatmul.bf16.gmra.mxu0 %v1510
          %v1530 = vpop.f32.mrf.mxu0
          %v1531 = vadd.f32 0.0, %v1530
          %v1532 = vpop.f32.mrf.mxu0
          %v1533 = vadd.f32 0.0, %v1532
          %1534 = vmatmul.bf16.gmra.mxu0 %v1513
          %v1535 = vpop.f32.mrf.mxu0
          %v1536 = vadd.f32 0.0, %v1535
          %v1537 = vpop.f32.mrf.mxu0
          %v1538 = vadd.f32 0.0, %v1537
          %1539 = vmatmul.bf16.gmra.mxu0 %v1516
          %v1540 = vpop.f32.mrf.mxu0
          %v1541 = vadd.f32 0.0, %v1540
          %v1542 = vpop.f32.mrf.mxu0
          %v1543 = vadd.f32 0.0, %v1542
          %1544 = vmatmul.bf16.gmra.mxu0 %v1519
          %v1545 = vpop.f32.mrf.mxu0
          %v1546 = vadd.f32 0.0, %v1545
          %v1547 = vpop.f32.mrf.mxu0
          %v1548 = vadd.f32 0.0, %v1547
          %1549 = vdwg.mxu0
          %v1550 = vsel %vm1010, %v1531, -inf
          %1551 = vmax.xlane.f32.xlu0 %v1550
          %v1552 = vpop.xlane.xlu0 %1551
          %v1553 = vsel %vm1010, %v1533, -inf
          %1554 = vmax.xlane.f32.xlu0 %v1553
          %v1555 = vpop.xlane.xlu0 %1554
          %v1556 = vsel %vm1010, %v1536, -inf
          %1557 = vmax.xlane.f32.xlu0 %v1556
          %v1558 = vpop.xlane.xlu0 %1557
          %v1559 = vsel %vm1010, %v1538, -inf
          %1560 = vmax.xlane.f32.xlu0 %v1559
          %v1561 = vpop.xlane.xlu0 %1560
          %v1562 = vsel %vm1010, %v1541, -inf
          %1563 = vmax.xlane.f32.xlu0 %v1562
          %v1564 = vpop.xlane.xlu0 %1563
          %v1565 = vsel %vm1010, %v1543, -inf
          %1566 = vmax.xlane.f32.xlu0 %v1565
          %v1567 = vpop.xlane.xlu0 %1566
          %v1568 = vsel %vm1010, %v1546, -inf
          %1569 = vmax.xlane.f32.xlu0 %v1568
          %v1570 = vpop.xlane.xlu0 %1569
          %v1571 = vsel %vm1010, %v1548, -inf
          %1572 = vmax.xlane.f32.xlu0 %v1571
          %v1573 = vpop.xlane.xlu0 %1572
          %v1574 = vsub.f32 %v1531, %v1552
          %v1575 = vsub.f32 %v1533, %v1555
          %v1576 = vsub.f32 %v1536, %v1558
          %v1577 = vsub.f32 %v1538, %v1561
          %v1578 = vsub.f32 %v1541, %v1564
          %v1579 = vsub.f32 %v1543, %v1567
          %v1580 = vsub.f32 %v1546, %v1570
          %v1581 = vsub.f32 %v1548, %v1573
          %v1582 = vmul.f32 %v1574, 1.442695
          %v1583 = vpow.pop %v1582
          %v1584 = vmul.f32 %v1575, 1.442695
          %v1585 = vpow.pop %v1584
          %v1586 = vmul.f32 %v1576, 1.442695
          %v1587 = vpow.pop %v1586
          %v1588 = vmul.f32 %v1577, 1.442695
          %v1589 = vpow.pop %v1588
          %v1590 = vmul.f32 %v1578, 1.442695
          %v1591 = vpow.pop %v1590
          %v1592 = vmul.f32 %v1579, 1.442695
          %v1593 = vpow.pop %v1592
          %v1594 = vmul.f32 %v1580, 1.442695
          %v1595 = vpow.pop %v1594
          %v1596 = vmul.f32 %v1581, 1.442695
          %v1597 = vpow.pop %v1596
          %v1598 = vsel %vm1010, %v1583, 0.0
          %1599 = vadd.xlane.f32.xlu0 %v1598
          %v1600 = vpop.xlane.xlu0 %1599
          %v1601 = vsel %vm1010, %v1585, 0.0
          %1602 = vadd.xlane.f32.xlu0 %v1601
          %v1603 = vpop.xlane.xlu0 %1602
          %v1604 = vsel %vm1010, %v1587, 0.0
          %1605 = vadd.xlane.f32.xlu0 %v1604
          %v1606 = vpop.xlane.xlu0 %1605
          %v1607 = vsel %vm1010, %v1589, 0.0
          %1608 = vadd.xlane.f32.xlu0 %v1607
          %v1609 = vpop.xlane.xlu0 %1608
          %v1610 = vsel %vm1010, %v1591, 0.0
          %1611 = vadd.xlane.f32.xlu0 %v1610
          %v1612 = vpop.xlane.xlu0 %1611
          %v1613 = vsel %vm1010, %v1593, 0.0
          %1614 = vadd.xlane.f32.xlu0 %v1613
          %v1615 = vpop.xlane.xlu0 %1614
          %v1616 = vsel %vm1010, %v1595, 0.0
          %1617 = vadd.xlane.f32.xlu0 %v1616
          %v1618 = vpop.xlane.xlu0 %1617
          %v1619 = vsel %vm1010, %v1597, 0.0
          %1620 = vadd.xlane.f32.xlu0 %v1619
          %v1621 = vpop.xlane.xlu0 %1620
          %v1622 = vrcp.pop %v1600
          %v1623 = vrcp.pop %v1603
          %v1624 = vrcp.pop %v1606
          %v1625 = vrcp.pop %v1609
          %v1626 = vrcp.pop %v1612
          %v1627 = vrcp.pop %v1615
          %v1628 = vrcp.pop %v1618
          %v1629 = vrcp.pop %v1621
          %v1630 = vmul.f32 %v1583, %v1622
          %v1631 = vmul.f32 %v1585, %v1623
          %v1632 = vmul.f32 %v1587, %v1624
          %v1633 = vmul.f32 %v1589, %v1625
          %v1634 = vmul.f32 %v1591, %v1626
          %v1635 = vmul.f32 %v1593, %v1627
          %v1636 = vmul.f32 %v1595, %v1628
          %v1637 = vmul.f32 %v1597, %v1629
          %v1638 = vpack.c.bf16 %v1631, %v1630
          %v1639 = vpack.c.bf16 %v1633, %v1632
          %v1640 = vpack.c.bf16 %v1635, %v1634
          %v1641 = vpack.c.bf16 %v1637, %v1636
          %s1642 = smul.addr %s1466, 4
          %s1643 = scalar_lea.vmem [#allocation4], %s1642
          %v1644 = vld [vmem:[%s1643] sm:$0xf]
          %v1645 = vld [vmem:[%s1643 + $0x4] sm:$0xf]
          %v1646 = vld [vmem:[%s1643 + $0x8] sm:$0xf]
          %v1647 = vld [vmem:[%s1643 + $0xc] sm:$0xf]
          %v1648 = vld [vmem:[%s1643 + $0x10] sm:$0xf]
          %v1649 = vld [vmem:[%s1643 + $0x14] sm:$0xf]
          %v1650 = vld [vmem:[%s1643 + $0x18] sm:$0xf]
          %v1651 = vld [vmem:[%s1643 + $0x1c] sm:$0xf]
          %v1660 = vunpack.c.l.b16 %v1644
          %v1661 = vunpack.c.l.b16 %v1645
          %v1662 = vunpack.c.l.b16 %v1646
          %v1663 = vunpack.c.l.b16 %v1647
          %v1664 = vunpack.c.l.b16 %v1648
          %v1665 = vunpack.c.l.b16 %v1649
          %v1666 = vunpack.c.l.b16 %v1650
          %v1667 = vunpack.c.l.b16 %v1651
          %v1668 = vpack.c.b16 %v1661, %v1660
          %v1669 = vpack.c.b16 %v1663, %v1662
          %v1670 = vpack.c.b16 %v1665, %v1664
          %v1671 = vpack.c.b16 %v1667, %v1666
          %v1677 = vsel %vm1010, %v1638, 0
          %v1680 = vsel %vm1010, %v1639, 0
          %v1683 = vsel %vm1010, %v1640, 0
          %v1686 = vsel %vm1010, %v1641, 0
          %1688 = vmatpush.bf16.msra.mxu0 0
          %1689 = vmatpush.bf16.msra.mxu0 0
          %1690 = vmatpush.bf16.msra.mxu0 0
          %1691 = vmatpush.bf16.msra.mxu0 0
          %1692 = vmatpush.bf16.msra.mxu0 %v1671
          %1693 = vmatpush.bf16.msra.mxu0 %v1670
          %1694 = vmatpush.bf16.msra.mxu0 %v1669
          %1695 = vmatpush.bf16.msra.mxu0 %v1668
          %1696 = vmatmul.bf16.gmra.mxu0 %v1677
          %v1697 = vpop.f32.mrf.mxu0
          %v1698 = vadd.f32 0.0, %v1697
          %v1699 = vpop.f32.mrf.mxu0
          %v1700 = vadd.f32 0.0, %v1699
          %1701 = vmatmul.bf16.gmra.mxu0 %v1680
          %v1702 = vpop.f32.mrf.mxu0
          %v1703 = vadd.f32 0.0, %v1702
          %v1704 = vpop.f32.mrf.mxu0
          %v1705 = vadd.f32 0.0, %v1704
          %1706 = vmatmul.bf16.gmra.mxu0 %v1683
          %v1707 = vpop.f32.mrf.mxu0
          %v1708 = vadd.f32 0.0, %v1707
          %v1709 = vpop.f32.mrf.mxu0
          %v1710 = vadd.f32 0.0, %v1709
          %1711 = vmatmul.bf16.gmra.mxu0 %v1686
          %v1712 = vpop.f32.mrf.mxu0
          %v1713 = vadd.f32 0.0, %v1712
          %v1714 = vpop.f32.mrf.mxu0
          %v1715 = vadd.f32 0.0, %v1714
          %1716 = vdwg.mxu0
          %v1717 = vpack.c.bf16 %v1698, %v1698
          %v1718 = vpack.c.bf16 %v1700, %v1700
          %v1719 = vpack.c.bf16 %v1703, %v1703
          %v1720 = vpack.c.bf16 %v1705, %v1705
          %v1721 = vpack.c.bf16 %v1708, %v1708
          %v1722 = vpack.c.bf16 %v1710, %v1710
          %v1723 = vpack.c.bf16 %v1713, %v1713
          %v1724 = vpack.c.bf16 %v1715, %v1715
          %s1725 = smul.addr %s1466, 4
          %s1726 = scalar_lea.vmem [#allocation5], %s1725
          %1727 = vst.msk [vmem:[%s1726] sm:$0xf] %vm1217, %v1717
          %1728 = vst.msk [vmem:[%s1726 + $0x4] sm:$0xf] %vm1217, %v1718
          %1729 = vst.msk [vmem:[%s1726 + $0x8] sm:$0xf] %vm1217, %v1719
          %1730 = vst.msk [vmem:[%s1726 + $0xc] sm:$0xf] %vm1217, %v1720
          %1731 = vst.msk [vmem:[%s1726 + $0x10] sm:$0xf] %vm1217, %v1721
          %1732 = vst.msk [vmem:[%s1726 + $0x14] sm:$0xf] %vm1217, %v1722
          %1733 = vst.msk [vmem:[%s1726 + $0x18] sm:$0xf] %vm1217, %v1723
          %1734 = vst.msk [vmem:[%s1726 + $0x1c] sm:$0xf] %vm1217, %v1724
        $region121: #{tpu_custom_call.1} parent=83 // loop_footer
          %s1465 = sadd.s32 1, %s1461
        $region122: #{tpu_custom_call.1} parent=83 // loop_footer_branch
          %1460 = sbr.rel target = $region118
        $region123: #{tpu_custom_call.1} parent=83 // loop_exit
          _
        %v1735 = vld [vmem:[#allocation5] sm:$0xf]
        %v1736 = vld [vmem:[#allocation5 + $0x4] sm:$0xf]
        %v1737 = vld [vmem:[#allocation5 + $0x8] sm:$0xf]
        %v1738 = vld [vmem:[#allocation5 + $0xc] sm:$0xf]
        %v1739 = vld [vmem:[#allocation5 + $0x10] sm:$0xf]
        %v1740 = vld [vmem:[#allocation5 + $0x14] sm:$0xf]
        %v1741 = vld [vmem:[#allocation5 + $0x18] sm:$0xf]
        %v1742 = vld [vmem:[#allocation5 + $0x1c] sm:$0xf]
        %1743 = vst.msk [vmem:[#allocation6] sm:$0xf] %vm1217, %v1735
        %1744 = vst.msk [vmem:[#allocation6 + $0x4] sm:$0xf] %vm1217, %v1736
        %1745 = vst.msk [vmem:[#allocation6 + $0x8] sm:$0xf] %vm1217, %v1737
        %1746 = vst.msk [vmem:[#allocation6 + $0xc] sm:$0xf] %vm1217, %v1738
        %1747 = vst.msk [vmem:[#allocation6 + $0x10] sm:$0xf] %vm1217, %v1739
        %1748 = vst.msk [vmem:[#allocation6 + $0x14] sm:$0xf] %vm1217, %v1740
        %1749 = vst.msk [vmem:[#allocation6 + $0x18] sm:$0xf] %vm1217, %v1741
        %1750 = vst.msk [vmem:[#allocation6 + $0x1c] sm:$0xf] %vm1217, %v1742
        %s1751 = scalar_lea.vmem [#allocation5], 32
        %v1752 = vld [vmem:[%s1751] sm:$0xf]
        %v1753 = vld [vmem:[%s1751 + $0x4] sm:$0xf]
        %v1754 = vld [vmem:[%s1751 + $0x8] sm:$0xf]
        %v1755 = vld [vmem:[%s1751 + $0xc] sm:$0xf]
        %v1756 = vld [vmem:[%s1751 + $0x10] sm:$0xf]
        %v1757 = vld [vmem:[%s1751 + $0x14] sm:$0xf]
        %v1758 = vld [vmem:[%s1751 + $0x18] sm:$0xf]
        %v1759 = vld [vmem:[%s1751 + $0x1c] sm:$0xf]
        %1768 = vrot.lane.b32.xlu0 %v1752, 16
        %v1769 = vpop.permute.xlu0 %1768
        %1770 = vrot.lane.b32.xlu0 %v1753, 16
        %v1771 = vpop.permute.xlu0 %1770
        %1772 = vrot.lane.b32.xlu0 %v1754, 16
        %v1773 = vpop.permute.xlu0 %1772
        %1774 = vrot.lane.b32.xlu0 %v1755, 16
        %v1775 = vpop.permute.xlu0 %1774
        %1776 = vrot.lane.b32.xlu0 %v1756, 16
        %v1777 = vpop.permute.xlu0 %1776
        %1778 = vrot.lane.b32.xlu0 %v1757, 16
        %v1779 = vpop.permute.xlu0 %1778
        %1780 = vrot.lane.b32.xlu0 %v1758, 16
        %v1781 = vpop.permute.xlu0 %1780
        %1782 = vrot.lane.b32.xlu0 %v1759, 16
        %v1783 = vpop.permute.xlu0 %1782
        %vm1792 = vcmask 257152
        %1793 = vst.msk [vmem:[#allocation6] sm:$0xf] %vm1792, %v1769
        %1794 = vst.msk [vmem:[#allocation6 + $0x4] sm:$0xf] %vm1792, %v1771
        %1795 = vst.msk [vmem:[#allocation6 + $0x8] sm:$0xf] %vm1792, %v1773
        %1796 = vst.msk [vmem:[#allocation6 + $0xc] sm:$0xf] %vm1792, %v1775
        %1797 = vst.msk [vmem:[#allocation6 + $0x10] sm:$0xf] %vm1792, %v1777
        %1798 = vst.msk [vmem:[#allocation6 + $0x14] sm:$0xf] %vm1792, %v1779
        %1799 = vst.msk [vmem:[#allocation6 + $0x18] sm:$0xf] %vm1792, %v1781
        %1800 = vst.msk [vmem:[#allocation6 + $0x1c] sm:$0xf] %vm1792, %v1783
        %s1801 = scalar_lea.vmem [#allocation5], 64
        %v1802 = vld [vmem:[%s1801] sm:$0xf]
        %v1803 = vld [vmem:[%s1801 + $0x4] sm:$0xf]
        %v1804 = vld [vmem:[%s1801 + $0x8] sm:$0xf]
        %v1805 = vld [vmem:[%s1801 + $0xc] sm:$0xf]
        %v1806 = vld [vmem:[%s1801 + $0x10] sm:$0xf]
        %v1807 = vld [vmem:[%s1801 + $0x14] sm:$0xf]
        %v1808 = vld [vmem:[%s1801 + $0x18] sm:$0xf]
        %v1809 = vld [vmem:[%s1801 + $0x1c] sm:$0xf]
        %1818 = vrot.lane.b32.xlu0 %v1802, 32
        %v1819 = vpop.permute.xlu0 %1818
        %1820 = vrot.lane.b32.xlu0 %v1803, 32
        %v1821 = vpop.permute.xlu0 %1820
        %1822 = vrot.lane.b32.xlu0 %v1804, 32
        %v1823 = vpop.permute.xlu0 %1822
        %1824 = vrot.lane.b32.xlu0 %v1805, 32
        %v1825 = vpop.permute.xlu0 %1824
        %1826 = vrot.lane.b32.xlu0 %v1806, 32
        %v1827 = vpop.permute.xlu0 %1826
        %1828 = vrot.lane.b32.xlu0 %v1807, 32
        %v1829 = vpop.permute.xlu0 %1828
        %1830 = vrot.lane.b32.xlu0 %v1808, 32
        %v1831 = vpop.permute.xlu0 %1830
        %1832 = vrot.lane.b32.xlu0 %v1809, 32
        %v1833 = vpop.permute.xlu0 %1832
        %vm1842 = vcmask 388352
        %1843 = vst.msk [vmem:[#allocation6] sm:$0xf] %vm1842, %v1819
        %1844 = vst.msk [vmem:[#allocation6 + $0x4] sm:$0xf] %vm1842, %v1821
        %1845 = vst.msk [vmem:[#allocation6 + $0x8] sm:$0xf] %vm1842, %v1823
        %1846 = vst.msk [vmem:[#allocation6 + $0xc] sm:$0xf] %vm1842, %v1825
        %1847 = vst.msk [vmem:[#allocation6 + $0x10] sm:$0xf] %vm1842, %v1827
        %1848 = vst.msk [vmem:[#allocation6 + $0x14] sm:$0xf] %vm1842, %v1829
        %1849 = vst.msk [vmem:[#allocation6 + $0x18] sm:$0xf] %vm1842, %v1831
        %1850 = vst.msk [vmem:[#allocation6 + $0x1c] sm:$0xf] %vm1842, %v1833
        %s1851 = scalar_lea.vmem [#allocation5], 96
        %v1852 = vld [vmem:[%s1851] sm:$0xf]
        %v1853 = vld [vmem:[%s1851 + $0x4] sm:$0xf]
        %v1854 = vld [vmem:[%s1851 + $0x8] sm:$0xf]
        %v1855 = vld [vmem:[%s1851 + $0xc] sm:$0xf]
        %v1856 = vld [vmem:[%s1851 + $0x10] sm:$0xf]
        %v1857 = vld [vmem:[%s1851 + $0x14] sm:$0xf]
        %v1858 = vld [vmem:[%s1851 + $0x18] sm:$0xf]
        %v1859 = vld [vmem:[%s1851 + $0x1c] sm:$0xf]
        %1868 = vrot.lane.b32.xlu0 %v1852, 48
        %v1869 = vpop.permute.xlu0 %1868
        %1870 = vrot.lane.b32.xlu0 %v1853, 48
        %v1871 = vpop.permute.xlu0 %1870
        %1872 = vrot.lane.b32.xlu0 %v1854, 48
        %v1873 = vpop.permute.xlu0 %1872
        %1874 = vrot.lane.b32.xlu0 %v1855, 48
        %v1875 = vpop.permute.xlu0 %1874
        %1876 = vrot.lane.b32.xlu0 %v1856, 48
        %v1877 = vpop.permute.xlu0 %1876
        %1878 = vrot.lane.b32.xlu0 %v1857, 48
        %v1879 = vpop.permute.xlu0 %1878
        %1880 = vrot.lane.b32.xlu0 %v1858, 48
        %v1881 = vpop.permute.xlu0 %1880
        %1882 = vrot.lane.b32.xlu0 %v1859, 48
        %v1883 = vpop.permute.xlu0 %1882
        %vm1892 = vcmask 519552
        %1893 = vst.msk [vmem:[#allocation6] sm:$0xf] %vm1892, %v1869
        %1894 = vst.msk [vmem:[#allocation6 + $0x4] sm:$0xf] %vm1892, %v1871
        %1895 = vst.msk [vmem:[#allocation6 + $0x8] sm:$0xf] %vm1892, %v1873
        %1896 = vst.msk [vmem:[#allocation6 + $0xc] sm:$0xf] %vm1892, %v1875
        %1897 = vst.msk [vmem:[#allocation6 + $0x10] sm:$0xf] %vm1892, %v1877
        %1898 = vst.msk [vmem:[#allocation6 + $0x14] sm:$0xf] %vm1892, %v1879
        %1899 = vst.msk [vmem:[#allocation6 + $0x18] sm:$0xf] %vm1892, %v1881
        %1900 = vst.msk [vmem:[#allocation6 + $0x1c] sm:$0xf] %vm1892, %v1883
        %v1901 = vld [vmem:[#allocation6] sm:$0xf]
        %v1902 = vld [vmem:[#allocation6 + $0x4] sm:$0xf]
        %v1903 = vld [vmem:[#allocation6 + $0x8] sm:$0xf]
        %v1904 = vld [vmem:[#allocation6 + $0xc] sm:$0xf]
        %v1905 = vld [vmem:[#allocation6 + $0x10] sm:$0xf]
        %v1906 = vld [vmem:[#allocation6 + $0x14] sm:$0xf]
        %v1907 = vld [vmem:[#allocation6 + $0x18] sm:$0xf]
        %v1908 = vld [vmem:[#allocation6 + $0x1c] sm:$0xf]
        %v1909 = vld [vmem:[%s749] sm:$0xf]
        %v1910 = vld [vmem:[%s749 + $0x4] sm:$0xf]
        %v1911 = vld [vmem:[%s749 + $0x8] sm:$0xf]
        %v1912 = vld [vmem:[%s749 + $0xc] sm:$0xf]
        %v1913 = vld [vmem:[%s749 + $0x10] sm:$0xf]
        %v1914 = vld [vmem:[%s749 + $0x14] sm:$0xf]
        %v1915 = vld [vmem:[%s749 + $0x18] sm:$0xf]
        %v1916 = vld [vmem:[%s749 + $0x1c] sm:$0xf]
        %v1917 = vld [vmem:[%s902] sm:$0x1]
        %v1919 = vperm.slane %v1917, 0
        %v1929 = vunpack.c.l.b16 %v1901
        %v1930 = vunpack.c.l.b16 %v1902
        %v1931 = vunpack.c.l.b16 %v1903
        %v1932 = vunpack.c.l.b16 %v1904
        %v1933 = vunpack.c.l.b16 %v1905
        %v1934 = vunpack.c.l.b16 %v1906
        %v1935 = vunpack.c.l.b16 %v1907
        %v1936 = vunpack.c.l.b16 %v1908
        %v1937 = vpack.c.b16 %v1930, %v1929
        %v1938 = vpack.c.b16 %v1932, %v1931
        %v1939 = vpack.c.b16 %v1934, %v1933
        %v1940 = vpack.c.b16 %v1936, %v1935
        %v1949 = vunpack.c.l.b16 %v1909
        %v1950 = vunpack.c.l.b16 %v1910
        %v1951 = vunpack.c.l.b16 %v1911
        %v1952 = vunpack.c.l.b16 %v1912
        %v1953 = vunpack.c.l.b16 %v1913
        %v1954 = vunpack.c.l.b16 %v1914
        %v1955 = vunpack.c.l.b16 %v1915
        %v1956 = vunpack.c.l.b16 %v1916
        %v1957 = vpack.c.b16 %v1950, %v1949
        %v1958 = vpack.c.b16 %v1952, %v1951
        %v1959 = vpack.c.b16 %v1954, %v1953
        %v1960 = vpack.c.b16 %v1956, %v1955
        %v1966 = vsel %vm1010, %v1937, 0
        %v1969 = vsel %vm1010, %v1938, 0
        %v1972 = vsel %vm1010, %v1939, 0
        %v1975 = vsel %vm1010, %v1940, 0
        %1977 = vmatpush.bf16.msra.mxu0 0
        %1978 = vmatpush.bf16.msra.mxu0 0
        %1979 = vmatpush.bf16.msra.mxu0 0
        %1980 = vmatpush.bf16.msra.mxu0 0
        %1981 = vmatpush.bf16.msra.mxu0 %v1960
        %1982 = vmatpush.bf16.msra.mxu0 %v1959
        %1983 = vmatpush.bf16.msra.mxu0 %v1958
        %1984 = vmatpush.bf16.msra.mxu0 %v1957
        %1985 = vmatmul.bf16.gmra.mxu0 %v1966
        %v1986 = vpop.f32.mrf.mxu0
        %v1987 = vadd.f32 %v1919, %v1986
        %v1988 = vpop.f32.mrf.mxu0
        %v1989 = vadd.f32 %v1919, %v1988
        %1990 = vmatmul.bf16.gmra.mxu0 %v1969
        %v1991 = vpop.f32.mrf.mxu0
        %v1992 = vadd.f32 %v1919, %v1991
        %v1993 = vpop.f32.mrf.mxu0
        %v1994 = vadd.f32 %v1919, %v1993
        %1995 = vmatmul.bf16.gmra.mxu0 %v1972
        %v1996 = vpop.f32.mrf.mxu0
        %v1997 = vadd.f32 %v1919, %v1996
        %v1998 = vpop.f32.mrf.mxu0
        %v1999 = vadd.f32 %v1919, %v1998
        %2000 = vmatmul.bf16.gmra.mxu0 %v1975
        %v2001 = vpop.f32.mrf.mxu0
        %v2002 = vadd.f32 %v1919, %v2001
        %v2003 = vpop.f32.mrf.mxu0
        %v2004 = vadd.f32 %v1919, %v2003
        %2005 = vdwg.mxu0
        %v2006 = vadd.f32 %v942, %v1987
        %v2007 = vadd.f32 %v943, %v1989
        %v2008 = vadd.f32 %v944, %v1992
        %v2009 = vadd.f32 %v945, %v1994
        %v2010 = vadd.f32 %v946, %v1997
        %v2011 = vadd.f32 %v947, %v1999
        %v2012 = vadd.f32 %v948, %v2002
        %v2013 = vadd.f32 %v949, %v2004
        %v2014 = vsel %vm1010, %v2006, 0.0
        %2015 = vadd.xlane.f32.xlu0 %v2014
        %v2016 = vpop.xlane.xlu0 %2015
        %v2017 = vsel %vm1010, %v2007, 0.0
        %2018 = vadd.xlane.f32.xlu0 %v2017
        %v2019 = vpop.xlane.xlu0 %2018
        %v2020 = vsel %vm1010, %v2008, 0.0
        %2021 = vadd.xlane.f32.xlu0 %v2020
        %v2022 = vpop.xlane.xlu0 %2021
        %v2023 = vsel %vm1010, %v2009, 0.0
        %2024 = vadd.xlane.f32.xlu0 %v2023
        %v2025 = vpop.xlane.xlu0 %2024
        %v2026 = vsel %vm1010, %v2010, 0.0
        %2027 = vadd.xlane.f32.xlu0 %v2026
        %v2028 = vpop.xlane.xlu0 %2027
        %v2029 = vsel %vm1010, %v2011, 0.0
        %2030 = vadd.xlane.f32.xlu0 %v2029
        %v2031 = vpop.xlane.xlu0 %2030
        %v2032 = vsel %vm1010, %v2012, 0.0
        %2033 = vadd.xlane.f32.xlu0 %v2032
        %v2034 = vpop.xlane.xlu0 %2033
        %v2035 = vsel %vm1010, %v2013, 0.0
        %2036 = vadd.xlane.f32.xlu0 %v2035
        %v2037 = vpop.xlane.xlu0 %2036
        %v2038 = vrcp.pop 64.0
        %v2039 = vmul.f32 64.0, %v2038
        %v2040 = vsub.f32 1.0, %v2039
        %v2041 = vmul.f32 %v2038, %v2040
        %v2042 = vadd.f32 %v2038, %v2041
        %vm2043 = vweird.f32 %v2038
        %v2044 = vsel %vm2043, %v2038, %v2042
        %v2045 = vmul.f32 %v2016, %v2044
        %v2046 = vmul.f32 %v2019, %v2044
        %v2047 = vmul.f32 %v2022, %v2044
        %v2048 = vmul.f32 %v2025, %v2044
        %v2049 = vmul.f32 %v2028, %v2044
        %v2050 = vmul.f32 %v2031, %v2044
        %v2051 = vmul.f32 %v2034, %v2044
        %v2052 = vmul.f32 %v2037, %v2044
        %v2053 = vsub.f32 %v2006, %v2045
        %v2054 = vsub.f32 %v2007, %v2046
        %v2055 = vsub.f32 %v2008, %v2047
        %v2056 = vsub.f32 %v2009, %v2048
        %v2057 = vsub.f32 %v2010, %v2049
        %v2058 = vsub.f32 %v2011, %v2050
        %v2059 = vsub.f32 %v2012, %v2051
        %v2060 = vsub.f32 %v2013, %v2052
        %v2061 = vmul.f32 %v2053, %v2053
        %v2062 = vmul.f32 %v2054, %v2054
        %v2063 = vmul.f32 %v2055, %v2055
        %v2064 = vmul.f32 %v2056, %v2056
        %v2065 = vmul.f32 %v2057, %v2057
        %v2066 = vmul.f32 %v2058, %v2058
        %v2067 = vmul.f32 %v2059, %v2059
        %v2068 = vmul.f32 %v2060, %v2060
        %v2069 = vsel %vm1010, %v2061, 0.0
        %2070 = vadd.xlane.f32.xlu0 %v2069
        %v2071 = vpop.xlane.xlu0 %2070
        %v2072 = vsel %vm1010, %v2062, 0.0
        %2073 = vadd.xlane.f32.xlu0 %v2072
        %v2074 = vpop.xlane.xlu0 %2073
        %v2075 = vsel %vm1010, %v2063, 0.0
        %2076 = vadd.xlane.f32.xlu0 %v2075
        %v2077 = vpop.xlane.xlu0 %2076
        %v2078 = vsel %vm1010, %v2064, 0.0
        %2079 = vadd.xlane.f32.xlu0 %v2078
        %v2080 = vpop.xlane.xlu0 %2079
        %v2081 = vsel %vm1010, %v2065, 0.0
        %2082 = vadd.xlane.f32.xlu0 %v2081
        %v2083 = vpop.xlane.xlu0 %2082
        %v2084 = vsel %vm1010, %v2066, 0.0
        %2085 = vadd.xlane.f32.xlu0 %v2084
        %v2086 = vpop.xlane.xlu0 %2085
        %v2087 = vsel %vm1010, %v2067, 0.0
        %2088 = vadd.xlane.f32.xlu0 %v2087
        %v2089 = vpop.xlane.xlu0 %2088
        %v2090 = vsel %vm1010, %v2068, 0.0
        %2091 = vadd.xlane.f32.xlu0 %v2090
        %v2092 = vpop.xlane.xlu0 %2091
        %v2093 = vmul.f32 %v2071, %v2044
        %v2094 = vmul.f32 %v2074, %v2044
        %v2095 = vmul.f32 %v2077, %v2044
        %v2096 = vmul.f32 %v2080, %v2044
        %v2097 = vmul.f32 %v2083, %v2044
        %v2098 = vmul.f32 %v2086, %v2044
        %v2099 = vmul.f32 %v2089, %v2044
        %v2100 = vmul.f32 %v2092, %v2044
        %v2101 = vadd.f32 %v2093, 1e-05
        %v2102 = vadd.f32 %v2094, 1e-05
        %v2103 = vadd.f32 %v2095, 1e-05
        %v2104 = vadd.f32 %v2096, 1e-05
        %v2105 = vadd.f32 %v2097, 1e-05
        %v2106 = vadd.f32 %v2098, 1e-05
        %v2107 = vadd.f32 %v2099, 1e-05
        %v2108 = vadd.f32 %v2100, 1e-05
        %v2109 = vrsqrt.pop %v2101
        %v2110 = vmul.f32 %v2109, %v2101
        %v2111 = vmul.f32 %v2110, %v2109
        %v2112 = vmul.f32 0.5, %v2111
        %v2113 = vsub.f32 1.5, %v2112
        %v2114 = vmul.f32 %v2109, %v2113
        %vm2115 = vweird.f32 %v2101
        %vm2116 = vweird.f32 %v2109
        %vm2117 = vmor %vm2115, %vm2116
        %v2118 = vsel %vm2117, %v2109, %v2114
        %v2119 = vrsqrt.pop %v2102
        %v2120 = vmul.f32 %v2119, %v2102
        %v2121 = vmul.f32 %v2120, %v2119
        %v2122 = vmul.f32 0.5, %v2121
        %v2123 = vsub.f32 1.5, %v2122
        %v2124 = vmul.f32 %v2119, %v2123
        %vm2125 = vweird.f32 %v2102
        %vm2126 = vweird.f32 %v2119
        %vm2127 = vmor %vm2125, %vm2126
        %v2128 = vsel %vm2127, %v2119, %v2124
        %v2129 = vrsqrt.pop %v2103
        %v2130 = vmul.f32 %v2129, %v2103
        %v2131 = vmul.f32 %v2130, %v2129
        %v2132 = vmul.f32 0.5, %v2131
        %v2133 = vsub.f32 1.5, %v2132
        %v2134 = vmul.f32 %v2129, %v2133
        %vm2135 = vweird.f32 %v2103
        %vm2136 = vweird.f32 %v2129
        %vm2137 = vmor %vm2135, %vm2136
        %v2138 = vsel %vm2137, %v2129, %v2134
        %v2139 = vrsqrt.pop %v2104
        %v2140 = vmul.f32 %v2139, %v2104
        %v2141 = vmul.f32 %v2140, %v2139
        %v2142 = vmul.f32 0.5, %v2141
        %v2143 = vsub.f32 1.5, %v2142
        %v2144 = vmul.f32 %v2139, %v2143
        %vm2145 = vweird.f32 %v2104
        %vm2146 = vweird.f32 %v2139
        %vm2147 = vmor %vm2145, %vm2146
        %v2148 = vsel %vm2147, %v2139, %v2144
        %v2149 = vrsqrt.pop %v2105
        %v2150 = vmul.f32 %v2149, %v2105
        %v2151 = vmul.f32 %v2150, %v2149
        %v2152 = vmul.f32 0.5, %v2151
        %v2153 = vsub.f32 1.5, %v2152
        %v2154 = vmul.f32 %v2149, %v2153
        %vm2155 = vweird.f32 %v2105
        %vm2156 = vweird.f32 %v2149
        %vm2157 = vmor %vm2155, %vm2156
        %v2158 = vsel %vm2157, %v2149, %v2154
        %v2159 = vrsqrt.pop %v2106
        %v2160 = vmul.f32 %v2159, %v2106
        %v2161 = vmul.f32 %v2160, %v2159
        %v2162 = vmul.f32 0.5, %v2161
        %v2163 = vsub.f32 1.5, %v2162
        %v2164 = vmul.f32 %v2159, %v2163
        %vm2165 = vweird.f32 %v2106
        %vm2166 = vweird.f32 %v2159
        %vm2167 = vmor %vm2165, %vm2166
        %v2168 = vsel %vm2167, %v2159, %v2164
        %v2169 = vrsqrt.pop %v2107
        %v2170 = vmul.f32 %v2169, %v2107
        %v2171 = vmul.f32 %v2170, %v2169
        %v2172 = vmul.f32 0.5, %v2171
        %v2173 = vsub.f32 1.5, %v2172
        %v2174 = vmul.f32 %v2169, %v2173
        %vm2175 = vweird.f32 %v2107
        %vm2176 = vweird.f32 %v2169
        %vm2177 = vmor %vm2175, %vm2176
        %v2178 = vsel %vm2177, %v2169, %v2174
        %v2179 = vrsqrt.pop %v2108
        %v2180 = vmul.f32 %v2179, %v2108
        %v2181 = vmul.f32 %v2180, %v2179
        %v2182 = vmul.f32 0.5, %v2181
        %v2183 = vsub.f32 1.5, %v2182
        %v2184 = vmul.f32 %v2179, %v2183
        %vm2185 = vweird.f32 %v2108
        %vm2186 = vweird.f32 %v2179
        %vm2187 = vmor %vm2185, %vm2186
        %v2188 = vsel %vm2187, %v2179, %v2184
        %v2189 = vmul.f32 %v2053, %v2118
        %v2190 = vmul.f32 %v2054, %v2128
        %v2191 = vmul.f32 %v2055, %v2138
        %v2192 = vmul.f32 %v2056, %v2148
        %v2193 = vmul.f32 %v2057, %v2158
        %v2194 = vmul.f32 %v2058, %v2168
        %v2195 = vmul.f32 %v2059, %v2178
        %v2196 = vmul.f32 %v2060, %v2188
        %v2197 = vld [vmem:[%s758] sm:$0x1]
        %v2199 = vperm.slane %v2197, 0
        %v2201 = vmul.f32 %v2189, %v2199
        %v2202 = vmul.f32 %v2190, %v2199
        %v2203 = vmul.f32 %v2191, %v2199
        %v2204 = vmul.f32 %v2192, %v2199
        %v2205 = vmul.f32 %v2193, %v2199
        %v2206 = vmul.f32 %v2194, %v2199
        %v2207 = vmul.f32 %v2195, %v2199
        %v2208 = vmul.f32 %v2196, %v2199
        %v2209 = vld [vmem:[%s905] sm:$0x1]
        %v2211 = vperm.slane %v2209, 0
        %v2213 = vadd.f32 %v2201, %v2211
        %v2214 = vadd.f32 %v2202, %v2211
        %v2215 = vadd.f32 %v2203, %v2211
        %v2216 = vadd.f32 %v2204, %v2211
        %v2217 = vadd.f32 %v2205, %v2211
        %v2218 = vadd.f32 %v2206, %v2211
        %v2219 = vadd.f32 %v2207, %v2211
        %v2220 = vadd.f32 %v2208, %v2211
        %v2221 = vpack.c.bf16 %v2214, %v2213
        %v2222 = vpack.c.bf16 %v2216, %v2215
        %v2223 = vpack.c.bf16 %v2218, %v2217
        %v2224 = vpack.c.bf16 %v2220, %v2219
        %v2225 = vld [vmem:[%s768] sm:$0xf]
        %v2226 = vld [vmem:[%s768 + $0x4] sm:$0xf]
        %v2227 = vld [vmem:[%s768 + $0x8] sm:$0xf]
        %v2228 = vld [vmem:[%s768 + $0xc] sm:$0xf]
        %v2229 = vld [vmem:[%s768 + $0x10] sm:$0xf]
        %v2230 = vld [vmem:[%s768 + $0x14] sm:$0xf]
        %v2231 = vld [vmem:[%s768 + $0x18] sm:$0xf]
        %v2232 = vld [vmem:[%s768 + $0x1c] sm:$0xf]
        %v2233 = vld [vmem:[%s908] sm:$0x1]
        %v2235 = vperm.slane %v2233, 0
        %v2245 = vunpack.c.l.b16 %v2225
        %v2246 = vunpack.c.l.b16 %v2226
        %v2247 = vunpack.c.l.b16 %v2227
        %v2248 = vunpack.c.l.b16 %v2228
        %v2249 = vunpack.c.l.b16 %v2229
        %v2250 = vunpack.c.l.b16 %v2230
        %v2251 = vunpack.c.l.b16 %v2231
        %v2252 = vunpack.c.l.b16 %v2232
        %v2253 = vpack.c.b16 %v2246, %v2245
        %v2254 = vpack.c.b16 %v2248, %v2247
        %v2255 = vpack.c.b16 %v2250, %v2249
        %v2256 = vpack.c.b16 %v2252, %v2251
        %v2262 = vsel %vm1010, %v2221, 0
        %v2265 = vsel %vm1010, %v2222, 0
        %v2268 = vsel %vm1010, %v2223, 0
        %v2271 = vsel %vm1010, %v2224, 0
        %2273 = vmatpush.bf16.msra.mxu0 0
        %2274 = vmatpush.bf16.msra.mxu0 0
        %2275 = vmatpush.bf16.msra.mxu0 0
        %2276 = vmatpush.bf16.msra.mxu0 0
        %2277 = vmatpush.bf16.msra.mxu0 %v2256
        %2278 = vmatpush.bf16.msra.mxu0 %v2255
        %2279 = vmatpush.bf16.msra.mxu0 %v2254
        %2280 = vmatpush.bf16.msra.mxu0 %v2253
        %2281 = vmatmul.bf16.gmra.mxu0 %v2262
        %v2282 = vpop.f32.mrf.mxu0
        %v2283 = vadd.f32 %v2235, %v2282
        %v2284 = vpop.f32.mrf.mxu0
        %v2285 = vadd.f32 %v2235, %v2284
        %2286 = vmatmul.bf16.gmra.mxu0 %v2265
        %v2287 = vpop.f32.mrf.mxu0
        %v2288 = vadd.f32 %v2235, %v2287
        %v2289 = vpop.f32.mrf.mxu0
        %v2290 = vadd.f32 %v2235, %v2289
        %2291 = vmatmul.bf16.gmra.mxu0 %v2268
        %v2292 = vpop.f32.mrf.mxu0
        %v2293 = vadd.f32 %v2235, %v2292
        %v2294 = vpop.f32.mrf.mxu0
        %v2295 = vadd.f32 %v2235, %v2294
        %2296 = vmatmul.bf16.gmra.mxu0 %v2271
        %v2297 = vpop.f32.mrf.mxu0
        %v2298 = vadd.f32 %v2235, %v2297
        %v2299 = vpop.f32.mrf.mxu0
        %v2300 = vadd.f32 %v2235, %v2299
        %2301 = vdwg.mxu0
        %v2302 = vmax.f32 %v2283, 0.0
        %v2303 = vmax.f32 %v2285, 0.0
        %v2304 = vmax.f32 %v2288, 0.0
        %v2305 = vmax.f32 %v2290, 0.0
        %v2306 = vmax.f32 %v2293, 0.0
        %v2307 = vmax.f32 %v2295, 0.0
        %v2308 = vmax.f32 %v2298, 0.0
        %v2309 = vmax.f32 %v2300, 0.0
        %v2310 = vpack.c.bf16 %v2303, %v2302
        %v2311 = vpack.c.bf16 %v2305, %v2304
        %v2312 = vpack.c.bf16 %v2307, %v2306
        %v2313 = vpack.c.bf16 %v2309, %v2308
        %v2314 = vld [vmem:[%s913] sm:$0xf]
        %v2315 = vld [vmem:[%s913 + $0x4] sm:$0xf]
        %v2316 = vld [vmem:[%s913 + $0x8] sm:$0xf]
        %v2317 = vld [vmem:[%s913 + $0xc] sm:$0xf]
        %v2318 = vld [vmem:[%s913 + $0x10] sm:$0xf]
        %v2319 = vld [vmem:[%s913 + $0x14] sm:$0xf]
        %v2320 = vld [vmem:[%s913 + $0x18] sm:$0xf]
        %v2321 = vld [vmem:[%s913 + $0x1c] sm:$0xf]
        %v2322 = vld [vmem:[%s913 + $0x20] sm:$0xf]
        %v2323 = vld [vmem:[%s913 + $0x24] sm:$0xf]
        %v2324 = vld [vmem:[%s913 + $0x28] sm:$0xf]
        %v2325 = vld [vmem:[%s913 + $0x2c] sm:$0xf]
        %v2326 = vld [vmem:[%s913 + $0x30] sm:$0xf]
        %v2327 = vld [vmem:[%s913 + $0x34] sm:$0xf]
        %v2328 = vld [vmem:[%s913 + $0x38] sm:$0xf]
        %v2329 = vld [vmem:[%s913 + $0x3c] sm:$0xf]
        %v2330 = vld [vmem:[%s916] sm:$0x1]
        %v2332 = vperm.slane %v2330, 0
        %v2350 = vunpack.c.l.b16 %v2314
        %v2351 = vunpack.c.l.b16 %v2315
        %v2352 = vunpack.c.l.b16 %v2316
        %v2353 = vunpack.c.l.b16 %v2317
        %v2354 = vunpack.c.l.b16 %v2318
        %v2355 = vunpack.c.l.b16 %v2319
        %v2356 = vunpack.c.l.b16 %v2320
        %v2357 = vunpack.c.l.b16 %v2321
        %v2358 = vunpack.c.l.b16 %v2322
        %v2359 = vunpack.c.l.b16 %v2323
        %v2360 = vunpack.c.l.b16 %v2324
        %v2361 = vunpack.c.l.b16 %v2325
        %v2362 = vunpack.c.l.b16 %v2326
        %v2363 = vunpack.c.l.b16 %v2327
        %v2364 = vunpack.c.l.b16 %v2328
        %v2365 = vunpack.c.l.b16 %v2329
        %v2366 = vpack.c.b16 %v2351, %v2350
        %v2367 = vpack.c.b16 %v2353, %v2352
        %v2368 = vpack.c.b16 %v2355, %v2354
        %v2369 = vpack.c.b16 %v2357, %v2356
        %v2370 = vpack.c.b16 %v2359, %v2358
        %v2371 = vpack.c.b16 %v2361, %v2360
        %v2372 = vpack.c.b16 %v2363, %v2362
        %v2373 = vpack.c.b16 %v2365, %v2364
        %2382 = vmatpush.bf16.msra.mxu0 %v2373
        %2383 = vmatpush.bf16.msra.mxu0 %v2372
        %2384 = vmatpush.bf16.msra.mxu0 %v2371
        %2385 = vmatpush.bf16.msra.mxu0 %v2370
        %2386 = vmatpush.bf16.msra.mxu0 %v2369
        %2387 = vmatpush.bf16.msra.mxu0 %v2368
        %2388 = vmatpush.bf16.msra.mxu0 %v2367
        %2389 = vmatpush.bf16.msra.mxu0 %v2366
        %2390 = vmatmul.bf16.gmra.mxu0 %v2310
        %v2391 = vpop.f32.mrf.mxu0
        %v2392 = vadd.f32 %v2332, %v2391
        %v2393 = vpop.f32.mrf.mxu0
        %v2394 = vadd.f32 %v2332, %v2393
        %2395 = vmatmul.bf16.gmra.mxu0 %v2311
        %v2396 = vpop.f32.mrf.mxu0
        %v2397 = vadd.f32 %v2332, %v2396
        %v2398 = vpop.f32.mrf.mxu0
        %v2399 = vadd.f32 %v2332, %v2398
        %2400 = vmatmul.bf16.gmra.mxu0 %v2312
        %v2401 = vpop.f32.mrf.mxu0
        %v2402 = vadd.f32 %v2332, %v2401
        %v2403 = vpop.f32.mrf.mxu0
        %v2404 = vadd.f32 %v2332, %v2403
        %2405 = vmatmul.bf16.gmra.mxu0 %v2313
        %v2406 = vpop.f32.mrf.mxu0
        %v2407 = vadd.f32 %v2332, %v2406
        %v2408 = vpop.f32.mrf.mxu0
        %v2409 = vadd.f32 %v2332, %v2408
        %2410 = vdwg.mxu0
        %v2411 = vadd.f32 %v2213, %v2392
        %v2412 = vadd.f32 %v2214, %v2394
        %v2413 = vadd.f32 %v2215, %v2397
        %v2414 = vadd.f32 %v2216, %v2399
        %v2415 = vadd.f32 %v2217, %v2402
        %v2416 = vadd.f32 %v2218, %v2404
        %v2417 = vadd.f32 %v2219, %v2407
        %v2418 = vadd.f32 %v2220, %v2409
        %v2419 = vsel %vm1010, %v2411, 0.0
        %2420 = vadd.xlane.f32.xlu0 %v2419
        %v2421 = vpop.xlane.xlu0 %2420
        %v2422 = vsel %vm1010, %v2412, 0.0
        %2423 = vadd.xlane.f32.xlu0 %v2422
        %v2424 = vpop.xlane.xlu0 %2423
        %v2425 = vsel %vm1010, %v2413, 0.0
        %2426 = vadd.xlane.f32.xlu0 %v2425
        %v2427 = vpop.xlane.xlu0 %2426
        %v2428 = vsel %vm1010, %v2414, 0.0
        %2429 = vadd.xlane.f32.xlu0 %v2428
        %v2430 = vpop.xlane.xlu0 %2429
        %v2431 = vsel %vm1010, %v2415, 0.0
        %2432 = vadd.xlane.f32.xlu0 %v2431
        %v2433 = vpop.xlane.xlu0 %2432
        %v2434 = vsel %vm1010, %v2416, 0.0
        %2435 = vadd.xlane.f32.xlu0 %v2434
        %v2436 = vpop.xlane.xlu0 %2435
        %v2437 = vsel %vm1010, %v2417, 0.0
        %2438 = vadd.xlane.f32.xlu0 %v2437
        %v2439 = vpop.xlane.xlu0 %2438
        %v2440 = vsel %vm1010, %v2418, 0.0
        %2441 = vadd.xlane.f32.xlu0 %v2440
        %v2442 = vpop.xlane.xlu0 %2441
        %v2443 = vmul.f32 %v2421, %v2044
        %v2444 = vmul.f32 %v2424, %v2044
        %v2445 = vmul.f32 %v2427, %v2044
        %v2446 = vmul.f32 %v2430, %v2044
        %v2447 = vmul.f32 %v2433, %v2044
        %v2448 = vmul.f32 %v2436, %v2044
        %v2449 = vmul.f32 %v2439, %v2044
        %v2450 = vmul.f32 %v2442, %v2044
        %v2451 = vsub.f32 %v2411, %v2443
        %v2452 = vsub.f32 %v2412, %v2444
        %v2453 = vsub.f32 %v2413, %v2445
        %v2454 = vsub.f32 %v2414, %v2446
        %v2455 = vsub.f32 %v2415, %v2447
        %v2456 = vsub.f32 %v2416, %v2448
        %v2457 = vsub.f32 %v2417, %v2449
        %v2458 = vsub.f32 %v2418, %v2450
        %v2459 = vmul.f32 %v2451, %v2451
        %v2460 = vmul.f32 %v2452, %v2452
        %v2461 = vmul.f32 %v2453, %v2453
        %v2462 = vmul.f32 %v2454, %v2454
        %v2463 = vmul.f32 %v2455, %v2455
        %v2464 = vmul.f32 %v2456, %v2456
        %v2465 = vmul.f32 %v2457, %v2457
        %v2466 = vmul.f32 %v2458, %v2458
        %v2467 = vsel %vm1010, %v2459, 0.0
        %2468 = vadd.xlane.f32.xlu0 %v2467
        %v2469 = vpop.xlane.xlu0 %2468
        %v2470 = vsel %vm1010, %v2460, 0.0
        %2471 = vadd.xlane.f32.xlu0 %v2470
        %v2472 = vpop.xlane.xlu0 %2471
        %v2473 = vsel %vm1010, %v2461, 0.0
        %2474 = vadd.xlane.f32.xlu0 %v2473
        %v2475 = vpop.xlane.xlu0 %2474
        %v2476 = vsel %vm1010, %v2462, 0.0
        %2477 = vadd.xlane.f32.xlu0 %v2476
        %v2478 = vpop.xlane.xlu0 %2477
        %v2479 = vsel %vm1010, %v2463, 0.0
        %2480 = vadd.xlane.f32.xlu0 %v2479
        %v2481 = vpop.xlane.xlu0 %2480
        %v2482 = vsel %vm1010, %v2464, 0.0
        %2483 = vadd.xlane.f32.xlu0 %v2482
        %v2484 = vpop.xlane.xlu0 %2483
        %v2485 = vsel %vm1010, %v2465, 0.0
        %2486 = vadd.xlane.f32.xlu0 %v2485
        %v2487 = vpop.xlane.xlu0 %2486
        %v2488 = vsel %vm1010, %v2466, 0.0
        %2489 = vadd.xlane.f32.xlu0 %v2488
        %v2490 = vpop.xlane.xlu0 %2489
        %v2491 = vmul.f32 %v2469, %v2044
        %v2492 = vmul.f32 %v2472, %v2044
        %v2493 = vmul.f32 %v2475, %v2044
        %v2494 = vmul.f32 %v2478, %v2044
        %v2495 = vmul.f32 %v2481, %v2044
        %v2496 = vmul.f32 %v2484, %v2044
        %v2497 = vmul.f32 %v2487, %v2044
        %v2498 = vmul.f32 %v2490, %v2044
        %v2499 = vadd.f32 %v2491, 1e-05
        %v2500 = vadd.f32 %v2492, 1e-05
        %v2501 = vadd.f32 %v2493, 1e-05
        %v2502 = vadd.f32 %v2494, 1e-05
        %v2503 = vadd.f32 %v2495, 1e-05
        %v2504 = vadd.f32 %v2496, 1e-05
        %v2505 = vadd.f32 %v2497, 1e-05
        %v2506 = vadd.f32 %v2498, 1e-05
        %v2507 = vrsqrt.pop %v2499
        %v2508 = vmul.f32 %v2507, %v2499
        %v2509 = vmul.f32 %v2508, %v2507
        %v2510 = vmul.f32 0.5, %v2509
        %v2511 = vsub.f32 1.5, %v2510
        %v2512 = vmul.f32 %v2507, %v2511
        %vm2513 = vweird.f32 %v2499
        %vm2514 = vweird.f32 %v2507
        %vm2515 = vmor %vm2513, %vm2514
        %v2516 = vsel %vm2515, %v2507, %v2512
        %v2517 = vrsqrt.pop %v2500
        %v2518 = vmul.f32 %v2517, %v2500
        %v2519 = vmul.f32 %v2518, %v2517
        %v2520 = vmul.f32 0.5, %v2519
        %v2521 = vsub.f32 1.5, %v2520
        %v2522 = vmul.f32 %v2517, %v2521
        %vm2523 = vweird.f32 %v2500
        %vm2524 = vweird.f32 %v2517
        %vm2525 = vmor %vm2523, %vm2524
        %v2526 = vsel %vm2525, %v2517, %v2522
        %v2527 = vrsqrt.pop %v2501
        %v2528 = vmul.f32 %v2527, %v2501
        %v2529 = vmul.f32 %v2528, %v2527
        %v2530 = vmul.f32 0.5, %v2529
        %v2531 = vsub.f32 1.5, %v2530
        %v2532 = vmul.f32 %v2527, %v2531
        %vm2533 = vweird.f32 %v2501
        %vm2534 = vweird.f32 %v2527
        %vm2535 = vmor %vm2533, %vm2534
        %v2536 = vsel %vm2535, %v2527, %v2532
        %v2537 = vrsqrt.pop %v2502
        %v2538 = vmul.f32 %v2537, %v2502
        %v2539 = vmul.f32 %v2538, %v2537
        %v2540 = vmul.f32 0.5, %v2539
        %v2541 = vsub.f32 1.5, %v2540
        %v2542 = vmul.f32 %v2537, %v2541
        %vm2543 = vweird.f32 %v2502
        %vm2544 = vweird.f32 %v2537
        %vm2545 = vmor %vm2543, %vm2544
        %v2546 = vsel %vm2545, %v2537, %v2542
        %v2547 = vrsqrt.pop %v2503
        %v2548 = vmul.f32 %v2547, %v2503
        %v2549 = vmul.f32 %v2548, %v2547
        %v2550 = vmul.f32 0.5, %v2549
        %v2551 = vsub.f32 1.5, %v2550
        %v2552 = vmul.f32 %v2547, %v2551
        %vm2553 = vweird.f32 %v2503
        %vm2554 = vweird.f32 %v2547
        %vm2555 = vmor %vm2553, %vm2554
        %v2556 = vsel %vm2555, %v2547, %v2552
        %v2557 = vrsqrt.pop %v2504
        %v2558 = vmul.f32 %v2557, %v2504
        %v2559 = vmul.f32 %v2558, %v2557
        %v2560 = vmul.f32 0.5, %v2559
        %v2561 = vsub.f32 1.5, %v2560
        %v2562 = vmul.f32 %v2557, %v2561
        %vm2563 = vweird.f32 %v2504
        %vm2564 = vweird.f32 %v2557
        %vm2565 = vmor %vm2563, %vm2564
        %v2566 = vsel %vm2565, %v2557, %v2562
        %v2567 = vrsqrt.pop %v2505
        %v2568 = vmul.f32 %v2567, %v2505
        %v2569 = vmul.f32 %v2568, %v2567
        %v2570 = vmul.f32 0.5, %v2569
        %v2571 = vsub.f32 1.5, %v2570
        %v2572 = vmul.f32 %v2567, %v2571
        %vm2573 = vweird.f32 %v2505
        %vm2574 = vweird.f32 %v2567
        %vm2575 = vmor %vm2573, %vm2574
        %v2576 = vsel %vm2575, %v2567, %v2572
        %v2577 = vrsqrt.pop %v2506
        %v2578 = vmul.f32 %v2577, %v2506
        %v2579 = vmul.f32 %v2578, %v2577
        %v2580 = vmul.f32 0.5, %v2579
        %v2581 = vsub.f32 1.5, %v2580
        %v2582 = vmul.f32 %v2577, %v2581
        %vm2583 = vweird.f32 %v2506
        %vm2584 = vweird.f32 %v2577
        %vm2585 = vmor %vm2583, %vm2584
        %v2586 = vsel %vm2585, %v2577, %v2582
        %v2587 = vmul.f32 %v2451, %v2516
        %v2588 = vmul.f32 %v2452, %v2526
        %v2589 = vmul.f32 %v2453, %v2536
        %v2590 = vmul.f32 %v2454, %v2546
        %v2591 = vmul.f32 %v2455, %v2556
        %v2592 = vmul.f32 %v2456, %v2566
        %v2593 = vmul.f32 %v2457, %v2576
        %v2594 = vmul.f32 %v2458, %v2586
        %v2595 = vld [vmem:[%s777] sm:$0x1]
        %v2597 = vperm.slane %v2595, 0
        %v2599 = vmul.f32 %v2587, %v2597
        %v2600 = vmul.f32 %v2588, %v2597
        %v2601 = vmul.f32 %v2589, %v2597
        %v2602 = vmul.f32 %v2590, %v2597
        %v2603 = vmul.f32 %v2591, %v2597
        %v2604 = vmul.f32 %v2592, %v2597
        %v2605 = vmul.f32 %v2593, %v2597
        %v2606 = vmul.f32 %v2594, %v2597
        %v2607 = vld [vmem:[%s919] sm:$0x1]
        %v2609 = vperm.slane %v2607, 0
        %v2611 = vadd.f32 %v2599, %v2609
        %v2612 = vadd.f32 %v2600, %v2609
        %v2613 = vadd.f32 %v2601, %v2609
        %v2614 = vadd.f32 %v2602, %v2609
        %v2615 = vadd.f32 %v2603, %v2609
        %v2616 = vadd.f32 %v2604, %v2609
        %v2617 = vadd.f32 %v2605, %v2609
        %v2618 = vadd.f32 %v2606, %v2609
        %2619 = vst.msk [vmem:[%s886] sm:$0xff] %vm1010, %v2611
        %2620 = vst.msk [vmem:[%s886 + $0x8] sm:$0xff] %vm1010, %v2612
        %2621 = vst.msk [vmem:[%s886 + $0x10] sm:$0xff] %vm1010, %v2613
        %2622 = vst.msk [vmem:[%s886 + $0x18] sm:$0xff] %vm1010, %v2614
        %2623 = vst.msk [vmem:[%s886 + $0x20] sm:$0xff] %vm1010, %v2615
        %2624 = vst.msk [vmem:[%s886 + $0x28] sm:$0xff] %vm1010, %v2616
        %2625 = vst.msk [vmem:[%s886 + $0x30] sm:$0xff] %vm1010, %v2617
        %2626 = vst.msk [vmem:[%s886 + $0x38] sm:$0xff] %vm1010, %v2618
        %s2627 = sand.u32 %s478, 1
        %s2628 = scalar_lea.sflag [#allocation9], %s2627
        %s2629 = sand.u32 %s478, 1
        %s2630 = smul.addr %s2629, 64
        %s2631 = scalar_lea.vmem [#allocation19], %s2630
        // Predicated region
        $region124: #{tpu_custom_call.1} parent=83 // pred_check
          %p2632 = pneg %p488
        $region125: #{tpu_custom_call.1} parent=83 // pred_check_branch
          %2634 = sbr.rel (%p2632) target = $region127
        $region126: #{tpu_custom_call.1} parent=83 // pred_region
          %2636 = vsyncadd %s2628, 0
          %s2637 = smul.addr %s46, 8
          %s2638 = smul.addr %s2637, 8
          %s2639 = scalar_lea.hbm %s16, %s2638
          %s2640 = sshll.u32 %s2631, 4
          %s2641 = int_to_ptr.vmem [resolvable:$true] %s2640
          %s2642 = sshll.u32 %s2639, 4
          %s2643 = int_to_ptr.hbm [resolvable:$true] %s2642
          %2648 = dma.vmem_to_hbm [thread:$0]  %s2641, 1024, %s2643, %s2628, 128, 128, 8
        $region127: #{tpu_custom_call.1} parent=83 // pred_fallthru
          _
      $region84: #{tpu_custom_call.1} parent=5 // pred_fallthru
        _
      %p2649 = scmp.le.s32.totalorder 2, %s37
      // Predicated region
      $region128: #{tpu_custom_call.1} parent=5 // pred_check
        %p2650 = pneg %p2649
      $region129: #{tpu_custom_call.1} parent=5 // pred_check_branch
        %2652 = sbr.rel (%p2650) target = $region131
      $region130: #{tpu_custom_call.1} parent=5 // pred_region
        %s2653 = ssub.s32 %s37, 2
        // Predicated region
        $region132: #{tpu_custom_call.1} parent=130 // pred_check
          %p2654 = pneg %p494
        $region133: #{tpu_custom_call.1} parent=130 // pred_check_branch
          %2656 = sbr.rel (%p2654) target = $region135
        $region134: #{tpu_custom_call.1} parent=130 // pred_region
          %s2657 = sand.u32 %s479, 1
          %s2658 = scalar_lea.sflag [#allocation9], %s2657
          %s2659 = sand.u32 %s479, 1
          %s2660 = smul.addr %s2659, 64
          %s2661 = scalar_lea.vmem [#allocation19], %s2660
          %2663 = dma.done %s2658, 1024
        $region135: #{tpu_custom_call.1} parent=130 // pred_fallthru
          _
      $region131: #{tpu_custom_call.1} parent=5 // pred_fallthru
        _
    $region6: #{tpu_custom_call.1} parent=1 // loop_footer
      %s41 = sadd.s32 1, %s37
    $region7: #{tpu_custom_call.1} parent=1 // loop_footer_branch
      %36 = sbr.rel target = $region3
    $region8: #{tpu_custom_call.1} parent=1 // loop_exit
      _
    %2664 = vsyncpa [#allocation8], 1
    %s2665 = scalar_lea.sflag [#allocation8], 1
    %2666 = vsyncpa %s2665, 1
    %2667 = vsyncpa [#allocation11], 1
    %s2668 = scalar_lea.sflag [#allocation11], 1
    %2669 = vsyncpa %s2668, 1
    %2670 = vsyncpa [#allocation14], 1
    %s2671 = scalar_lea.sflag [#allocation14], 1
    %2672 = vsyncpa %s2671, 1
    %2673 = vsyncpa [#allocation17], 1
    %s2674 = scalar_lea.sflag [#allocation17], 1
    %2675 = vsyncpa %s2674, 1
    %2676 = vsyncpa [#allocation9], 1
    %s2677 = scalar_lea.sflag [#allocation9], 1
    %2678 = vsyncpa %s2677, 1

</llo_original>
